<compile_context>
chip_gen: v7x
topology: tpu7x:2x2x1
jax: 0.10.0
libtpu: 0.0.40
codegen_flags: <defaults>
</compile_context>

<pallas_src>
import functools

import numpy as np
import jax
import jax.numpy as jnp
from jax.experimental import pallas as pl
from jax.experimental.pallas import tpu as pltpu


def _round_up(x, m):
    return ((x + m - 1) // m) * m


_VMEM_LIMIT_CACHE = [None]


def _vmem_limit_bytes():
    """Per-generation scoped-VMEM budget (v5e/v6e: 128 MiB physical, v7x: 64 MiB)."""
    if _VMEM_LIMIT_CACHE[0] is None:
        cap = 64 * 1024 * 1024
        try:
            info = pltpu.get_tpu_info()
            cap = int(getattr(info, "vmem_capacity_bytes", cap) or cap)
        except Exception:
            pass
        _VMEM_LIMIT_CACHE[0] = max(32 * 1024 * 1024,
                                   min(cap * 3 // 4, cap - (24 << 20)))
    return _VMEM_LIMIT_CACHE[0]


# ------------------------------ Pallas kernels ------------------------------

def _conv9_core(zp_ref, w_ref, b_ref, mask_ref, y_ref, s1_ref, s2_ref, *, Wp, R):
    """3x3 conv on the flat zero-padded coarse layout.

    zp_ref : (1, >= (h2+2)*Wp + 2, K) bf16 flat padded rows (borders zero).
    w_ref  : (9, K, 4*cp) bf16, one parity-stacked RHS per 3x3 cell.
    Output rows r = Y*Wp + X; rows with X >= w2 are junk (masked out of the BN
    statistics and dropped downstream).  Single lane-dense store per output.
    """
    acc = None
    for u in range(3):
        for v in range(3):
            lhs = zp_ref[0, pl.ds(u * Wp + v, R), :]          # one window live
            part = jnp.dot(lhs, w_ref[3 * u + v],
                           preferred_element_type=jnp.float32)
            acc = part if acc is None else acc + part
    acc = acc + b_ref[...]                                    # (R, 4*cp) f32
    y_ref[0] = acc.astype(y_ref.dtype)                        # one full-width store
    valid = acc * mask_ref[...]                               # junk rows -> 0
    s1_ref[0] = jnp.sum(valid, axis=0, keepdims=True)
    s2_ref[0] = jnp.sum(valid * acc, axis=0, keepdims=True)


def _up_cat_conv1_kernel(z_ref, w_ref, b_ref, mask_ref, y_ref, s1_ref, s2_ref,
                         *, Wp, R):
    # ConvTranspose2d(2,2) + F.pad(skip) + concat + Conv2d(3x3) + BN batch stats,
    # folded into 9 MXU contractions on the host-pre-padded flat coarse layout.
    _conv9_core(z_ref, w_ref, b_ref, mask_ref, y_ref, s1_ref, s2_ref, Wp=Wp, R=R)


def _bn_relu_conv2_kernel(y1_ref, sc_ref, sh_ref, w_ref, b_ref, mask_ref,
                          y_ref, s1_ref, s2_ref, apad_ref, *, Wp, R):
    # BN1+ReLU fused into the input read + Conv2d(3x3) + BN batch stats.
    cdim = y1_ref.shape[2]
    head = Wp + 1
    tail = apad_ref.shape[1] - head - R
    # Only the tiny border strips are zeroed per step (not the whole scratch);
    # the junk-row mask keeps every border element that falls inside the interior
    # write range at exactly zero, so the padded halo stays valid every step.
    apad_ref[0, pl.ds(0, head), :] = jnp.zeros((head, cdim), apad_ref.dtype)
    apad_ref[0, pl.ds(head + R, tail), :] = jnp.zeros((tail, cdim), apad_ref.dtype)
    a = jnp.maximum(y1_ref[0].astype(jnp.float32) * sc_ref[...] + sh_ref[...], 0.0)
    a = a * mask_ref[...]
    apad_ref[0, pl.ds(head, R), :] = a.astype(apad_ref.dtype)
    _conv9_core(apad_ref, w_ref, b_ref, mask_ref, y_ref, s1_ref, s2_ref, Wp=Wp, R=R)


def _bn_relu_unshuffle_kernel(y_ref, sc_ref, sh_ref, o_ref, *, Wp, w2, cp):
    # BN2 + ReLU fused with the parity -> fine-grid unshuffle.  The output block
    # (1, h2, 2, w2, 2*cp) reshapes for free (row-major identical) to fine NHWC.
    h2 = y_ref.shape[1] // Wp
    a = jnp.maximum(y_ref[0].astype(jnp.float32) * sc_ref[...] + sh_ref[...], 0.0)
    for e in range(2):
        ae = a[:, 2 * e * cp:2 * (e + 1) * cp]                # parities (e,0),(e,1)
        ae = ae.reshape(h2, Wp, 2 * cp)[:, :w2, :]            # drop junk columns
        o_ref[0, :, e, :, :] = ae


# ------------------------------ pallas_call glue -----------------------------

def _call_conv1(z, wa, b1t, mask, *, Wp, R, cp):
    n, rows_ext, k = z.shape
    c4 = 4 * cp
    cost = pl.CostEstimate(
        flops=2 * n * 9 * R * k * c4,
        transcendentals=0,
        bytes_accessed=z.size * 2 + wa.size * 2 + n * R * c4 * 2
        + 2 * n * c4 * 4 + b1t.size * 4 + mask.size * 4)
    return pl.pallas_call(
        functools.partial(_up_cat_conv1_kernel, Wp=Wp, R=R),
        out_shape=(jax.ShapeDtypeStruct((n, R, c4), jnp.bfloat16),
                   jax.ShapeDtypeStruct((n, 1, c4), jnp.float32),
                   jax.ShapeDtypeStruct((n, 1, c4), jnp.float32)),
        grid=(n,),
        in_specs=[pl.BlockSpec((1, rows_ext, k), lambda i: (i, 0, 0)),
                  pl.BlockSpec((9, k, c4), lambda i: (0, 0, 0)),
                  pl.BlockSpec((1, c4), lambda i: (0, 0)),
                  pl.BlockSpec((R, 1), lambda i: (0, 0))],
        out_specs=(pl.BlockSpec((1, R, c4), lambda i: (i, 0, 0)),
                   pl.BlockSpec((1, 1, c4), lambda i: (i, 0, 0)),
                   pl.BlockSpec((1, 1, c4), lambda i: (i, 0, 0))),
        compiler_params=pltpu.CompilerParams(
            dimension_semantics=("parallel",),
            vmem_limit_bytes=_vmem_limit_bytes()),
        cost_estimate=cost,
    )(z, wa, b1t, mask)


def _call_conv2(y1, sc, sh, wb, b2t, mask, *, Wp, R, cp, rows_ext):
    n = y1.shape[0]
    c4 = 4 * cp
    cost = pl.CostEstimate(
        flops=2 * n * 9 * R * c4 * c4 + 4 * n * R * c4,
        transcendentals=0,
        bytes_accessed=y1.size * 2 + wb.size * 2 + n * R * c4 * 4
        + 2 * n * c4 * 4 + b2t.size * 4 + mask.size * 4)
    return pl.pallas_call(
        functools.partial(_bn_relu_conv2_kernel, Wp=Wp, R=R),
        out_shape=(jax.ShapeDtypeStruct((n, R, c4), jnp.float32),
                   jax.ShapeDtypeStruct((n, 1, c4), jnp.float32),
                   jax.ShapeDtypeStruct((n, 1, c4), jnp.float32)),
        grid=(n,),
        in_specs=[pl.BlockSpec((1, R, c4), lambda i: (i, 0, 0)),
                  pl.BlockSpec((1, c4), lambda i: (0, 0)),
                  pl.BlockSpec((1, c4), lambda i: (0, 0)),
                  pl.BlockSpec((9, c4, c4), lambda i: (0, 0, 0)),
                  pl.BlockSpec((1, c4), lambda i: (0, 0)),
                  pl.BlockSpec((R, 1), lambda i: (0, 0))],
        out_specs=(pl.BlockSpec((1, R, c4), lambda i: (i, 0, 0)),
                   pl.BlockSpec((1, 1, c4), lambda i: (i, 0, 0)),
                   pl.BlockSpec((1, 1, c4), lambda i: (i, 0, 0))),
        scratch_shapes=[pltpu.VMEM((1, rows_ext, c4), jnp.bfloat16)],
        compiler_params=pltpu.CompilerParams(
            dimension_semantics=("parallel",),
            vmem_limit_bytes=_vmem_limit_bytes()),
        cost_estimate=cost,
    )(y1, sc, sh, wb, b2t, mask)


def _call_bn_relu_out(y2, sc, sh, *, Wp, w2, cp):
    n, R, c4 = y2.shape
    h2 = R // Wp
    return pl.pallas_call(
        functools.partial(_bn_relu_unshuffle_kernel, Wp=Wp, w2=w2, cp=cp),
        out_shape=jax.ShapeDtypeStruct((n, h2, 2, w2, 2 * cp), jnp.float32),
        grid=(n,),
        in_specs=[pl.BlockSpec((1, R, c4), lambda i: (i, 0, 0)),
                  pl.BlockSpec((1, c4), lambda i: (0, 0)),
                  pl.BlockSpec((1, c4), lambda i: (0, 0))],
        out_specs=pl.BlockSpec((1, h2, 2, w2, 2 * cp), lambda i: (i, 0, 0, 0, 0)),
        compiler_params=pltpu.CompilerParams(
            dimension_semantics=("parallel",),
            vmem_limit_bytes=_vmem_limit_bytes()),
    )(y2, sc, sh)


# ------------------------- host-side weight composition ----------------------

def _parity_map(par, d):
    """Fine offset d in {-1,0,1} at output parity par -> (2x2 cell index, input parity)."""
    t = par + d
    s = t // 2                     # coarse shift in {-1,0,1}
    return s - par + 1, t - 2 * s  # ki in {0,1}, di in {0,1}


def compose_params(params):
    """Fold deconv / F.pad / concat / conv weights into NINE per-3x3-cell stacked
    contractions: all four output parities share each cell's LHS window and their
    columns are stacked side by side in one (K, 4*cout_pad) RHS (unused parity
    columns zero).  K is padded to a 128-multiple, cout so 4*cout_pad is a
    128-multiple.  Done once on the host with numpy (tiny tensors)."""
    w1 = np.asarray(params["c1_w"], np.float32)     # (cout, c_skip + c_up, 3, 3)
    b1 = np.asarray(params["c1_b"], np.float32)
    wup = np.asarray(params["up_w"], np.float32)    # (cin2, c_up, 2, 2)
    bup = np.asarray(params["up_b"], np.float32)
    wc2 = np.asarray(params["c2_w"], np.float32)    # (cout, cout, 3, 3)
    b2 = np.asarray(params["c2_b"], np.float32)

    cout = w1.shape[0]
    cin2, c_up = wup.shape[0], wup.shape[1]
    c_skip = w1.shape[1] - c_up
    cp = _round_up(cout, 32)                 # 4*cp multiple of 128 (lane-dense N)
    ct_a = 4 * c_skip + cin2 + 1             # [parity-split skip | x2 | ones]
    ct_a_pad = _round_up(ct_a, 128)          # K multiple of 128
    ct_b = 4 * cp                            # conv2 K (already 128-aligned)

    wa = np.zeros((9, ct_a_pad, 4 * cp), np.float32)
    wb = np.zeros((9, ct_b, 4 * cp), np.float32)
    for e in range(2):
        for f in range(2):
            col = (2 * e + f) * cp
            for ky in range(3):
                ki, di = _parity_map(e, ky - 1)
                for kx in range(3):
                    kj, dj = _parity_map(f, kx - 1)
                    cell = 3 * (e + ki) + (f + kj)
                    # skip-connection channels through conv1
                    o = (2 * di + dj) * c_skip
                    wa[cell, o:o + c_skip, col:col + cout] += w1[:, :c_skip, ky, kx].T
                    # deconv(x2) channels folded through conv1
                    o = 4 * c_skip
                    wa[cell, o:o + cin2, col:col + cout] += (
                        wup[:, :, di, dj] @ w1[:, c_skip:, ky, kx].T)
                    # deconv bias folded through conv1 ("ones" channel handles borders)
                    wa[cell, o + cin2, col:col + cout] += w1[:, c_skip:, ky, kx] @ bup
                    # conv2 expressed on the parity-split coarse layout
                    o = (2 * di + dj) * cp
                    wb[cell, o:o + cout, col:col + cout] += wc2[:, :, ky, kx].T

    b1t = np.zeros((1, 4 * cp), np.float32)
    b2t = np.zeros((1, 4 * cp), np.float32)
    for g in range(4):
        b1t[0, g * cp:g * cp + cout] = b1
        b2t[0, g * cp:g * cp + cout] = b2

    return {
        "wa": jnp.asarray(wa, jnp.bfloat16),
        "wb": jnp.asarray(wb, jnp.bfloat16),
        "b1": jnp.asarray(b1t, jnp.float32),
        "b2": jnp.asarray(b2t, jnp.float32),
        "bn1_g": jnp.asarray(params["bn1_g"], jnp.float32),
        "bn1_b": jnp.asarray(params["bn1_b"], jnp.float32),
        "bn2_g": jnp.asarray(params["bn2_g"], jnp.float32),
        "bn2_b": jnp.asarray(params["bn2_b"], jnp.float32),
    }


# ------------------------------- unetUp forward ------------------------------

def unet_up_forward(inputs1, inputs2, comp, eps=1e-5):
    """unetUp.forward (is_deconv=True).  Inputs/outputs are NCHW like PyTorch."""
    x1 = jnp.transpose(inputs1, (0, 2, 3, 1)).astype(jnp.float32)   # NHWC skip
    x2 = jnp.transpose(inputs2, (0, 2, 3, 1)).astype(jnp.float32)   # NHWC coarse
    n, h2, w2, cin2 = x2.shape
    c_skip = x1.shape[3]
    c4 = comp["b1"].shape[1]
    cp = c4 // 4
    cout = comp["bn1_g"].shape[0]
    ct_a_pad = comp["wa"].shape[1]
    ct_a = 4 * c_skip + cin2 + 1
    hf, wf = 2 * h2, 2 * w2
    Wp, Hp = w2 + 2, h2 + 2
    R = h2 * Wp                       # output rows per image (padded-width layout)
    rows_ext = Hp * Wp + 8            # slack so every 3x3 window slice is in-bounds

    # F.pad(inputs1, [l, r, t, b]) to match the upsampled spatial size.
    off1, off2 = hf - x1.shape[1], wf - x1.shape[2]
    x1p = jnp.pad(x1, ((0, 0), (off1 // 2, (off1 + 1) // 2),
                       (off2 // 2, (off2 + 1) // 2), (0, 0)))
    # Parity-split the skip onto the coarse grid; append x2 and a ones channel.
    x1s = x1p.reshape(n, h2, 2, w2, 2, c_skip).transpose(0, 1, 3, 2, 4, 5)
    x1s = x1s.reshape(n, h2, w2, 4 * c_skip)
    ones = jnp.ones((n, h2, w2, 1), jnp.float32)
    z = jnp.concatenate([x1s, x2, ones], axis=-1)
    # Zero-pad: channels up to a 128-multiple K, 1-px spatial border, flatten to
    # padded rows, plus a few zero rows so the (2,2) window slice stays in-bounds.
    z = jnp.pad(z, ((0, 0), (1, 1), (1, 1), (0, ct_a_pad - ct_a)))
    z = z.reshape(n, Hp * Wp, ct_a_pad)
    z = jnp.pad(z, ((0, 0), (0, rows_ext - Hp * Wp), (0, 0))).astype(jnp.bfloat16)

    # Valid-row mask for the padded-width row enumeration (X < w2).
    mask = jnp.asarray(((np.arange(R) % Wp) < w2).astype(np.float32).reshape(R, 1))

    # Kernel 1: deconv + pad + concat + conv1 (+ batch stats), parity-split output.
    y1, s1a, s2a = _call_conv1(z, comp["wa"], comp["b1"], mask, Wp=Wp, R=R, cp=cp)

    count = float(n * hf * wf)

    def bn_affine(s1, s2, gamma, beta):
        # Single-pass E[x^2]-E[x]^2 in f32 with var clamped >= 0.
        # TODO(synk): switch to a two-pass / Welford form if feature maps grow large.
        s1 = jnp.sum(s1.reshape(n, 4, cp), axis=(0, 1))
        s2 = jnp.sum(s2.reshape(n, 4, cp), axis=(0, 1))
        mean = s1 / count
        var = jnp.maximum(s2 / count - mean * mean, 0.0)
        g = jnp.pad(gamma, (0, cp - cout))            # padded channels stay exactly 0
        b = jnp.pad(beta, (0, cp - cout))
        scale = g * jax.lax.rsqrt(var + eps)
        shift = b - mean * scale
        return (jnp.tile(scale, 4).reshape(1, c4),
                jnp.tile(shift, 4).reshape(1, c4))

    sc1, sh1 = bn_affine(s1a, s2a, comp["bn1_g"], comp["bn1_b"])

    # Kernel 2: BN1 + ReLU fused into the input of conv2 (+ batch stats).
    y2, s1b, s2b = _call_conv2(y1, sc1, sh1, comp["wb"], comp["b2"], mask,
                               Wp=Wp, R=R, cp=cp, rows_ext=rows_ext)
    sc2, sh2 = bn_affine(s1b, s2b, comp["bn2_g"], comp["bn2_b"])

    # Kernel 3: BN2 + ReLU + parity->fine unshuffle; reshape below is free.
    out5 = _call_bn_relu_out(y2, sc2, sh2, Wp=Wp, w2=w2, cp=cp)
    out = out5.reshape(n, hf, wf, cp)[..., :cout]
    return jnp.transpose(out, (0, 3, 1, 2))           # single NHWC->NCHW pass


# ----------------------------- params / reference ----------------------------

def init_params(key, in_size, out_size):
    ks = jax.random.split(key, 8)
    return {
        # ConvTranspose2d weight layout: (in, out, kH, kW)
        "up_w": 0.2 * jax.random.normal(ks[0], (in_size, out_size, 2, 2), jnp.float32),
        "up_b": 0.1 * jax.random.normal(ks[1], (out_size,), jnp.float32),
        # Conv2d weight layout: (out, in, kH, kW)
        "c1_w": 0.2 * jax.random.normal(ks[2], (out_size, in_size, 3, 3), jnp.float32),
        "c1_b": 0.1 * jax.random.normal(ks[3], (out_size,), jnp.float32),
        "bn1_g": 1.0 + 0.1 * jax.random.normal(ks[4], (out_size,), jnp.float32),
        "bn1_b": 0.1 * jax.random.normal(ks[5], (out_size,), jnp.float32),
        "c2_w": 0.2 * jax.random.normal(ks[6], (out_size, out_size, 3, 3), jnp.float32),
        "c2_b": 0.1 * jax.random.normal(ks[7], (out_size,), jnp.float32),
        "bn2_g": jnp.ones((out_size,), jnp.float32),
        "bn2_b": jnp.zeros((out_size,), jnp.float32),
    }


def _ref_forward(inputs1, inputs2, p, eps=1e-5):
    """Pure-JAX (XLA, f32) reference of the same forward, for correctness check."""
    x1 = jnp.transpose(inputs1, (0, 2, 3, 1)).astype(jnp.float32)
    x2 = jnp.transpose(inputs2, (0, 2, 3, 1)).astype(jnp.float32)
    n, h2, w2, _ = x2.shape
    cout = p["up_b"].shape[0]
    up = jnp.einsum("nijc,code->nidjeo", x2, p["up_w"])
    up = up.reshape(n, 2 * h2, 2 * w2, cout) + p["up_b"]

    h1, w1 = x1.shape[1], x1.shape[2]
    off1, off2 = 2 * h2 - h1, 2 * w2 - w1
    x1p = jnp.pad(x1, ((0, 0), (off1 // 2, (off1 + 1) // 2),
                       (off2 // 2, (off2 + 1) // 2), (0, 0)))
    h_ = jnp.concatenate([x1p, up], axis=-1)

    def block(x, wo, b, g, be):
        y = jax.lax.conv_general_dilated(
            x, jnp.transpose(wo, (2, 3, 1, 0)), (1, 1), ((1, 1), (1, 1)),
            dimension_numbers=("NHWC", "HWIO", "NHWC")) + b
        m = jnp.mean(y, axis=(0, 1, 2))
        v = jnp.var(y, axis=(0, 1, 2))
        return jnp.maximum(g * (y - m) / jnp.sqrt(v + eps) + be, 0.0)

    h_ = block(h_, p["c1_w"], p["c1_b"], p["bn1_g"], p["bn1_b"])
    h_ = block(h_, p["c2_w"], p["c2_b"], p["bn2_g"], p["bn2_b"])
    return jnp.transpose(h_, (0, 3, 1, 2))


# ------------------------------------ main -----------------------------------

if __name__ == "__main__":
    key = jax.random.PRNGKey(0)
    k1, k2, kp = jax.random.split(key, 3)

    in_size, out_size = 8, 4
    # inputs1 = skip connection: (in_size - out_size) channels so that after the
    # ConvTranspose (out_size channels) the concat has in_size channels.
    inputs1 = jax.random.normal(k1, (2, in_size - out_size, 14, 15), jnp.float32)
    inputs2 = jax.random.normal(k2, (2, in_size, 8, 8), jnp.float32)
    params = init_params(kp, in_size, out_size)
    comp = compose_params(params)

    fwd = jax.jit(unet_up_forward)
    out = jax.block_until_ready(fwd(inputs1, inputs2, comp))

    ref = _ref_forward(inputs1, inputs2, params)
    assert out.shape == ref.shape == (2, out_size, 16, 16), (out.shape, ref.shape)
    max_err = float(jnp.max(jnp.abs(out - ref)))
    # bf16 MXU inputs + bf16 y1 intermediate with f32 accumulation vs f32 reference.
    assert jnp.allclose(out, ref, atol=5e-2, rtol=5e-2), max_err

    print("KERNEL_OK")
</pallas_src>

<mosaic_0001>
module attributes {stable_mosaic.version = 11 : i64} {
  func.func @_up_cat_conv1_kernel(%arg0: i32, %arg1: memref<1x108x128xbf16, #tpu.memory_space<vmem>>, %arg2: memref<9x128x128xbf16, #tpu.memory_space<vmem>>, %arg3: memref<1x128xf32, #tpu.memory_space<vmem>>, %arg4: memref<80x1xf32, #tpu.memory_space<vmem>>, %arg5: memref<1x80x128xbf16, #tpu.memory_space<vmem>>, %arg6: memref<1x1x128xf32, #tpu.memory_space<vmem>>, %arg7: memref<1x1x128xf32, #tpu.memory_space<vmem>>) attributes {dimension_semantics = [#tpu.dimension_semantics<parallel>], iteration_bounds = array<i64: 2>, scalar_prefetch = 0 : i64, scratch_operands = 0 : i64, tpu.core_type = #tpu.core_type<tc>, window_params = [{transform_indices = @transform_0, window_bounds = array<i64: 1, 108, 128>}, {pipeline_mode = #tpu.pipeline_mode<synchronous>, transform_indices = @transform_1, window_bounds = array<i64: 9, 128, 128>}, {pipeline_mode = #tpu.pipeline_mode<synchronous>, transform_indices = @transform_2, window_bounds = array<i64: 1, 128>}, {pipeline_mode = #tpu.pipeline_mode<synchronous>, transform_indices = @transform_3, window_bounds = array<i64: 80, 1>}, {transform_indices = @transform_4, window_bounds = array<i64: 1, 80, 128>}, {transform_indices = @transform_5, window_bounds = array<i64: 1, 1, 128>}, {transform_indices = @transform_6, window_bounds = array<i64: 1, 1, 128>}]} {
    %c0 = arith.constant 0 : index
    %c0_0 = arith.constant 0 : index
    %c0_1 = arith.constant 0 : index
    %0 = vector.load %arg1[%c0, %c0_0, %c0_1] : memref<1x108x128xbf16, #tpu.memory_space<vmem>>, vector<1x80x128xbf16>
    %1 = vector.shape_cast %0 : vector<1x80x128xbf16> to vector<80x128xbf16>
    %c0_2 = arith.constant 0 : index
    %c0_3 = arith.constant 0 : index
    %c0_4 = arith.constant 0 : index
    %2 = vector.load %arg2[%c0_2, %c0_3, %c0_4] : memref<9x128x128xbf16, #tpu.memory_space<vmem>>, vector<1x128x128xbf16>
    %3 = vector.shape_cast %2 : vector<1x128x128xbf16> to vector<128x128xbf16>
    %cst = arith.constant dense<0.000000e+00> : vector<80x128xf32>
    %4 = tpu.matmul %1, %3, %cst {dimension_numbers = #tpu.dot_dimension_numbers<[1], [0], [0], [1], [0, 0, 1, 1], [], []>} : vector<80x128xbf16>, vector<128x128xbf16>, vector<80x128xf32> -> vector<80x128xf32>
    %c0_5 = arith.constant 0 : index
    %c1 = arith.constant 1 : index
    %c0_6 = arith.constant 0 : index
    %5 = vector.load %arg1[%c0_5, %c1, %c0_6] : memref<1x108x128xbf16, #tpu.memory_space<vmem>>, vector<1x80x128xbf16>
    %6 = vector.shape_cast %5 : vector<1x80x128xbf16> to vector<80x128xbf16>
    %c1_7 = arith.constant 1 : index
    %c0_8 = arith.constant 0 : index
    %c0_9 = arith.constant 0 : index
    %7 = vector.load %arg2[%c1_7, %c0_8, %c0_9] : memref<9x128x128xbf16, #tpu.memory_space<vmem>>, vector<1x128x128xbf16>
    %8 = vector.shape_cast %7 : vector<1x128x128xbf16> to vector<128x128xbf16>
    %cst_10 = arith.constant dense<0.000000e+00> : vector<80x128xf32>
    %9 = tpu.matmul %6, %8, %cst_10 {dimension_numbers = #tpu.dot_dimension_numbers<[1], [0], [0], [1], [0, 0, 1, 1], [], []>} : vector<80x128xbf16>, vector<128x128xbf16>, vector<80x128xf32> -> vector<80x128xf32>
    %10 = arith.addf %4, %9 : vector<80x128xf32>
    %c0_11 = arith.constant 0 : index
    %c2 = arith.constant 2 : index
    %c0_12 = arith.constant 0 : index
    %11 = vector.load %arg1[%c0_11, %c2, %c0_12] : memref<1x108x128xbf16, #tpu.memory_space<vmem>>, vector<1x80x128xbf16>
    %12 = vector.shape_cast %11 : vector<1x80x128xbf16> to vector<80x128xbf16>
    %c2_13 = arith.constant 2 : index
    %c0_14 = arith.constant 0 : index
    %c0_15 = arith.constant 0 : index
    %13 = vector.load %arg2[%c2_13, %c0_14, %c0_15] : memref<9x128x128xbf16, #tpu.memory_space<vmem>>, vector<1x128x128xbf16>
    %14 = vector.shape_cast %13 : vector<1x128x128xbf16> to vector<128x128xbf16>
    %cst_16 = arith.constant dense<0.000000e+00> : vector<80x128xf32>
    %15 = tpu.matmul %12, %14, %cst_16 {dimension_numbers = #tpu.dot_dimension_numbers<[1], [0], [0], [1], [0, 0, 1, 1], [], []>} : vector<80x128xbf16>, vector<128x128xbf16>, vector<80x128xf32> -> vector<80x128xf32>
    %16 = arith.addf %10, %15 : vector<80x128xf32>
    %c0_17 = arith.constant 0 : index
    %c10 = arith.constant 10 : index
    %c0_18 = arith.constant 0 : index
    %17 = vector.load %arg1[%c0_17, %c10, %c0_18] : memref<1x108x128xbf16, #tpu.memory_space<vmem>>, vector<1x80x128xbf16>
    %18 = vector.shape_cast %17 : vector<1x80x128xbf16> to vector<80x128xbf16>
    %c3 = arith.constant 3 : index
    %c0_19 = arith.constant 0 : index
    %c0_20 = arith.constant 0 : index
    %19 = vector.load %arg2[%c3, %c0_19, %c0_20] : memref<9x128x128xbf16, #tpu.memory_space<vmem>>, vector<1x128x128xbf16>
    %20 = vector.shape_cast %19 : vector<1x128x128xbf16> to vector<128x128xbf16>
    %cst_21 = arith.constant dense<0.000000e+00> : vector<80x128xf32>
    %21 = tpu.matmul %18, %20, %cst_21 {dimension_numbers = #tpu.dot_dimension_numbers<[1], [0], [0], [1], [0, 0, 1, 1], [], []>} : vector<80x128xbf16>, vector<128x128xbf16>, vector<80x128xf32> -> vector<80x128xf32>
    %22 = arith.addf %16, %21 : vector<80x128xf32>
    %c0_22 = arith.constant 0 : index
    %c11 = arith.constant 11 : index
    %c0_23 = arith.constant 0 : index
    %23 = vector.load %arg1[%c0_22, %c11, %c0_23] : memref<1x108x128xbf16, #tpu.memory_space<vmem>>, vector<1x80x128xbf16>
    %24 = vector.shape_cast %23 : vector<1x80x128xbf16> to vector<80x128xbf16>
    %c4 = arith.constant 4 : index
    %c0_24 = arith.constant 0 : index
    %c0_25 = arith.constant 0 : index
    %25 = vector.load %arg2[%c4, %c0_24, %c0_25] : memref<9x128x128xbf16, #tpu.memory_space<vmem>>, vector<1x128x128xbf16>
    %26 = vector.shape_cast %25 : vector<1x128x128xbf16> to vector<128x128xbf16>
    %cst_26 = arith.constant dense<0.000000e+00> : vector<80x128xf32>
    %27 = tpu.matmul %24, %26, %cst_26 {dimension_numbers = #tpu.dot_dimension_numbers<[1], [0], [0], [1], [0, 0, 1, 1], [], []>} : vector<80x128xbf16>, vector<128x128xbf16>, vector<80x128xf32> -> vector<80x128xf32>
    %28 = arith.addf %22, %27 : vector<80x128xf32>
    %c0_27 = arith.constant 0 : index
    %c12 = arith.constant 12 : index
    %c0_28 = arith.constant 0 : index
    %29 = vector.load %arg1[%c0_27, %c12, %c0_28] : memref<1x108x128xbf16, #tpu.memory_space<vmem>>, vector<1x80x128xbf16>
    %30 = vector.shape_cast %29 : vector<1x80x128xbf16> to vector<80x128xbf16>
    %c5 = arith.constant 5 : index
    %c0_29 = arith.constant 0 : index
    %c0_30 = arith.constant 0 : index
    %31 = vector.load %arg2[%c5, %c0_29, %c0_30] : memref<9x128x128xbf16, #tpu.memory_space<vmem>>, vector<1x128x128xbf16>
    %32 = vector.shape_cast %31 : vector<1x128x128xbf16> to vector<128x128xbf16>
    %cst_31 = arith.constant dense<0.000000e+00> : vector<80x128xf32>
    %33 = tpu.matmul %30, %32, %cst_31 {dimension_numbers = #tpu.dot_dimension_numbers<[1], [0], [0], [1], [0, 0, 1, 1], [], []>} : vector<80x128xbf16>, vector<128x128xbf16>, vector<80x128xf32> -> vector<80x128xf32>
    %34 = arith.addf %28, %33 : vector<80x128xf32>
    %c0_32 = arith.constant 0 : index
    %c20 = arith.constant 20 : index
    %c0_33 = arith.constant 0 : index
    %35 = vector.load %arg1[%c0_32, %c20, %c0_33] : memref<1x108x128xbf16, #tpu.memory_space<vmem>>, vector<1x80x128xbf16>
    %36 = vector.shape_cast %35 : vector<1x80x128xbf16> to vector<80x128xbf16>
    %c6 = arith.constant 6 : index
    %c0_34 = arith.constant 0 : index
    %c0_35 = arith.constant 0 : index
    %37 = vector.load %arg2[%c6, %c0_34, %c0_35] : memref<9x128x128xbf16, #tpu.memory_space<vmem>>, vector<1x128x128xbf16>
    %38 = vector.shape_cast %37 : vector<1x128x128xbf16> to vector<128x128xbf16>
    %cst_36 = arith.constant dense<0.000000e+00> : vector<80x128xf32>
    %39 = tpu.matmul %36, %38, %cst_36 {dimension_numbers = #tpu.dot_dimension_numbers<[1], [0], [0], [1], [0, 0, 1, 1], [], []>} : vector<80x128xbf16>, vector<128x128xbf16>, vector<80x128xf32> -> vector<80x128xf32>
    %40 = arith.addf %34, %39 : vector<80x128xf32>
    %c0_37 = arith.constant 0 : index
    %c21 = arith.constant 21 : index
    %c0_38 = arith.constant 0 : index
    %41 = vector.load %arg1[%c0_37, %c21, %c0_38] : memref<1x108x128xbf16, #tpu.memory_space<vmem>>, vector<1x80x128xbf16>
    %42 = vector.shape_cast %41 : vector<1x80x128xbf16> to vector<80x128xbf16>
    %c7 = arith.constant 7 : index
    %c0_39 = arith.constant 0 : index
    %c0_40 = arith.constant 0 : index
    %43 = vector.load %arg2[%c7, %c0_39, %c0_40] : memref<9x128x128xbf16, #tpu.memory_space<vmem>>, vector<1x128x128xbf16>
    %44 = vector.shape_cast %43 : vector<1x128x128xbf16> to vector<128x128xbf16>
    %cst_41 = arith.constant dense<0.000000e+00> : vector<80x128xf32>
    %45 = tpu.matmul %42, %44, %cst_41 {dimension_numbers = #tpu.dot_dimension_numbers<[1], [0], [0], [1], [0, 0, 1, 1], [], []>} : vector<80x128xbf16>, vector<128x128xbf16>, vector<80x128xf32> -> vector<80x128xf32>
    %46 = arith.addf %40, %45 : vector<80x128xf32>
    %c0_42 = arith.constant 0 : index
    %c22 = arith.constant 22 : index
    %c0_43 = arith.constant 0 : index
    %47 = vector.load %arg1[%c0_42, %c22, %c0_43] : memref<1x108x128xbf16, #tpu.memory_space<vmem>>, vector<1x80x128xbf16>
    %48 = vector.shape_cast %47 : vector<1x80x128xbf16> to vector<80x128xbf16>
    %c8 = arith.constant 8 : index
    %c0_44 = arith.constant 0 : index
    %c0_45 = arith.constant 0 : index
    %49 = vector.load %arg2[%c8, %c0_44, %c0_45] : memref<9x128x128xbf16, #tpu.memory_space<vmem>>, vector<1x128x128xbf16>
    %50 = vector.shape_cast %49 : vector<1x128x128xbf16> to vector<128x128xbf16>
    %cst_46 = arith.constant dense<0.000000e+00> : vector<80x128xf32>
    %51 = tpu.matmul %48, %50, %cst_46 {dimension_numbers = #tpu.dot_dimension_numbers<[1], [0], [0], [1], [0, 0, 1, 1], [], []>} : vector<80x128xbf16>, vector<128x128xbf16>, vector<80x128xf32> -> vector<80x128xf32>
    %52 = arith.addf %46, %51 : vector<80x128xf32>
    %c0_47 = arith.constant 0 : index
    %c0_48 = arith.constant 0 : index
    %53 = vector.load %arg3[%c0_47, %c0_48] : memref<1x128xf32, #tpu.memory_space<vmem>>, vector<1x128xf32>
    %54 = vector.broadcast %53 : vector<1x128xf32> to vector<80x128xf32>
    %55 = arith.addf %52, %54 : vector<80x128xf32>
    %56 = arith.truncf %55 : vector<80x128xf32> to vector<80x128xbf16>
    %c0_49 = arith.constant 0 : index
    %c0_50 = arith.constant 0 : index
    %c0_51 = arith.constant 0 : index
    %57 = vector.load %arg5[%c0_49, %c0_50, %c0_51] : memref<1x80x128xbf16, #tpu.memory_space<vmem>>, vector<1x80x128xbf16>
    %58 = vector.shape_cast %57 : vector<1x80x128xbf16> to vector<80x128xbf16>
    %59 = vector.shape_cast %56 : vector<80x128xbf16> to vector<1x80x128xbf16>
    tpu.vector_store %arg5[%c0_49, %c0_50, %c0_51], %59 {strides = array<i32>} : memref<1x80x128xbf16, #tpu.memory_space<vmem>>, vector<1x80x128xbf16>,
    %c0_52 = arith.constant 0 : index
    %c0_53 = arith.constant 0 : index
    %60 = vector.load %arg4[%c0_52, %c0_53] : memref<80x1xf32, #tpu.memory_space<vmem>>, vector<80x1xf32>
    %61 = vector.broadcast %60 : vector<80x1xf32> to vector<80x128xf32>
    %62 = arith.mulf %55, %61 : vector<80x128xf32>
    %cst_54 = arith.constant dense<0.000000e+00> : vector<128xf32>
    %63 = vector.multi_reduction <add>, %62, %cst_54 [0] : vector<80x128xf32> to vector<128xf32>
    %64 = vector.shape_cast %63 : vector<128xf32> to vector<1x128xf32>
    %c0_55 = arith.constant 0 : index
    %c0_56 = arith.constant 0 : index
    %c0_57 = arith.constant 0 : index
    %65 = vector.load %arg6[%c0_55, %c0_56, %c0_57] : memref<1x1x128xf32, #tpu.memory_space<vmem>>, vector<1x1x128xf32>
    %66 = vector.shape_cast %65 : vector<1x1x128xf32> to vector<1x128xf32>
    %67 = vector.shape_cast %64 : vector<1x128xf32> to vector<1x1x128xf32>
    tpu.vector_store %arg6[%c0_55, %c0_56, %c0_57], %67 {strides = array<i32>} : memref<1x1x128xf32, #tpu.memory_space<vmem>>, vector<1x1x128xf32>,
    %68 = arith.mulf %62, %55 : vector<80x128xf32>
    %cst_58 = arith.constant dense<0.000000e+00> : vector<128xf32>
    %69 = vector.multi_reduction <add>, %68, %cst_58 [0] : vector<80x128xf32> to vector<128xf32>
    %70 = vector.shape_cast %69 : vector<128xf32> to vector<1x128xf32>
    %c0_59 = arith.constant 0 : index
    %c0_60 = arith.constant 0 : index
    %c0_61 = arith.constant 0 : index
    %71 = vector.load %arg7[%c0_59, %c0_60, %c0_61] : memref<1x1x128xf32, #tpu.memory_space<vmem>>, vector<1x1x128xf32>
    %72 = vector.shape_cast %71 : vector<1x1x128xf32> to vector<1x128xf32>
    %73 = vector.shape_cast %70 : vector<1x128xf32> to vector<1x1x128xf32>
    tpu.vector_store %arg7[%c0_59, %c0_60, %c0_61], %73 {strides = array<i32>} : memref<1x1x128xf32, #tpu.memory_space<vmem>>, vector<1x1x128xf32>,
    return
  }
  func.func @transform_0(%arg0: i32) -> (i32, i32, i32) {
    %c0_i32 = arith.constant 0 : i32
    %c0_i32_0 = arith.constant 0 : i32
    %c0_i32_1 = arith.constant 0 : i32
    return %arg0, %c0_i32, %c0_i32_0 : i32, i32, i32
  }
  func.func @transform_1(%arg0: i32) -> (i32, i32, i32) {
    %c0_i32 = arith.constant 0 : i32
    %c0_i32_0 = arith.constant 0 : i32
    %c0_i32_1 = arith.constant 0 : i32
    %c0_i32_2 = arith.constant 0 : i32
    return %c0_i32, %c0_i32_0, %c0_i32_1 : i32, i32, i32
  }
  func.func @transform_2(%arg0: i32) -> (i32, i32) {
    %c0_i32 = arith.constant 0 : i32
    %c0_i32_0 = arith.constant 0 : i32
    %c0_i32_1 = arith.constant 0 : i32
    return %c0_i32, %c0_i32_0 : i32, i32
  }
  func.func @transform_3(%arg0: i32) -> (i32, i32) {
    %c0_i32 = arith.constant 0 : i32
    %c0_i32_0 = arith.constant 0 : i32
    %c0_i32_1 = arith.constant 0 : i32
    return %c0_i32, %c0_i32_0 : i32, i32
  }
  func.func @transform_4(%arg0: i32) -> (i32, i32, i32) {
    %c0_i32 = arith.constant 0 : i32
    %c0_i32_0 = arith.constant 0 : i32
    %c0_i32_1 = arith.constant 0 : i32
    return %arg0, %c0_i32, %c0_i32_0 : i32, i32, i32
  }
  func.func @transform_5(%arg0: i32) -> (i32, i32, i32) {
    %c0_i32 = arith.constant 0 : i32
    %c0_i32_0 = arith.constant 0 : i32
    %c0_i32_1 = arith.constant 0 : i32
    return %arg0, %c0_i32, %c0_i32_0 : i32, i32, i32
  }
  func.func @transform_6(%arg0: i32) -> (i32, i32, i32) {
    %c0_i32 = arith.constant 0 : i32
    %c0_i32_0 = arith.constant 0 : i32
    %c0_i32_1 = arith.constant 0 : i32
    return %arg0, %c0_i32, %c0_i32_0 : i32, i32, i32
  }
}

module attributes {stable_mosaic.version = 11 : i64} {
  func.func @_bn_relu_unshuffle_kernel(%arg0: i32, %arg1: memref<1x80x128xf32, #tpu.memory_space<vmem>>, %arg2: memref<1x128xf32, #tpu.memory_space<vmem>>, %arg3: memref<1x128xf32, #tpu.memory_space<vmem>>, %arg4: memref<1x8x2x8x64xf32, #tpu.memory_space<vmem>>) attributes {dimension_semantics = [#tpu.dimension_semantics<parallel>], iteration_bounds = array<i64: 2>, scalar_prefetch = 0 : i64, scratch_operands = 0 : i64, tpu.core_type = #tpu.core_type<tc>, window_params = [{transform_indices = @transform_0, window_bounds = array<i64: 1, 80, 128>}, {pipeline_mode = #tpu.pipeline_mode<synchronous>, transform_indices = @transform_1, window_bounds = array<i64: 1, 128>}, {pipeline_mode = #tpu.pipeline_mode<synchronous>, transform_indices = @transform_2, window_bounds = array<i64: 1, 128>}, {transform_indices = @transform_3, window_bounds = array<i64: 1, 8, 2, 8, 64>}]} {
    %c0 = arith.constant 0 : index
    %c0_0 = arith.constant 0 : index
    %c0_1 = arith.constant 0 : index
    %0 = vector.load %arg1[%c0, %c0_0, %c0_1] : memref<1x80x128xf32, #tpu.memory_space<vmem>>, vector<1x80x128xf32>
    %1 = vector.shape_cast %0 : vector<1x80x128xf32> to vector<80x128xf32>
    %c0_2 = arith.constant 0 : index
    %c0_3 = arith.constant 0 : index
    %2 = vector.load %arg2[%c0_2, %c0_3] : memref<1x128xf32, #tpu.memory_space<vmem>>, vector<1x128xf32>
    %3 = vector.broadcast %2 : vector<1x128xf32> to vector<80x128xf32>
    %4 = arith.mulf %1, %3 : vector<80x128xf32>
    %c0_4 = arith.constant 0 : index
    %c0_5 = arith.constant 0 : index
    %5 = vector.load %arg3[%c0_4, %c0_5] : memref<1x128xf32, #tpu.memory_space<vmem>>, vector<1x128xf32>
    %6 = vector.broadcast %5 : vector<1x128xf32> to vector<80x128xf32>
    %7 = arith.addf %4, %6 : vector<80x128xf32>
    %cst = arith.constant 0.000000e+00 : f32
    %8 = vector.broadcast %cst : f32 to vector<80x128xf32>
    %9 = arith.maximumf %7, %8 : vector<80x128xf32>
    %10 = vector.extract_strided_slice %9 {offsets = [0, 0], sizes = [80, 64], strides = [1, 1]} : vector<80x128xf32> to vector<80x64xf32>
    %11 = vector.shape_cast %10 : vector<80x64xf32> to vector<8x10x64xf32>
    %12 = vector.extract_strided_slice %11 {offsets = [0, 0, 0], sizes = [8, 8, 64], strides = [1, 1, 1]} : vector<8x10x64xf32> to vector<8x8x64xf32>
    %c0_6 = arith.constant 0 : index
    %c0_7 = arith.constant 0 : index
    %c0_8 = arith.constant 0 : index
    %c0_9 = arith.constant 0 : index
    %c0_10 = arith.constant 0 : index
    %13 = vector.load %arg4[%c0_6, %c0_7, %c0_8, %c0_9, %c0_10] : memref<1x8x2x8x64xf32, #tpu.memory_space<vmem>>, vector<1x8x1x8x64xf32>
    %14 = vector.shape_cast %13 : vector<1x8x1x8x64xf32> to vector<8x8x64xf32>
    %15 = vector.shape_cast %12 : vector<8x8x64xf32> to vector<1x8x1x8x64xf32>
    tpu.vector_store %arg4[%c0_6, %c0_7, %c0_8, %c0_9, %c0_10], %15 {strides = array<i32>} : memref<1x8x2x8x64xf32, #tpu.memory_space<vmem>>, vector<1x8x1x8x64xf32>,
    %16 = vector.extract_strided_slice %9 {offsets = [0, 64], sizes = [80, 64], strides = [1, 1]} : vector<80x128xf32> to vector<80x64xf32>
    %17 = vector.shape_cast %16 : vector<80x64xf32> to vector<8x10x64xf32>
    %18 = vector.extract_strided_slice %17 {offsets = [0, 0, 0], sizes = [8, 8, 64], strides = [1, 1, 1]} : vector<8x10x64xf32> to vector<8x8x64xf32>
    %c0_11 = arith.constant 0 : index
    %c0_12 = arith.constant 0 : index
    %c1 = arith.constant 1 : index
    %c0_13 = arith.constant 0 : index
    %c0_14 = arith.constant 0 : index
    %19 = vector.load %arg4[%c0_11, %c0_12, %c1, %c0_13, %c0_14] : memref<1x8x2x8x64xf32, #tpu.memory_space<vmem>>, vector<1x8x1x8x64xf32>
    %20 = vector.shape_cast %19 : vector<1x8x1x8x64xf32> to vector<8x8x64xf32>
    %21 = vector.shape_cast %18 : vector<8x8x64xf32> to vector<1x8x1x8x64xf32>
    tpu.vector_store %arg4[%c0_11, %c0_12, %c1, %c0_13, %c0_14], %21 {strides = array<i32>} : memref<1x8x2x8x64xf32, #tpu.memory_space<vmem>>, vector<1x8x1x8x64xf32>,
    return
  }
  func.func @transform_0(%arg0: i32) -> (i32, i32, i32) {
    %c0_i32 = arith.constant 0 : i32
    %c0_i32_0 = arith.constant 0 : i32
    %c0_i32_1 = arith.constant 0 : i32
    return %arg0, %c0_i32, %c0_i32_0 : i32, i32, i32
  }
  func.func @transform_1(%arg0: i32) -> (i32, i32) {
    %c0_i32 = arith.constant 0 : i32
    %c0_i32_0 = arith.constant 0 : i32
    %c0_i32_1 = arith.constant 0 : i32
    return %c0_i32, %c0_i32_0 : i32, i32
  }
  func.func @transform_2(%arg0: i32) -> (i32, i32) {
    %c0_i32 = arith.constant 0 : i32
    %c0_i32_0 = arith.constant 0 : i32
    %c0_i32_1 = arith.constant 0 : i32
    return %c0_i32, %c0_i32_0 : i32, i32
  }
  func.func @transform_3(%arg0: i32) -> (i32, i32, i32, i32, i32) {
    %c0_i32 = arith.constant 0 : i32
    %c0_i32_0 = arith.constant 0 : i32
    %c0_i32_1 = arith.constant 0 : i32
    %c0_i32_2 = arith.constant 0 : i32
    %c0_i32_3 = arith.constant 0 : i32
    return %arg0, %c0_i32, %c0_i32_0, %c0_i32_1, %c0_i32_2 : i32, i32, i32, i32, i32
  }
}

module attributes {stable_mosaic.version = 11 : i64} {
  func.func @_bn_relu_conv2_kernel(%arg0: i32, %arg1: memref<1x80x128xbf16, #tpu.memory_space<vmem>>, %arg2: memref<1x128xf32, #tpu.memory_space<vmem>>, %arg3: memref<1x128xf32, #tpu.memory_space<vmem>>, %arg4: memref<9x128x128xbf16, #tpu.memory_space<vmem>>, %arg5: memref<1x128xf32, #tpu.memory_space<vmem>>, %arg6: memref<80x1xf32, #tpu.memory_space<vmem>>, %arg7: memref<1x80x128xf32, #tpu.memory_space<vmem>>, %arg8: memref<1x1x128xf32, #tpu.memory_space<vmem>>, %arg9: memref<1x1x128xf32, #tpu.memory_space<vmem>>, %arg10: memref<1x108x128xbf16, #tpu.memory_space<vmem>>) attributes {dimension_semantics = [#tpu.dimension_semantics<parallel>], iteration_bounds = array<i64: 2>, scalar_prefetch = 0 : i64, scratch_operands = 1 : i64, tpu.core_type = #tpu.core_type<tc>, window_params = [{transform_indices = @transform_0, window_bounds = array<i64: 1, 80, 128>}, {pipeline_mode = #tpu.pipeline_mode<synchronous>, transform_indices = @transform_1, window_bounds = array<i64: 1, 128>}, {pipeline_mode = #tpu.pipeline_mode<synchronous>, transform_indices = @transform_2, window_bounds = array<i64: 1, 128>}, {pipeline_mode = #tpu.pipeline_mode<synchronous>, transform_indices = @transform_3, window_bounds = array<i64: 9, 128, 128>}, {pipeline_mode = #tpu.pipeline_mode<synchronous>, transform_indices = @transform_4, window_bounds = array<i64: 1, 128>}, {pipeline_mode = #tpu.pipeline_mode<synchronous>, transform_indices = @transform_5, window_bounds = array<i64: 80, 1>}, {transform_indices = @transform_6, window_bounds = array<i64: 1, 80, 128>}, {transform_indices = @transform_7, window_bounds = array<i64: 1, 1, 128>}, {transform_indices = @transform_8, window_bounds = array<i64: 1, 1, 128>}]} {
    %cst = arith.constant 0.000000e+00 : bf16
    %0 = vector.broadcast %cst : bf16 to vector<11x128xbf16>
    %c0 = arith.constant 0 : index
    %c0_0 = arith.constant 0 : index
    %c0_1 = arith.constant 0 : index
    %1 = vector.load %arg10[%c0, %c0_0, %c0_1] : memref<1x108x128xbf16, #tpu.memory_space<vmem>>, vector<1x11x128xbf16>
    %2 = vector.shape_cast %1 : vector<1x11x128xbf16> to vector<11x128xbf16>
    %3 = vector.shape_cast %0 : vector<11x128xbf16> to vector<1x11x128xbf16>
    tpu.vector_store %arg10[%c0, %c0_0, %c0_1], %3 {strides = array<i32>} : memref<1x108x128xbf16, #tpu.memory_space<vmem>>, vector<1x11x128xbf16>,
    %cst_2 = arith.constant 0.000000e+00 : bf16
    %4 = vector.broadcast %cst_2 : bf16 to vector<17x128xbf16>
    %c0_3 = arith.constant 0 : index
    %c91 = arith.constant 91 : index
    %c0_4 = arith.constant 0 : index
    %5 = vector.load %arg10[%c0_3, %c91, %c0_4] : memref<1x108x128xbf16, #tpu.memory_space<vmem>>, vector<1x17x128xbf16>
    %6 = vector.shape_cast %5 : vector<1x17x128xbf16> to vector<17x128xbf16>
    %7 = vector.shape_cast %4 : vector<17x128xbf16> to vector<1x17x128xbf16>
    tpu.vector_store %arg10[%c0_3, %c91, %c0_4], %7 {strides = array<i32>} : memref<1x108x128xbf16, #tpu.memory_space<vmem>>, vector<1x17x128xbf16>,
    %c0_5 = arith.constant 0 : index
    %c0_6 = arith.constant 0 : index
    %c0_7 = arith.constant 0 : index
    %8 = vector.load %arg1[%c0_5, %c0_6, %c0_7] : memref<1x80x128xbf16, #tpu.memory_space<vmem>>, vector<1x80x128xbf16>
    %9 = vector.shape_cast %8 : vector<1x80x128xbf16> to vector<80x128xbf16>
    %10 = arith.extf %9 : vector<80x128xbf16> to vector<80x128xf32>
    %c0_8 = arith.constant 0 : index
    %c0_9 = arith.constant 0 : index
    %11 = vector.load %arg2[%c0_8, %c0_9] : memref<1x128xf32, #tpu.memory_space<vmem>>, vector<1x128xf32>
    %12 = vector.broadcast %11 : vector<1x128xf32> to vector<80x128xf32>
    %13 = arith.mulf %10, %12 : vector<80x128xf32>
    %c0_10 = arith.constant 0 : index
    %c0_11 = arith.constant 0 : index
    %14 = vector.load %arg3[%c0_10, %c0_11] : memref<1x128xf32, #tpu.memory_space<vmem>>, vector<1x128xf32>
    %15 = vector.broadcast %14 : vector<1x128xf32> to vector<80x128xf32>
    %16 = arith.addf %13, %15 : vector<80x128xf32>
    %cst_12 = arith.constant 0.000000e+00 : f32
    %17 = vector.broadcast %cst_12 : f32 to vector<80x128xf32>
    %18 = arith.maximumf %16, %17 : vector<80x128xf32>
    %c0_13 = arith.constant 0 : index
    %c0_14 = arith.constant 0 : index
    %19 = vector.load %arg6[%c0_13, %c0_14] : memref<80x1xf32, #tpu.memory_space<vmem>>, vector<80x1xf32>
    %20 = vector.broadcast %19 : vector<80x1xf32> to vector<80x128xf32>
    %21 = arith.mulf %18, %20 : vector<80x128xf32>
    %22 = arith.truncf %21 : vector<80x128xf32> to vector<80x128xbf16>
    %c0_15 = arith.constant 0 : index
    %c11 = arith.constant 11 : index
    %c0_16 = arith.constant 0 : index
    %23 = vector.load %arg10[%c0_15, %c11, %c0_16] : memref<1x108x128xbf16, #tpu.memory_space<vmem>>, vector<1x80x128xbf16>
    %24 = vector.shape_cast %23 : vector<1x80x128xbf16> to vector<80x128xbf16>
    %25 = vector.shape_cast %22 : vector<80x128xbf16> to vector<1x80x128xbf16>
    tpu.vector_store %arg10[%c0_15, %c11, %c0_16], %25 {strides = array<i32>} : memref<1x108x128xbf16, #tpu.memory_space<vmem>>, vector<1x80x128xbf16>,
    %c0_17 = arith.constant 0 : index
    %c0_18 = arith.constant 0 : index
    %c0_19 = arith.constant 0 : index
    %26 = vector.load %arg10[%c0_17, %c0_18, %c0_19] : memref<1x108x128xbf16, #tpu.memory_space<vmem>>, vector<1x80x128xbf16>
    %27 = vector.shape_cast %26 : vector<1x80x128xbf16> to vector<80x128xbf16>
    %c0_20 = arith.constant 0 : index
    %c0_21 = arith.constant 0 : index
    %c0_22 = arith.constant 0 : index
    %28 = vector.load %arg4[%c0_20, %c0_21, %c0_22] : memref<9x128x128xbf16, #tpu.memory_space<vmem>>, vector<1x128x128xbf16>
    %29 = vector.shape_cast %28 : vector<1x128x128xbf16> to vector<128x128xbf16>
    %cst_23 = arith.constant dense<0.000000e+00> : vector<80x128xf32>
    %30 = tpu.matmul %27, %29, %cst_23 {dimension_numbers = #tpu.dot_dimension_numbers<[1], [0], [0], [1], [0, 0, 1, 1], [], []>} : vector<80x128xbf16>, vector<128x128xbf16>, vector<80x128xf32> -> vector<80x128xf32>
    %c0_24 = arith.constant 0 : index
    %c1 = arith.constant 1 : index
    %c0_25 = arith.constant 0 : index
    %31 = vector.load %arg10[%c0_24, %c1, %c0_25] : memref<1x108x128xbf16, #tpu.memory_space<vmem>>, vector<1x80x128xbf16>
    %32 = vector.shape_cast %31 : vector<1x80x128xbf16> to vector<80x128xbf16>
    %c1_26 = arith.constant 1 : index
    %c0_27 = arith.constant 0 : index
    %c0_28 = arith.constant 0 : index
    %33 = vector.load %arg4[%c1_26, %c0_27, %c0_28] : memref<9x128x128xbf16, #tpu.memory_space<vmem>>, vector<1x128x128xbf16>
    %34 = vector.shape_cast %33 : vector<1x128x128xbf16> to vector<128x128xbf16>
    %cst_29 = arith.constant dense<0.000000e+00> : vector<80x128xf32>
    %35 = tpu.matmul %32, %34, %cst_29 {dimension_numbers = #tpu.dot_dimension_numbers<[1], [0], [0], [1], [0, 0, 1, 1], [], []>} : vector<80x128xbf16>, vector<128x128xbf16>, vector<80x128xf32> -> vector<80x128xf32>
    %36 = arith.addf %30, %35 : vector<80x128xf32>
    %c0_30 = arith.constant 0 : index
    %c2 = arith.constant 2 : index
    %c0_31 = arith.constant 0 : index
    %37 = vector.load %arg10[%c0_30, %c2, %c0_31] : memref<1x108x128xbf16, #tpu.memory_space<vmem>>, vector<1x80x128xbf16>
    %38 = vector.shape_cast %37 : vector<1x80x128xbf16> to vector<80x128xbf16>
    %c2_32 = arith.constant 2 : index
    %c0_33 = arith.constant 0 : index
    %c0_34 = arith.constant 0 : index
    %39 = vector.load %arg4[%c2_32, %c0_33, %c0_34] : memref<9x128x128xbf16, #tpu.memory_space<vmem>>, vector<1x128x128xbf16>
    %40 = vector.shape_cast %39 : vector<1x128x128xbf16> to vector<128x128xbf16>
    %cst_35 = arith.constant dense<0.000000e+00> : vector<80x128xf32>
    %41 = tpu.matmul %38, %40, %cst_35 {dimension_numbers = #tpu.dot_dimension_numbers<[1], [0], [0], [1], [0, 0, 1, 1], [], []>} : vector<80x128xbf16>, vector<128x128xbf16>, vector<80x128xf32> -> vector<80x128xf32>
    %42 = arith.addf %36, %41 : vector<80x128xf32>
    %c0_36 = arith.constant 0 : index
    %c10 = arith.constant 10 : index
    %c0_37 = arith.constant 0 : index
    %43 = vector.load %arg10[%c0_36, %c10, %c0_37] : memref<1x108x128xbf16, #tpu.memory_space<vmem>>, vector<1x80x128xbf16>
    %44 = vector.shape_cast %43 : vector<1x80x128xbf16> to vector<80x128xbf16>
    %c3 = arith.constant 3 : index
    %c0_38 = arith.constant 0 : index
    %c0_39 = arith.constant 0 : index
    %45 = vector.load %arg4[%c3, %c0_38, %c0_39] : memref<9x128x128xbf16, #tpu.memory_space<vmem>>, vector<1x128x128xbf16>
    %46 = vector.shape_cast %45 : vector<1x128x128xbf16> to vector<128x128xbf16>
    %cst_40 = arith.constant dense<0.000000e+00> : vector<80x128xf32>
    %47 = tpu.matmul %44, %46, %cst_40 {dimension_numbers = #tpu.dot_dimension_numbers<[1], [0], [0], [1], [0, 0, 1, 1], [], []>} : vector<80x128xbf16>, vector<128x128xbf16>, vector<80x128xf32> -> vector<80x128xf32>
    %48 = arith.addf %42, %47 : vector<80x128xf32>
    %c0_41 = arith.constant 0 : index
    %c11_42 = arith.constant 11 : index
    %c0_43 = arith.constant 0 : index
    %49 = vector.load %arg10[%c0_41, %c11_42, %c0_43] : memref<1x108x128xbf16, #tpu.memory_space<vmem>>, vector<1x80x128xbf16>
    %50 = vector.shape_cast %49 : vector<1x80x128xbf16> to vector<80x128xbf16>
    %c4 = arith.constant 4 : index
    %c0_44 = arith.constant 0 : index
    %c0_45 = arith.constant 0 : index
    %51 = vector.load %arg4[%c4, %c0_44, %c0_45] : memref<9x128x128xbf16, #tpu.memory_space<vmem>>, vector<1x128x128xbf16>
    %52 = vector.shape_cast %51 : vector<1x128x128xbf16> to vector<128x128xbf16>
    %cst_46 = arith.constant dense<0.000000e+00> : vector<80x128xf32>
    %53 = tpu.matmul %50, %52, %cst_46 {dimension_numbers = #tpu.dot_dimension_numbers<[1], [0], [0], [1], [0, 0, 1, 1], [], []>} : vector<80x128xbf16>, vector<128x128xbf16>, vector<80x128xf32> -> vector<80x128xf32>
    %54 = arith.addf %48, %53 : vector<80x128xf32>
    %c0_47 = arith.constant 0 : index
    %c12 = arith.constant 12 : index
    %c0_48 = arith.constant 0 : index
    %55 = vector.load %arg10[%c0_47, %c12, %c0_48] : memref<1x108x128xbf16, #tpu.memory_space<vmem>>, vector<1x80x128xbf16>
    %56 = vector.shape_cast %55 : vector<1x80x128xbf16> to vector<80x128xbf16>
    %c5 = arith.constant 5 : index
    %c0_49 = arith.constant 0 : index
    %c0_50 = arith.constant 0 : index
    %57 = vector.load %arg4[%c5, %c0_49, %c0_50] : memref<9x128x128xbf16, #tpu.memory_space<vmem>>, vector<1x128x128xbf16>
    %58 = vector.shape_cast %57 : vector<1x128x128xbf16> to vector<128x128xbf16>
    %cst_51 = arith.constant dense<0.000000e+00> : vector<80x128xf32>
    %59 = tpu.matmul %56, %58, %cst_51 {dimension_numbers = #tpu.dot_dimension_numbers<[1], [0], [0], [1], [0, 0, 1, 1], [], []>} : vector<80x128xbf16>, vector<128x128xbf16>, vector<80x128xf32> -> vector<80x128xf32>
    %60 = arith.addf %54, %59 : vector<80x128xf32>
    %c0_52 = arith.constant 0 : index
    %c20 = arith.constant 20 : index
    %c0_53 = arith.constant 0 : index
    %61 = vector.load %arg10[%c0_52, %c20, %c0_53] : memref<1x108x128xbf16, #tpu.memory_space<vmem>>, vector<1x80x128xbf16>
    %62 = vector.shape_cast %61 : vector<1x80x128xbf16> to vector<80x128xbf16>
    %c6 = arith.constant 6 : index
    %c0_54 = arith.constant 0 : index
    %c0_55 = arith.constant 0 : index
    %63 = vector.load %arg4[%c6, %c0_54, %c0_55] : memref<9x128x128xbf16, #tpu.memory_space<vmem>>, vector<1x128x128xbf16>
    %64 = vector.shape_cast %63 : vector<1x128x128xbf16> to vector<128x128xbf16>
    %cst_56 = arith.constant dense<0.000000e+00> : vector<80x128xf32>
    %65 = tpu.matmul %62, %64, %cst_56 {dimension_numbers = #tpu.dot_dimension_numbers<[1], [0], [0], [1], [0, 0, 1, 1], [], []>} : vector<80x128xbf16>, vector<128x128xbf16>, vector<80x128xf32> -> vector<80x128xf32>
    %66 = arith.addf %60, %65 : vector<80x128xf32>
    %c0_57 = arith.constant 0 : index
    %c21 = arith.constant 21 : index
    %c0_58 = arith.constant 0 : index
    %67 = vector.load %arg10[%c0_57, %c21, %c0_58] : memref<1x108x128xbf16, #tpu.memory_space<vmem>>, vector<1x80x128xbf16>
    %68 = vector.shape_cast %67 : vector<1x80x128xbf16> to vector<80x128xbf16>
    %c7 = arith.constant 7 : index
    %c0_59 = arith.constant 0 : index
    %c0_60 = arith.constant 0 : index
    %69 = vector.load %arg4[%c7, %c0_59, %c0_60] : memref<9x128x128xbf16, #tpu.memory_space<vmem>>, vector<1x128x128xbf16>
    %70 = vector.shape_cast %69 : vector<1x128x128xbf16> to vector<128x128xbf16>
    %cst_61 = arith.constant dense<0.000000e+00> : vector<80x128xf32>
    %71 = tpu.matmul %68, %70, %cst_61 {dimension_numbers = #tpu.dot_dimension_numbers<[1], [0], [0], [1], [0, 0, 1, 1], [], []>} : vector<80x128xbf16>, vector<128x128xbf16>, vector<80x128xf32> -> vector<80x128xf32>
    %72 = arith.addf %66, %71 : vector<80x128xf32>
    %c0_62 = arith.constant 0 : index
    %c22 = arith.constant 22 : index
    %c0_63 = arith.constant 0 : index
    %73 = vector.load %arg10[%c0_62, %c22, %c0_63] : memref<1x108x128xbf16, #tpu.memory_space<vmem>>, vector<1x80x128xbf16>
    %74 = vector.shape_cast %73 : vector<1x80x128xbf16> to vector<80x128xbf16>
    %c8 = arith.constant 8 : index
    %c0_64 = arith.constant 0 : index
    %c0_65 = arith.constant 0 : index
    %75 = vector.load %arg4[%c8, %c0_64, %c0_65] : memref<9x128x128xbf16, #tpu.memory_space<vmem>>, vector<1x128x128xbf16>
    %76 = vector.shape_cast %75 : vector<1x128x128xbf16> to vector<128x128xbf16>
    %cst_66 = arith.constant dense<0.000000e+00> : vector<80x128xf32>
    %77 = tpu.matmul %74, %76, %cst_66 {dimension_numbers = #tpu.dot_dimension_numbers<[1], [0], [0], [1], [0, 0, 1, 1], [], []>} : vector<80x128xbf16>, vector<128x128xbf16>, vector<80x128xf32> -> vector<80x128xf32>
    %78 = arith.addf %72, %77 : vector<80x128xf32>
    %c0_67 = arith.constant 0 : index
    %c0_68 = arith.constant 0 : index
    %79 = vector.load %arg5[%c0_67, %c0_68] : memref<1x128xf32, #tpu.memory_space<vmem>>, vector<1x128xf32>
    %80 = vector.broadcast %79 : vector<1x128xf32> to vector<80x128xf32>
    %81 = arith.addf %78, %80 : vector<80x128xf32>
    %c0_69 = arith.constant 0 : index
    %c0_70 = arith.constant 0 : index
    %c0_71 = arith.constant 0 : index
    %82 = vector.load %arg7[%c0_69, %c0_70, %c0_71] : memref<1x80x128xf32, #tpu.memory_space<vmem>>, vector<1x80x128xf32>
    %83 = vector.shape_cast %82 : vector<1x80x128xf32> to vector<80x128xf32>
    %84 = vector.shape_cast %81 : vector<80x128xf32> to vector<1x80x128xf32>
    tpu.vector_store %arg7[%c0_69, %c0_70, %c0_71], %84 {strides = array<i32>} : memref<1x80x128xf32, #tpu.memory_space<vmem>>, vector<1x80x128xf32>,
    %c0_72 = arith.constant 0 : index
    %c0_73 = arith.constant 0 : index
    %85 = vector.load %arg6[%c0_72, %c0_73] : memref<80x1xf32, #tpu.memory_space<vmem>>, vector<80x1xf32>
    %86 = vector.broadcast %85 : vector<80x1xf32> to vector<80x128xf32>
    %87 = arith.mulf %81, %86 : vector<80x128xf32>
    %cst_74 = arith.constant dense<0.000000e+00> : vector<128xf32>
    %88 = vector.multi_reduction <add>, %87, %cst_74 [0] : vector<80x128xf32> to vector<128xf32>
    %89 = vector.shape_cast %88 : vector<128xf32> to vector<1x128xf32>
    %c0_75 = arith.constant 0 : index
    %c0_76 = arith.constant 0 : index
    %c0_77 = arith.constant 0 : index
    %90 = vector.load %arg8[%c0_75, %c0_76, %c0_77] : memref<1x1x128xf32, #tpu.memory_space<vmem>>, vector<1x1x128xf32>
    %91 = vector.shape_cast %90 : vector<1x1x128xf32> to vector<1x128xf32>
    %92 = vector.shape_cast %89 : vector<1x128xf32> to vector<1x1x128xf32>
    tpu.vector_store %arg8[%c0_75, %c0_76, %c0_77], %92 {strides = array<i32>} : memref<1x1x128xf32, #tpu.memory_space<vmem>>, vector<1x1x128xf32>,
    %93 = arith.mulf %87, %81 : vector<80x128xf32>
    %cst_78 = arith.constant dense<0.000000e+00> : vector<128xf32>
    %94 = vector.multi_reduction <add>, %93, %cst_78 [0] : vector<80x128xf32> to vector<128xf32>
    %95 = vector.shape_cast %94 : vector<128xf32> to vector<1x128xf32>
    %c0_79 = arith.constant 0 : index
    %c0_80 = arith.constant 0 : index
    %c0_81 = arith.constant 0 : index
    %96 = vector.load %arg9[%c0_79, %c0_80, %c0_81] : memref<1x1x128xf32, #tpu.memory_space<vmem>>, vector<1x1x128xf32>
    %97 = vector.shape_cast %96 : vector<1x1x128xf32> to vector<1x128xf32>
    %98 = vector.shape_cast %95 : vector<1x128xf32> to vector<1x1x128xf32>
    tpu.vector_store %arg9[%c0_79, %c0_80, %c0_81], %98 {strides = array<i32>} : memref<1x1x128xf32, #tpu.memory_space<vmem>>, vector<1x1x128xf32>,
    return
  }
  func.func @transform_0(%arg0: i32) -> (i32, i32, i32) {
    %c0_i32 = arith.constant 0 : i32
    %c0_i32_0 = arith.constant 0 : i32
    %c0_i32_1 = arith.constant 0 : i32
    return %arg0, %c0_i32, %c0_i32_0 : i32, i32, i32
  }
  func.func @transform_1(%arg0: i32) -> (i32, i32) {
    %c0_i32 = arith.constant 0 : i32
    %c0_i32_0 = arith.constant 0 : i32
    %c0_i32_1 = arith.constant 0 : i32
    return %c0_i32, %c0_i32_0 : i32, i32
  }
  func.func @transform_2(%arg0: i32) -> (i32, i32) {
    %c0_i32 = arith.constant 0 : i32
    %c0_i32_0 = arith.constant 0 : i32
    %c0_i32_1 = arith.constant 0 : i32
    return %c0_i32, %c0_i32_0 : i32, i32
  }
  func.func @transform_3(%arg0: i32) -> (i32, i32, i32) {
    %c0_i32 = arith.constant 0 : i32
    %c0_i32_0 = arith.constant 0 : i32
    %c0_i32_1 = arith.constant 0 : i32
    %c0_i32_2 = arith.constant 0 : i32
    return %c0_i32, %c0_i32_0, %c0_i32_1 : i32, i32, i32
  }
  func.func @transform_4(%arg0: i32) -> (i32, i32) {
    %c0_i32 = arith.constant 0 : i32
    %c0_i32_0 = arith.constant 0 : i32
    %c0_i32_1 = arith.constant 0 : i32
    return %c0_i32, %c0_i32_0 : i32, i32
  }
  func.func @transform_5(%arg0: i32) -> (i32, i32) {
    %c0_i32 = arith.constant 0 : i32
    %c0_i32_0 = arith.constant 0 : i32
    %c0_i32_1 = arith.constant 0 : i32
    return %c0_i32, %c0_i32_0 : i32, i32
  }
  func.func @transform_6(%arg0: i32) -> (i32, i32, i32) {
    %c0_i32 = arith.constant 0 : i32
    %c0_i32_0 = arith.constant 0 : i32
    %c0_i32_1 = arith.constant 0 : i32
    return %arg0, %c0_i32, %c0_i32_0 : i32, i32, i32
  }
  func.func @transform_7(%arg0: i32) -> (i32, i32, i32) {
    %c0_i32 = arith.constant 0 : i32
    %c0_i32_0 = arith.constant 0 : i32
    %c0_i32_1 = arith.constant 0 : i32
    return %arg0, %c0_i32, %c0_i32_0 : i32, i32, i32
  }
  func.func @transform_8(%arg0: i32) -> (i32, i32, i32) {
    %c0_i32 = arith.constant 0 : i32
    %c0_i32_0 = arith.constant 0 : i32
    %c0_i32_1 = arith.constant 0 : i32
    return %arg0, %c0_i32, %c0_i32_0 : i32, i32, i32
  }
}

</mosaic_0001>

<llo_original>
// kernel: tile.28
$region0: #{tile.28}
  #allocation0 [shape = 's32[1]{0}', space=sflag, size = 0x4, scoped, tag = 'scoped memory for tile.28']
  %s0 = inlined_call_operand.vmem [shape: f32[32], index: 0, kind: input, shape index: {}]
  %s1 = inlined_call_operand.vmem [shape: f32[4,32], index: 1, kind: output, shape index: {}]
  // Predicated region
  $region2: #{tile.28} parent=0 // pred_check
    _
  $region3: #{tile.28} parent=0 // pred_check_branch
    %3 = sbr.rel (0) target = $region5
  $region4: #{tile.28} parent=0 // pred_region
    _
  $region5: #{tile.28} parent=0 // pred_fallthru
    _
  %v4 = vld [vmem:[%s0] ss:$0 sm:$0xff]
  %5 = vst [vmem:[%s1] sm:$0xf] %v4

// kernel: tile.29
$region0: #{tile.29}
  %s0 = inlined_call_operand.vmem [shape: f32[4,32], index: 0, kind: input, shape index: {}]
  %s1 = inlined_call_operand.vmem [shape: f32[1,128], index: 1, kind: output, shape index: {}]
  $region1: #{tile.29} parent=0
    #allocation0 [shape = 'u8[4096]{0}', space=vmem, size = 0x1000, scoped, tag = 'scoped mem for output reshape']
    #allocation1 [shape = 'u8[4096]{0}', space=vmem, size = 0x1000, scoped, tag = 'scoped mem for input reshape']
    %s3 = sshllo.u32 0, 4
    %v4 = vld [vmem:[%s0] sm:%s3]
    %5 = vst [vmem:[#allocation1] sm:%s3] %v4
    %v6 = vld [vmem:[#allocation1] sm:$0x1]
    %vm7 = vcmask 261120
    %8 = vst.msk [vmem:[#allocation0] sm:$0x1] %vm7, %v6
    %s9 = scalar_lea.vmem [#allocation1], 3
    %v10 = vld [vmem:[%s9] sm:$0x1]
    %11 = vrot.lane.b32.xlu0 %v10, 96
    %v12 = vpop.permute.xlu0 %11
    %vm13 = vcmask 1048320
    %14 = vst.msk [vmem:[#allocation0] sm:$0x1] %vm13, %v12
    %s15 = scalar_lea.vmem [#allocation1], 2
    %v16 = vld [vmem:[%s15] sm:$0x1]
    %17 = vrot.lane.b32.xlu0 %v16, 64
    %v18 = vpop.permute.xlu0 %17
    %vm19 = vcmask 785920
    %20 = vst.msk [vmem:[#allocation0] sm:$0x1] %vm19, %v18
    %s21 = scalar_lea.vmem [#allocation1], 1
    %v22 = vld [vmem:[%s21] sm:$0x1]
    %23 = vrot.lane.b32.xlu0 %v22, 32
    %v24 = vpop.permute.xlu0 %23
    %vm25 = vcmask 523520
    %26 = vst.msk [vmem:[#allocation0] sm:$0x1] %vm25, %v24
    %s28 = sshllo.u32 0, 1
    %v30 = vld [vmem:[#allocation0] sm:%s28]
    %s31 = sshllo.u32 0, 1
    %32 = vst [vmem:[%s1] sm:%s31] %v30

// kernel: unet_up_forward.5
$region0: #{unet_up_forward.5}
  #allocation0 [shape = 'u32[]', space=smem, size = 0x4, offset = 0x4, fixed_abs, tag = 'smem constant byte address 0x4 - core index']
  #allocation1 [shape = 'u32[144,128]{1,0:T(1,128)}', space=vmem, size = 0x12000, scoped, tag = 'internal scratch']
  %s0 = inlined_call_operand.vmem [shape: f32[2,80,128], index: 0, kind: input, shape index: {}]
  %s1 = inlined_call_operand.vmem [shape: f32[1,128], index: 1, kind: input, shape index: {}]
  %s2 = inlined_call_operand.vmem [shape: f32[1,128], index: 2, kind: input, shape index: {}]
  %s3 = inlined_call_operand.vmem [shape: f32[2,8,2,8,64], index: 3, kind: output, shape index: {}]
  %s4 = sld [smem:[#allocation0]]
  $region45: #{unet_up_forward.5} parent=0
    _
  %s6 = ssub.s32 1, %s4
  %s7 = scalar_select 0, %s6, %s4
  loop: start=0, step=1, limit=4
  $region2: #{unet_up_forward.5} parent=0 // loop_pre_header
    _
  $region3: #{unet_up_forward.5} parent=0 // loop_header
    %s9 = sphi 0, %s13
    %p10 = scmp.ge.s32.totalorder %s9, 4
    %s19 = sphi 0, %s21
    %s22 = sphi 0, %s19
    %s23 = sphi 0, %s22
    %s39 = sphi 0, %s23
    %s43 = sphi 0, %s43
    %s45 = sphi 0, %s43
    %s46 = sphi 0, %s45
    %s60 = sphi 0, %s46
    %s64 = sphi 0, %s64
    %s66 = sphi 0, %s64
    %s67 = sphi 0, %s66
    %s81 = sphi 0, %s67
    %s87 = sphi 0, %s89
    %s90 = sphi 0, %s87
    %s91 = sphi 0, %s90
    %s107 = sphi 0, %s91
  $region4: #{unet_up_forward.5} parent=0 // loop_header_branch
    %12 = sbr.rel (%p10) target = $region8
  $region5: #{unet_up_forward.5} parent=0 // loop_body
    %s14 = ssub.s32 %s9, 1
    %s15 = ssub.s32 %s9, 2
    %s16 = sadd.s32 %s9, 1
    %s17 = ssub.s32 %s9, %s16
    %p18 = scmp.eq.s32.totalorder %s17, 0
    %s20 = sadd.s32 %s19, 1
    %s21 = scalar_select %p18, %s19, %s20
    %p24 = pneg %p18
    %p25 = scmp.eq.s32.totalorder %s9, 1
    %p26 = por %p24, %p25
    %p27 = scmp.ne.s32.totalorder %s19, %s22
    %p28 = scmp.eq.s32.totalorder %s9, 0
    %p29 = por %p27, %p28
    %p30 = scmp.ne.s32.totalorder %s19, %s22
    %p31 = scmp.eq.s32.totalorder %s14, 1
    %p32 = por %p30, %p31
    %p33 = scmp.ne.s32.totalorder %s22, %s23
    %p34 = scmp.eq.s32.totalorder %s14, 0
    %p35 = por %p33, %p34
    %p36 = scmp.ne.s32.totalorder %s22, %s23
    %p37 = scmp.eq.s32.totalorder %s15, 1
    %p38 = por %p36, %p37
    %p40 = scmp.ne.s32.totalorder %s23, %s39
    %p41 = scmp.eq.s32.totalorder %s15, 0
    %p42 = por %p40, %p41
    %s44 = sadd.s32 %s43, 1
    %p47 = scmp.eq.s32.totalorder %s9, 1
    %p48 = scmp.ne.s32.totalorder %s43, %s45
    %p49 = scmp.eq.s32.totalorder %s9, 0
    %p50 = por %p48, %p49
    %p51 = scmp.ne.s32.totalorder %s43, %s45
    %p52 = scmp.eq.s32.totalorder %s14, 1
    %p53 = por %p51, %p52
    %p54 = scmp.ne.s32.totalorder %s45, %s46
    %p55 = scmp.eq.s32.totalorder %s14, 0
    %p56 = por %p54, %p55
    %p57 = scmp.ne.s32.totalorder %s45, %s46
    %p58 = scmp.eq.s32.totalorder %s15, 1
    %p59 = por %p57, %p58
    %p61 = scmp.ne.s32.totalorder %s46, %s60
    %p62 = scmp.eq.s32.totalorder %s15, 0
    %p63 = por %p61, %p62
    %s65 = sadd.s32 %s64, 1
    %p68 = scmp.eq.s32.totalorder %s9, 1
    %p69 = scmp.ne.s32.totalorder %s64, %s66
    %p70 = scmp.eq.s32.totalorder %s9, 0
    %p71 = por %p69, %p70
    %p72 = scmp.ne.s32.totalorder %s64, %s66
    %p73 = scmp.eq.s32.totalorder %s14, 1
    %p74 = por %p72, %p73
    %p75 = scmp.ne.s32.totalorder %s66, %s67
    %p76 = scmp.eq.s32.totalorder %s14, 0
    %p77 = por %p75, %p76
    %p78 = scmp.ne.s32.totalorder %s66, %s67
    %p79 = scmp.eq.s32.totalorder %s15, 1
    %p80 = por %p78, %p79
    %p82 = scmp.ne.s32.totalorder %s67, %s81
    %p83 = scmp.eq.s32.totalorder %s15, 0
    %p84 = por %p82, %p83
    %s85 = ssub.s32 %s9, %s16
    %p86 = scmp.eq.s32.totalorder %s85, 0
    %s88 = sadd.s32 %s87, 1
    %s89 = scalar_select %p86, %s87, %s88
    %p92 = pneg %p86
    %p93 = scmp.eq.s32.totalorder %s9, 1
    %p94 = por %p92, %p93
    %p95 = scmp.ne.s32.totalorder %s87, %s90
    %p96 = scmp.eq.s32.totalorder %s9, 0
    %p97 = por %p95, %p96
    %p98 = scmp.ne.s32.totalorder %s87, %s90
    %p99 = scmp.eq.s32.totalorder %s14, 1
    %p100 = por %p98, %p99
    %p101 = scmp.ne.s32.totalorder %s90, %s91
    %p102 = scmp.eq.s32.totalorder %s14, 0
    %p103 = por %p101, %p102
    %p104 = scmp.ne.s32.totalorder %s90, %s91
    %p105 = scmp.eq.s32.totalorder %s15, 1
    %p106 = por %p104, %p105
    %p108 = scmp.ne.s32.totalorder %s91, %s107
    %p109 = scmp.eq.s32.totalorder %s15, 0
    %p110 = por %p108, %p109
    %p111 = scmp.le.s32.totalorder 1, %s9
    %p112 = scmp.lt.s32.totalorder %s9, 3
    %p113 = pnand %p111, %p112
    %p114 = pneg %p113
    // Predicated region
    $region9: #{unet_up_forward.5} parent=5 // pred_check
      _
    $region10: #{unet_up_forward.5} parent=5 // pred_check_branch
      %116 = sbr.rel (%p113) target = $region12
    $region11: #{unet_up_forward.5} parent=5 // pred_region
      %s117 = ssub.s32 %s9, 1
      // Predicated region
      $region13: #{unet_up_forward.5} parent=11 // pred_check
        %p118 = pneg %p56
      $region14: #{unet_up_forward.5} parent=11 // pred_check_branch
        %120 = sbr.rel (%p118) target = $region16
      $region15: #{unet_up_forward.5} parent=11 // pred_region
        _
      $region16: #{unet_up_forward.5} parent=11 // pred_fallthru
        _
      // Predicated region
      $region17: #{unet_up_forward.5} parent=11 // pred_check
        %p121 = pneg %p77
      $region18: #{unet_up_forward.5} parent=11 // pred_check_branch
        %123 = sbr.rel (%p121) target = $region20
      $region19: #{unet_up_forward.5} parent=11 // pred_region
        _
      $region20: #{unet_up_forward.5} parent=11 // pred_fallthru
        _
    $region12: #{unet_up_forward.5} parent=5 // pred_fallthru
      _
    %p124 = scmp.lt.s32.totalorder %s9, 2
    // Predicated region
    $region21: #{unet_up_forward.5} parent=5 // pred_check
      %p125 = pneg %p124
    $region22: #{unet_up_forward.5} parent=5 // pred_check_branch
      %127 = sbr.rel (%p125) target = $region24
    $region23: #{unet_up_forward.5} parent=5 // pred_region
      // Predicated region
      $region25: #{unet_up_forward.5} parent=23 // pred_check
        %p128 = pneg %p29
      $region26: #{unet_up_forward.5} parent=23 // pred_check_branch
        %130 = sbr.rel (%p128) target = $region28
      $region27: #{unet_up_forward.5} parent=23 // pred_region
        %p131 = scmp.lt.s32.totalorder %s9, 1
        %s132 = scalar_select %p131, %s9, 1
        %s133 = smul.addr %s132, 10
        %s134 = smul.addr %s133, 8
        %s135 = scalar_lea.vmem %s0, %s134
      $region28: #{unet_up_forward.5} parent=23 // pred_fallthru
        _
    $region24: #{unet_up_forward.5} parent=5 // pred_fallthru
      _
    %p136 = scmp.le.s32.totalorder 1, %s9
    %p137 = scmp.lt.s32.totalorder %s9, 3
    %p138 = pnand %p136, %p137
    %p139 = pneg %p138
    // Predicated region
    $region29: #{unet_up_forward.5} parent=5 // pred_check
      _
    $region30: #{unet_up_forward.5} parent=5 // pred_check_branch
      %141 = sbr.rel (%p138) target = $region32
    $region31: #{unet_up_forward.5} parent=5 // pred_region
      %s142 = ssub.s32 %s9, 1
      %p143 = scmp.lt.s32.totalorder %s14, 1
      %s144 = scalar_select %p143, %s14, 1
      %s145 = smul.addr %s144, 10
      %s146 = smul.addr %s145, 8
      %s147 = scalar_lea.vmem %s0, %s146
      %p148 = pneg %p35
      %p149 = pneg %p32
      %p150 = pneg %p56
      %p151 = pneg %p53
      %p152 = pneg %p77
      %p153 = pneg %p74
      %p154 = pneg %p103
      %p155 = pneg %p100
      %p156 = scmp.lt.s32.totalorder %s14, 1
      %s157 = scalar_select %p156, %s14, 1
      %s158 = smul.addr %s157, 16
      %s159 = smul.addr %s158, 8
      %s160 = scalar_lea.vmem %s3, %s159
      %p161 = scmp.lt.s32.totalorder %s14, 1
      %s162 = scalar_select %p161, %s14, 1
      %s163 = smul.addr %s162, 10
      %s164 = smul.addr %s163, 8
      %s165 = scalar_lea.vmem %s0, %s164
      %p166 = scmp.lt.s32.totalorder %s14, 1
      %s167 = scalar_select %p166, %s14, 1
      %s168 = smul.addr %s167, 16
      %s169 = smul.addr %s168, 8
      %s170 = scalar_lea.vmem %s3, %s169
      %v171 = vld [vmem:[%s165] sm:$0xff]
      %v172 = vld [vmem:[%s165 + $0x8] sm:$0xff]
      %v173 = vld [vmem:[%s165 + $0x10] sm:$0xff]
      %v174 = vld [vmem:[%s165 + $0x18] sm:$0xff]
      %v175 = vld [vmem:[%s165 + $0x20] sm:$0xff]
      %v176 = vld [vmem:[%s165 + $0x28] sm:$0xff]
      %v177 = vld [vmem:[%s165 + $0x30] sm:$0xff]
      %v178 = vld [vmem:[%s165 + $0x38] sm:$0xff]
      %v179 = vld [vmem:[%s165 + $0x40] sm:$0xff]
      %v180 = vld [vmem:[%s165 + $0x48] sm:$0xff]
      %v181 = vld [vmem:[%s1] sm:$0x1]
      %v183 = vlaneseq
      %v184 = vshrl.u32 %v183, 7
      %v185 = vsub.s32 0, %v184
      %v186 = vrot.slane %v181, %v185
      %v188 = vmul.f32 %v171, %v186
      %v189 = vmul.f32 %v172, %v186
      %v190 = vmul.f32 %v173, %v186
      %v191 = vmul.f32 %v174, %v186
      %v192 = vmul.f32 %v175, %v186
      %v193 = vmul.f32 %v176, %v186
      %v194 = vmul.f32 %v177, %v186
      %v195 = vmul.f32 %v178, %v186
      %v196 = vmul.f32 %v179, %v186
      %v197 = vmul.f32 %v180, %v186
      %v198 = vld [vmem:[%s2] sm:$0x1]
      %v200 = vlaneseq
      %v201 = vshrl.u32 %v200, 7
      %v202 = vsub.s32 0, %v201
      %v203 = vrot.slane %v198, %v202
      %v205 = vadd.f32 %v188, %v203
      %v206 = vadd.f32 %v189, %v203
      %v207 = vadd.f32 %v190, %v203
      %v208 = vadd.f32 %v191, %v203
      %v209 = vadd.f32 %v192, %v203
      %v210 = vadd.f32 %v193, %v203
      %v211 = vadd.f32 %v194, %v203
      %v212 = vadd.f32 %v195, %v203
      %v213 = vadd.f32 %v196, %v203
      %v214 = vadd.f32 %v197, %v203
      %v215 = vmax.f32 %v205, 0.0
      %v216 = vmax.f32 %v206, 0.0
      %v217 = vmax.f32 %v207, 0.0
      %v218 = vmax.f32 %v208, 0.0
      %v219 = vmax.f32 %v209, 0.0
      %v220 = vmax.f32 %v210, 0.0
      %v221 = vmax.f32 %v211, 0.0
      %v222 = vmax.f32 %v212, 0.0
      %v223 = vmax.f32 %v213, 0.0
      %v224 = vmax.f32 %v214, 0.0
      %v235 = vcombine.high %v215, %v215
      %v237 = vunpack.c.l.s4 1983009808
      %v238 = vunpack.c.0.s8 %v237
      %v239 = vlaneseq
      %v240 = vshrl.u32 %v239, 7
      %v241 = vsub.s32 %v238, %v240
      %v242 = vrot.slane %v215, %v241
      %v244 = vunpack.c.l.s4 1983009808
      %v245 = vunpack.c.0.s8 %v244
      %v246 = vlaneseq
      %v247 = vshrl.u32 %v246, 7
      %v248 = vsub.s32 %v245, %v247
      %v249 = vrot.slane %v235, %v248
      %v250 = vcombine.high %v242, %v242
      %v251 = vcombine.high %v249, %v249
      %v252 = vcombine.high %v216, %v216
      %v254 = vunpack.c.l.s4 1983009808
      %v255 = vunpack.c.0.s8 %v254
      %v256 = vlaneseq
      %v257 = vshrl.u32 %v256, 7
      %v258 = vsub.s32 %v255, %v257
      %v259 = vrot.slane %v216, %v258
      %v261 = vunpack.c.l.s4 1983009808
      %v262 = vunpack.c.0.s8 %v261
      %v263 = vlaneseq
      %v264 = vshrl.u32 %v263, 7
      %v265 = vsub.s32 %v262, %v264
      %v266 = vrot.slane %v252, %v265
      %v267 = vcombine.high %v259, %v259
      %v268 = vcombine.high %v266, %v266
      %v269 = vcombine.high %v217, %v217
      %v271 = vunpack.c.l.s4 1983009808
      %v272 = vunpack.c.0.s8 %v271
      %v273 = vlaneseq
      %v274 = vshrl.u32 %v273, 7
      %v275 = vsub.s32 %v272, %v274
      %v276 = vrot.slane %v217, %v275
      %v278 = vunpack.c.l.s4 1983009808
      %v279 = vunpack.c.0.s8 %v278
      %v280 = vlaneseq
      %v281 = vshrl.u32 %v280, 7
      %v282 = vsub.s32 %v279, %v281
      %v283 = vrot.slane %v269, %v282
      %v284 = vcombine.high %v283, %v283
      %v285 = vcombine.high %v218, %v218
      %v287 = vunpack.c.l.s4 1983009808
      %v288 = vunpack.c.0.s8 %v287
      %v289 = vlaneseq
      %v290 = vshrl.u32 %v289, 7
      %v291 = vsub.s32 %v288, %v290
      %v292 = vrot.slane %v218, %v291
      %v294 = vunpack.c.l.s4 1983009808
      %v295 = vunpack.c.0.s8 %v294
      %v296 = vlaneseq
      %v297 = vshrl.u32 %v296, 7
      %v298 = vsub.s32 %v295, %v297
      %v299 = vrot.slane %v285, %v298
      %v300 = vcombine.high %v292, %v292
      %v301 = vcombine.high %v299, %v299
      %v302 = vcombine.high %v219, %v219
      %v304 = vunpack.c.l.s4 1983009808
      %v305 = vunpack.c.0.s8 %v304
      %v306 = vlaneseq
      %v307 = vshrl.u32 %v306, 7
      %v308 = vsub.s32 %v305, %v307
      %v309 = vrot.slane %v219, %v308
      %v311 = vunpack.c.l.s4 1983009808
      %v312 = vunpack.c.0.s8 %v311
      %v313 = vlaneseq
      %v314 = vshrl.u32 %v313, 7
      %v315 = vsub.s32 %v312, %v314
      %v316 = vrot.slane %v302, %v315
      %v317 = vcombine.high %v309, %v309
      %v318 = vcombine.high %v220, %v220
      %v320 = vunpack.c.l.s4 1983009808
      %v321 = vunpack.c.0.s8 %v320
      %v322 = vlaneseq
      %v323 = vshrl.u32 %v322, 7
      %v324 = vsub.s32 %v321, %v323
      %v325 = vrot.slane %v220, %v324
      %v327 = vunpack.c.l.s4 1983009808
      %v328 = vunpack.c.0.s8 %v327
      %v329 = vlaneseq
      %v330 = vshrl.u32 %v329, 7
      %v331 = vsub.s32 %v328, %v330
      %v332 = vrot.slane %v318, %v331
      %v333 = vcombine.high %v325, %v325
      %v334 = vcombine.high %v332, %v332
      %v335 = vcombine.high %v221, %v221
      %v337 = vunpack.c.l.s4 1983009808
      %v338 = vunpack.c.0.s8 %v337
      %v339 = vlaneseq
      %v340 = vshrl.u32 %v339, 7
      %v341 = vsub.s32 %v338, %v340
      %v342 = vrot.slane %v221, %v341
      %v344 = vunpack.c.l.s4 1983009808
      %v345 = vunpack.c.0.s8 %v344
      %v346 = vlaneseq
      %v347 = vshrl.u32 %v346, 7
      %v348 = vsub.s32 %v345, %v347
      %v349 = vrot.slane %v335, %v348
      %v350 = vcombine.high %v342, %v342
      %v351 = vcombine.high %v349, %v349
      %v352 = vcombine.high %v222, %v222
      %v354 = vunpack.c.l.s4 1983009808
      %v355 = vunpack.c.0.s8 %v354
      %v356 = vlaneseq
      %v357 = vshrl.u32 %v356, 7
      %v358 = vsub.s32 %v355, %v357
      %v359 = vrot.slane %v222, %v358
      %v361 = vunpack.c.l.s4 1983009808
      %v362 = vunpack.c.0.s8 %v361
      %v363 = vlaneseq
      %v364 = vshrl.u32 %v363, 7
      %v365 = vsub.s32 %v362, %v364
      %v366 = vrot.slane %v352, %v365
      %v367 = vcombine.high %v366, %v366
      %v368 = vcombine.high %v223, %v223
      %v370 = vunpack.c.l.s4 1983009808
      %v371 = vunpack.c.0.s8 %v370
      %v372 = vlaneseq
      %v373 = vshrl.u32 %v372, 7
      %v374 = vsub.s32 %v371, %v373
      %v375 = vrot.slane %v223, %v374
      %v377 = vunpack.c.l.s4 1983009808
      %v378 = vunpack.c.0.s8 %v377
      %v379 = vlaneseq
      %v380 = vshrl.u32 %v379, 7
      %v381 = vsub.s32 %v378, %v380
      %v382 = vrot.slane %v368, %v381
      %v383 = vcombine.high %v375, %v375
      %v384 = vcombine.high %v382, %v382
      %v385 = vcombine.high %v224, %v224
      %v387 = vunpack.c.l.s4 1983009808
      %v388 = vunpack.c.0.s8 %v387
      %v389 = vlaneseq
      %v390 = vshrl.u32 %v389, 7
      %v391 = vsub.s32 %v388, %v390
      %v392 = vrot.slane %v224, %v391
      %v394 = vunpack.c.l.s4 1983009808
      %v395 = vunpack.c.0.s8 %v394
      %v396 = vlaneseq
      %v397 = vshrl.u32 %v396, 7
      %v398 = vsub.s32 %v395, %v397
      %v399 = vrot.slane %v385, %v398
      %v400 = vcombine.high %v392, %v392
      %v401 = vcombine.low %v242, %v250
      %v402 = vcombine.low %v249, %v251
      %v404 = vunpack.c.l.s4 1983009808
      %v405 = vunpack.c.0.s8 %v404
      %v406 = vlaneseq
      %v407 = vshrl.u32 %v406, 7
      %v408 = vsub.s32 %v405, %v407
      %v409 = vrot.slane %v401, %v408
      %v411 = vunpack.c.l.s4 1983009808
      %v412 = vunpack.c.0.s8 %v411
      %v413 = vlaneseq
      %v414 = vshrl.u32 %v413, 7
      %v415 = vsub.s32 %v412, %v414
      %v416 = vrot.slane %v402, %v415
      %v417 = vcombine.low %v409, %v416
      %v418 = vcombine.low %v267, %v266
      %v419 = vcombine.low %v268, %v276
      %v421 = vunpack.c.l.s4 1983009808
      %v422 = vunpack.c.0.s8 %v421
      %v423 = vlaneseq
      %v424 = vshrl.u32 %v423, 7
      %v425 = vsub.s32 %v422, %v424
      %v426 = vrot.slane %v418, %v425
      %v428 = vunpack.c.l.s4 1983009808
      %v429 = vunpack.c.0.s8 %v428
      %v430 = vlaneseq
      %v431 = vshrl.u32 %v430, 7
      %v432 = vsub.s32 %v429, %v431
      %v433 = vrot.slane %v419, %v432
      %v434 = vcombine.low %v426, %v433
      %v435 = vcombine.low %v283, %v284
      %v436 = vcombine.low %v292, %v300
      %v438 = vunpack.c.l.s4 1983009808
      %v439 = vunpack.c.0.s8 %v438
      %v440 = vlaneseq
      %v441 = vshrl.u32 %v440, 7
      %v442 = vsub.s32 %v439, %v441
      %v443 = vrot.slane %v435, %v442
      %v445 = vunpack.c.l.s4 1983009808
      %v446 = vunpack.c.0.s8 %v445
      %v447 = vlaneseq
      %v448 = vshrl.u32 %v447, 7
      %v449 = vsub.s32 %v446, %v448
      %v450 = vrot.slane %v436, %v449
      %v451 = vcombine.low %v443, %v450
      %v452 = vcombine.low %v301, %v309
      %v453 = vcombine.low %v317, %v316
      %v455 = vunpack.c.l.s4 1983009808
      %v456 = vunpack.c.0.s8 %v455
      %v457 = vlaneseq
      %v458 = vshrl.u32 %v457, 7
      %v459 = vsub.s32 %v456, %v458
      %v460 = vrot.slane %v452, %v459
      %v462 = vunpack.c.l.s4 1983009808
      %v463 = vunpack.c.0.s8 %v462
      %v464 = vlaneseq
      %v465 = vshrl.u32 %v464, 7
      %v466 = vsub.s32 %v463, %v465
      %v467 = vrot.slane %v453, %v466
      %v468 = vcombine.low %v460, %v467
      %v469 = vcombine.low %v325, %v333
      %v470 = vcombine.low %v332, %v334
      %v472 = vunpack.c.l.s4 1983009808
      %v473 = vunpack.c.0.s8 %v472
      %v474 = vlaneseq
      %v475 = vshrl.u32 %v474, 7
      %v476 = vsub.s32 %v473, %v475
      %v477 = vrot.slane %v469, %v476
      %v479 = vunpack.c.l.s4 1983009808
      %v480 = vunpack.c.0.s8 %v479
      %v481 = vlaneseq
      %v482 = vshrl.u32 %v481, 7
      %v483 = vsub.s32 %v480, %v482
      %v484 = vrot.slane %v470, %v483
      %v485 = vcombine.low %v477, %v484
      %v486 = vcombine.low %v350, %v349
      %v487 = vcombine.low %v351, %v359
      %v489 = vunpack.c.l.s4 1983009808
      %v490 = vunpack.c.0.s8 %v489
      %v491 = vlaneseq
      %v492 = vshrl.u32 %v491, 7
      %v493 = vsub.s32 %v490, %v492
      %v494 = vrot.slane %v486, %v493
      %v496 = vunpack.c.l.s4 1983009808
      %v497 = vunpack.c.0.s8 %v496
      %v498 = vlaneseq
      %v499 = vshrl.u32 %v498, 7
      %v500 = vsub.s32 %v497, %v499
      %v501 = vrot.slane %v487, %v500
      %v502 = vcombine.low %v494, %v501
      %v503 = vcombine.low %v366, %v367
      %v504 = vcombine.low %v375, %v383
      %v506 = vunpack.c.l.s4 1983009808
      %v507 = vunpack.c.0.s8 %v506
      %v508 = vlaneseq
      %v509 = vshrl.u32 %v508, 7
      %v510 = vsub.s32 %v507, %v509
      %v511 = vrot.slane %v503, %v510
      %v513 = vunpack.c.l.s4 1983009808
      %v514 = vunpack.c.0.s8 %v513
      %v515 = vlaneseq
      %v516 = vshrl.u32 %v515, 7
      %v517 = vsub.s32 %v514, %v516
      %v518 = vrot.slane %v504, %v517
      %v519 = vcombine.low %v511, %v518
      %v520 = vcombine.low %v384, %v392
      %v521 = vcombine.low %v400, %v399
      %v523 = vunpack.c.l.s4 1983009808
      %v524 = vunpack.c.0.s8 %v523
      %v525 = vlaneseq
      %v526 = vshrl.u32 %v525, 7
      %v527 = vsub.s32 %v524, %v526
      %v528 = vrot.slane %v520, %v527
      %v530 = vunpack.c.l.s4 1983009808
      %v531 = vunpack.c.0.s8 %v530
      %v532 = vlaneseq
      %v533 = vshrl.u32 %v532, 7
      %v534 = vsub.s32 %v531, %v533
      %v535 = vrot.slane %v521, %v534
      %v536 = vcombine.low %v528, %v535
      %vm545 = vcmask 523264
      %546 = vst.msk [vmem:[%s170] sm:$0xff] %vm545, %v417
      %547 = vst.msk [vmem:[%s170 + $0x10] sm:$0xff] %vm545, %v434
      %548 = vst.msk [vmem:[%s170 + $0x20] sm:$0xff] %vm545, %v451
      %549 = vst.msk [vmem:[%s170 + $0x30] sm:$0xff] %vm545, %v468
      %550 = vst.msk [vmem:[%s170 + $0x40] sm:$0xff] %vm545, %v485
      %551 = vst.msk [vmem:[%s170 + $0x50] sm:$0xff] %vm545, %v502
      %552 = vst.msk [vmem:[%s170 + $0x60] sm:$0xff] %vm545, %v519
      %553 = vst.msk [vmem:[%s170 + $0x70] sm:$0xff] %vm545, %v536
      %554 = vrot.lane.b32.xlu0 %v417, 64
      %v555 = vpop.permute.xlu0 %554
      %556 = vrot.lane.b32.xlu0 %v434, 64
      %v557 = vpop.permute.xlu0 %556
      %558 = vrot.lane.b32.xlu0 %v451, 64
      %v559 = vpop.permute.xlu0 %558
      %560 = vrot.lane.b32.xlu0 %v468, 64
      %v561 = vpop.permute.xlu0 %560
      %562 = vrot.lane.b32.xlu0 %v485, 64
      %v563 = vpop.permute.xlu0 %562
      %564 = vrot.lane.b32.xlu0 %v502, 64
      %v565 = vpop.permute.xlu0 %564
      %566 = vrot.lane.b32.xlu0 %v519, 64
      %v567 = vpop.permute.xlu0 %566
      %568 = vrot.lane.b32.xlu0 %v536, 64
      %v569 = vpop.permute.xlu0 %568
      %s578 = scalar_lea.vmem %s170, 8
      %579 = vst.msk [vmem:[%s578] sm:$0xff] %vm545, %v555
      %580 = vst.msk [vmem:[%s578 + $0x10] sm:$0xff] %vm545, %v557
      %581 = vst.msk [vmem:[%s578 + $0x20] sm:$0xff] %vm545, %v559
      %582 = vst.msk [vmem:[%s578 + $0x30] sm:$0xff] %vm545, %v561
      %583 = vst.msk [vmem:[%s578 + $0x40] sm:$0xff] %vm545, %v563
      %584 = vst.msk [vmem:[%s578 + $0x50] sm:$0xff] %vm545, %v565
      %585 = vst.msk [vmem:[%s578 + $0x60] sm:$0xff] %vm545, %v567
      %586 = vst.msk [vmem:[%s578 + $0x70] sm:$0xff] %vm545, %v569
      %p587 = scmp.lt.s32.totalorder %s14, 1
      %s588 = scalar_select %p587, %s14, 1
      %s589 = smul.addr %s588, 16
      %s590 = smul.addr %s589, 8
      %s591 = scalar_lea.vmem %s3, %s590
      // Predicated region
      $region33: #{unet_up_forward.5} parent=31 // pred_check
        %p592 = pneg %p100
      $region34: #{unet_up_forward.5} parent=31 // pred_check_branch
        %594 = sbr.rel (%p592) target = $region36
      $region35: #{unet_up_forward.5} parent=31 // pred_region
        _
      $region36: #{unet_up_forward.5} parent=31 // pred_fallthru
        _
    $region32: #{unet_up_forward.5} parent=5 // pred_fallthru
      _
    %p595 = scmp.le.s32.totalorder 2, %s9
    // Predicated region
    $region37: #{unet_up_forward.5} parent=5 // pred_check
      %p596 = pneg %p595
    $region38: #{unet_up_forward.5} parent=5 // pred_check_branch
      %598 = sbr.rel (%p596) target = $region40
    $region39: #{unet_up_forward.5} parent=5 // pred_region
      %s599 = ssub.s32 %s9, 2
      // Predicated region
      $region41: #{unet_up_forward.5} parent=39 // pred_check
        %p600 = pneg %p106
      $region42: #{unet_up_forward.5} parent=39 // pred_check_branch
        %602 = sbr.rel (%p600) target = $region44
      $region43: #{unet_up_forward.5} parent=39 // pred_region
        %p603 = scmp.lt.s32.totalorder %s15, 1
        %s604 = scalar_select %p603, %s15, 1
        %s605 = smul.addr %s604, 16
        %s606 = smul.addr %s605, 8
        %s607 = scalar_lea.vmem %s3, %s606
      $region44: #{unet_up_forward.5} parent=39 // pred_fallthru
        _
    $region40: #{unet_up_forward.5} parent=5 // pred_fallthru
      _
  $region6: #{unet_up_forward.5} parent=0 // loop_footer
    %s13 = sadd.s32 1, %s9
  $region7: #{unet_up_forward.5} parent=0 // loop_footer_branch
    %8 = sbr.rel target = $region3
  $region8: #{unet_up_forward.5} parent=0 // loop_exit
    _

// kernel: unet_up_forward.3
$region0: #{unet_up_forward.3}
  #allocation0 [shape = 'u32[]', space=smem, size = 0x4, offset = 0x4, fixed_abs, tag = 'smem constant byte address 0x4 - core index']
  #allocation1 [shape = 'u32[144,128]{1,0:T(1,128)}', space=vmem, size = 0x12000, scoped, tag = 'internal scratch']
  %s0 = inlined_call_operand.vmem [shape: bf16[2,108,128], index: 0, kind: input, shape index: {}]
  %s1 = inlined_call_operand.vmem [shape: bf16[9,128,128], index: 1, kind: input, shape index: {}]
  %s2 = inlined_call_operand.vmem [shape: f32[1,128], index: 2, kind: input, shape index: {}]
  %s3 = inlined_call_operand.vmem [shape: f32[80,1], index: 3, kind: input, shape index: {}]
  %s4 = inlined_call_operand.vmem [shape: bf16[2,80,128], index: 4, kind: output, shape index: {0}]
  %s5 = inlined_call_operand.vmem [shape: f32[2,1,128], index: 5, kind: output, shape index: {1}]
  %s6 = inlined_call_operand.vmem [shape: f32[2,1,128], index: 6, kind: output, shape index: {2}]
  %7 = xla_tuple %s4, %s5, %s6
  %s8 = sld [smem:[#allocation0]]
  $region65: #{unet_up_forward.3} parent=0
    _
  %s10 = ssub.s32 1, %s8
  %s11 = scalar_select 0, %s10, %s8
  loop: start=0, step=1, limit=4
  $region2: #{unet_up_forward.3} parent=0 // loop_pre_header
    _
  $region3: #{unet_up_forward.3} parent=0 // loop_header
    %s13 = sphi 0, %s17
    %p14 = scmp.ge.s32.totalorder %s13, 4
    %s23 = sphi 0, %s25
    %s26 = sphi 0, %s23
    %s27 = sphi 0, %s26
    %s43 = sphi 0, %s27
    %s47 = sphi 0, %s47
    %s49 = sphi 0, %s47
    %s50 = sphi 0, %s49
    %s64 = sphi 0, %s50
    %s68 = sphi 0, %s68
    %s70 = sphi 0, %s68
    %s71 = sphi 0, %s70
    %s85 = sphi 0, %s71
    %s89 = sphi 0, %s89
    %s91 = sphi 0, %s89
    %s92 = sphi 0, %s91
    %s106 = sphi 0, %s92
    %s112 = sphi 0, %s114
    %s115 = sphi 0, %s112
    %s116 = sphi 0, %s115
    %s132 = sphi 0, %s116
    %s138 = sphi 0, %s140
    %s141 = sphi 0, %s138
    %s142 = sphi 0, %s141
    %s158 = sphi 0, %s142
    %s164 = sphi 0, %s166
    %s167 = sphi 0, %s164
    %s168 = sphi 0, %s167
    %s184 = sphi 0, %s168
  $region4: #{unet_up_forward.3} parent=0 // loop_header_branch
    %16 = sbr.rel (%p14) target = $region8
  $region5: #{unet_up_forward.3} parent=0 // loop_body
    %s18 = ssub.s32 %s13, 1
    %s19 = ssub.s32 %s13, 2
    %s20 = sadd.s32 %s13, 1
    %s21 = ssub.s32 %s13, %s20
    %p22 = scmp.eq.s32.totalorder %s21, 0
    %s24 = sadd.s32 %s23, 1
    %s25 = scalar_select %p22, %s23, %s24
    %p28 = pneg %p22
    %p29 = scmp.eq.s32.totalorder %s13, 1
    %p30 = por %p28, %p29
    %p31 = scmp.ne.s32.totalorder %s23, %s26
    %p32 = scmp.eq.s32.totalorder %s13, 0
    %p33 = por %p31, %p32
    %p34 = scmp.ne.s32.totalorder %s23, %s26
    %p35 = scmp.eq.s32.totalorder %s18, 1
    %p36 = por %p34, %p35
    %p37 = scmp.ne.s32.totalorder %s26, %s27
    %p38 = scmp.eq.s32.totalorder %s18, 0
    %p39 = por %p37, %p38
    %p40 = scmp.ne.s32.totalorder %s26, %s27
    %p41 = scmp.eq.s32.totalorder %s19, 1
    %p42 = por %p40, %p41
    %p44 = scmp.ne.s32.totalorder %s27, %s43
    %p45 = scmp.eq.s32.totalorder %s19, 0
    %p46 = por %p44, %p45
    %s48 = sadd.s32 %s47, 1
    %p51 = scmp.eq.s32.totalorder %s13, 1
    %p52 = scmp.ne.s32.totalorder %s47, %s49
    %p53 = scmp.eq.s32.totalorder %s13, 0
    %p54 = por %p52, %p53
    %p55 = scmp.ne.s32.totalorder %s47, %s49
    %p56 = scmp.eq.s32.totalorder %s18, 1
    %p57 = por %p55, %p56
    %p58 = scmp.ne.s32.totalorder %s49, %s50
    %p59 = scmp.eq.s32.totalorder %s18, 0
    %p60 = por %p58, %p59
    %p61 = scmp.ne.s32.totalorder %s49, %s50
    %p62 = scmp.eq.s32.totalorder %s19, 1
    %p63 = por %p61, %p62
    %p65 = scmp.ne.s32.totalorder %s50, %s64
    %p66 = scmp.eq.s32.totalorder %s19, 0
    %p67 = por %p65, %p66
    %s69 = sadd.s32 %s68, 1
    %p72 = scmp.eq.s32.totalorder %s13, 1
    %p73 = scmp.ne.s32.totalorder %s68, %s70
    %p74 = scmp.eq.s32.totalorder %s13, 0
    %p75 = por %p73, %p74
    %p76 = scmp.ne.s32.totalorder %s68, %s70
    %p77 = scmp.eq.s32.totalorder %s18, 1
    %p78 = por %p76, %p77
    %p79 = scmp.ne.s32.totalorder %s70, %s71
    %p80 = scmp.eq.s32.totalorder %s18, 0
    %p81 = por %p79, %p80
    %p82 = scmp.ne.s32.totalorder %s70, %s71
    %p83 = scmp.eq.s32.totalorder %s19, 1
    %p84 = por %p82, %p83
    %p86 = scmp.ne.s32.totalorder %s71, %s85
    %p87 = scmp.eq.s32.totalorder %s19, 0
    %p88 = por %p86, %p87
    %s90 = sadd.s32 %s89, 1
    %p93 = scmp.eq.s32.totalorder %s13, 1
    %p94 = scmp.ne.s32.totalorder %s89, %s91
    %p95 = scmp.eq.s32.totalorder %s13, 0
    %p96 = por %p94, %p95
    %p97 = scmp.ne.s32.totalorder %s89, %s91
    %p98 = scmp.eq.s32.totalorder %s18, 1
    %p99 = por %p97, %p98
    %p100 = scmp.ne.s32.totalorder %s91, %s92
    %p101 = scmp.eq.s32.totalorder %s18, 0
    %p102 = por %p100, %p101
    %p103 = scmp.ne.s32.totalorder %s91, %s92
    %p104 = scmp.eq.s32.totalorder %s19, 1
    %p105 = por %p103, %p104
    %p107 = scmp.ne.s32.totalorder %s92, %s106
    %p108 = scmp.eq.s32.totalorder %s19, 0
    %p109 = por %p107, %p108
    %s110 = ssub.s32 %s13, %s20
    %p111 = scmp.eq.s32.totalorder %s110, 0
    %s113 = sadd.s32 %s112, 1
    %s114 = scalar_select %p111, %s112, %s113
    %p117 = pneg %p111
    %p118 = scmp.eq.s32.totalorder %s13, 1
    %p119 = por %p117, %p118
    %p120 = scmp.ne.s32.totalorder %s112, %s115
    %p121 = scmp.eq.s32.totalorder %s13, 0
    %p122 = por %p120, %p121
    %p123 = scmp.ne.s32.totalorder %s112, %s115
    %p124 = scmp.eq.s32.totalorder %s18, 1
    %p125 = por %p123, %p124
    %p126 = scmp.ne.s32.totalorder %s115, %s116
    %p127 = scmp.eq.s32.totalorder %s18, 0
    %p128 = por %p126, %p127
    %p129 = scmp.ne.s32.totalorder %s115, %s116
    %p130 = scmp.eq.s32.totalorder %s19, 1
    %p131 = por %p129, %p130
    %p133 = scmp.ne.s32.totalorder %s116, %s132
    %p134 = scmp.eq.s32.totalorder %s19, 0
    %p135 = por %p133, %p134
    %s136 = ssub.s32 %s13, %s20
    %p137 = scmp.eq.s32.totalorder %s136, 0
    %s139 = sadd.s32 %s138, 1
    %s140 = scalar_select %p137, %s138, %s139
    %p143 = pneg %p137
    %p144 = scmp.eq.s32.totalorder %s13, 1
    %p145 = por %p143, %p144
    %p146 = scmp.ne.s32.totalorder %s138, %s141
    %p147 = scmp.eq.s32.totalorder %s13, 0
    %p148 = por %p146, %p147
    %p149 = scmp.ne.s32.totalorder %s138, %s141
    %p150 = scmp.eq.s32.totalorder %s18, 1
    %p151 = por %p149, %p150
    %p152 = scmp.ne.s32.totalorder %s141, %s142
    %p153 = scmp.eq.s32.totalorder %s18, 0
    %p154 = por %p152, %p153
    %p155 = scmp.ne.s32.totalorder %s141, %s142
    %p156 = scmp.eq.s32.totalorder %s19, 1
    %p157 = por %p155, %p156
    %p159 = scmp.ne.s32.totalorder %s142, %s158
    %p160 = scmp.eq.s32.totalorder %s19, 0
    %p161 = por %p159, %p160
    %s162 = ssub.s32 %s13, %s20
    %p163 = scmp.eq.s32.totalorder %s162, 0
    %s165 = sadd.s32 %s164, 1
    %s166 = scalar_select %p163, %s164, %s165
    %p169 = pneg %p163
    %p170 = scmp.eq.s32.totalorder %s13, 1
    %p171 = por %p169, %p170
    %p172 = scmp.ne.s32.totalorder %s164, %s167
    %p173 = scmp.eq.s32.totalorder %s13, 0
    %p174 = por %p172, %p173
    %p175 = scmp.ne.s32.totalorder %s164, %s167
    %p176 = scmp.eq.s32.totalorder %s18, 1
    %p177 = por %p175, %p176
    %p178 = scmp.ne.s32.totalorder %s167, %s168
    %p179 = scmp.eq.s32.totalorder %s18, 0
    %p180 = por %p178, %p179
    %p181 = scmp.ne.s32.totalorder %s167, %s168
    %p182 = scmp.eq.s32.totalorder %s19, 1
    %p183 = por %p181, %p182
    %p185 = scmp.ne.s32.totalorder %s168, %s184
    %p186 = scmp.eq.s32.totalorder %s19, 0
    %p187 = por %p185, %p186
    %p188 = scmp.le.s32.totalorder 1, %s13
    %p189 = scmp.lt.s32.totalorder %s13, 3
    %p190 = pnand %p188, %p189
    %p191 = pneg %p190
    // Predicated region
    $region9: #{unet_up_forward.3} parent=5 // pred_check
      _
    $region10: #{unet_up_forward.3} parent=5 // pred_check_branch
      %193 = sbr.rel (%p190) target = $region12
    $region11: #{unet_up_forward.3} parent=5 // pred_region
      %s194 = ssub.s32 %s13, 1
      // Predicated region
      $region13: #{unet_up_forward.3} parent=11 // pred_check
        %p195 = pneg %p60
      $region14: #{unet_up_forward.3} parent=11 // pred_check_branch
        %197 = sbr.rel (%p195) target = $region16
      $region15: #{unet_up_forward.3} parent=11 // pred_region
        _
      $region16: #{unet_up_forward.3} parent=11 // pred_fallthru
        _
      // Predicated region
      $region17: #{unet_up_forward.3} parent=11 // pred_check
        %p198 = pneg %p81
      $region18: #{unet_up_forward.3} parent=11 // pred_check_branch
        %200 = sbr.rel (%p198) target = $region20
      $region19: #{unet_up_forward.3} parent=11 // pred_region
        _
      $region20: #{unet_up_forward.3} parent=11 // pred_fallthru
        _
      // Predicated region
      $region21: #{unet_up_forward.3} parent=11 // pred_check
        %p201 = pneg %p102
      $region22: #{unet_up_forward.3} parent=11 // pred_check_branch
        %203 = sbr.rel (%p201) target = $region24
      $region23: #{unet_up_forward.3} parent=11 // pred_region
        _
      $region24: #{unet_up_forward.3} parent=11 // pred_fallthru
        _
    $region12: #{unet_up_forward.3} parent=5 // pred_fallthru
      _
    %p204 = scmp.lt.s32.totalorder %s13, 2
    // Predicated region
    $region25: #{unet_up_forward.3} parent=5 // pred_check
      %p205 = pneg %p204
    $region26: #{unet_up_forward.3} parent=5 // pred_check_branch
      %207 = sbr.rel (%p205) target = $region28
    $region27: #{unet_up_forward.3} parent=5 // pred_region
      // Predicated region
      $region29: #{unet_up_forward.3} parent=27 // pred_check
        %p208 = pneg %p33
      $region30: #{unet_up_forward.3} parent=27 // pred_check_branch
        %210 = sbr.rel (%p208) target = $region32
      $region31: #{unet_up_forward.3} parent=27 // pred_region
        %p211 = scmp.lt.s32.totalorder %s13, 1
        %s212 = scalar_select %p211, %s13, 1
        %s213 = smul.addr %s212, 14
        %s214 = smul.addr %s213, 4
        %s215 = scalar_lea.vmem %s0, %s214
      $region32: #{unet_up_forward.3} parent=27 // pred_fallthru
        _
    $region28: #{unet_up_forward.3} parent=5 // pred_fallthru
      _
    %p216 = scmp.le.s32.totalorder 1, %s13
    %p217 = scmp.lt.s32.totalorder %s13, 3
    %p218 = pnand %p216, %p217
    %p219 = pneg %p218
    // Predicated region
    $region33: #{unet_up_forward.3} parent=5 // pred_check
      _
    $region34: #{unet_up_forward.3} parent=5 // pred_check_branch
      %221 = sbr.rel (%p218) target = $region36
    $region35: #{unet_up_forward.3} parent=5 // pred_region
      %s222 = ssub.s32 %s13, 1
      %p223 = scmp.lt.s32.totalorder %s18, 1
      %s224 = scalar_select %p223, %s18, 1
      %s225 = smul.addr %s224, 14
      %s226 = smul.addr %s225, 4
      %s227 = scalar_lea.vmem %s0, %s226
      %p228 = pneg %p39
      %p229 = pneg %p36
      %p230 = pneg %p60
      %p231 = pneg %p57
      %p232 = pneg %p81
      %p233 = pneg %p78
      %p234 = pneg %p102
      %p235 = pneg %p99
      %p236 = pneg %p128
      %p237 = pneg %p125
      %p238 = scmp.lt.s32.totalorder %s18, 1
      %s239 = scalar_select %p238, %s18, 1
      %s240 = smul.addr %s239, 10
      %s241 = smul.addr %s240, 4
      %s242 = scalar_lea.vmem %s4, %s241
      %p243 = pneg %p154
      %p244 = pneg %p151
      %p245 = scmp.lt.s32.totalorder %s18, 1
      %s246 = scalar_select %p245, %s18, 1
      %s247 = scalar_lea.vmem %s5, %s246
      %p248 = pneg %p180
      %p249 = pneg %p177
      %p250 = scmp.lt.s32.totalorder %s18, 1
      %s251 = scalar_select %p250, %s18, 1
      %s252 = scalar_lea.vmem %s6, %s251
      %p253 = scmp.lt.s32.totalorder %s18, 1
      %s254 = scalar_select %p253, %s18, 1
      %s255 = smul.addr %s254, 14
      %s256 = smul.addr %s255, 4
      %s257 = scalar_lea.vmem %s0, %s256
      %p258 = scmp.lt.s32.totalorder %s18, 1
      %s259 = scalar_select %p258, %s18, 1
      %s260 = smul.addr %s259, 10
      %s261 = smul.addr %s260, 4
      %s262 = scalar_lea.vmem %s4, %s261
      %p263 = scmp.lt.s32.totalorder %s18, 1
      %s264 = scalar_select %p263, %s18, 1
      %s265 = scalar_lea.vmem %s5, %s264
      %p266 = scmp.lt.s32.totalorder %s18, 1
      %s267 = scalar_select %p266, %s18, 1
      %s268 = scalar_lea.vmem %s6, %s267
      %v270 = vld [vmem:[%s257] sm:$0xf]
      %v271 = vld [vmem:[%s257 + $0x4] sm:$0xf]
      %v272 = vld [vmem:[%s257 + $0x8] sm:$0xf]
      %v273 = vld [vmem:[%s257 + $0xc] sm:$0xf]
      %v274 = vld [vmem:[%s257 + $0x10] sm:$0xf]
      %v275 = vld [vmem:[%s257 + $0x14] sm:$0xf]
      %v276 = vld [vmem:[%s257 + $0x18] sm:$0xf]
      %v277 = vld [vmem:[%s257 + $0x1c] sm:$0xf]
      %v278 = vld [vmem:[%s257 + $0x20] sm:$0xf]
      %v279 = vld [vmem:[%s257 + $0x24] sm:$0xf]
      %v280 = vld [vmem:[%s1] sm:$0xf]
      %v281 = vld [vmem:[%s1 + $0x4] sm:$0xf]
      %v282 = vld [vmem:[%s1 + $0x8] sm:$0xf]
      %v283 = vld [vmem:[%s1 + $0xc] sm:$0xf]
      %v284 = vld [vmem:[%s1 + $0x10] sm:$0xf]
      %v285 = vld [vmem:[%s1 + $0x14] sm:$0xf]
      %v286 = vld [vmem:[%s1 + $0x18] sm:$0xf]
      %v287 = vld [vmem:[%s1 + $0x1c] sm:$0xf]
      %v288 = vld [vmem:[%s1 + $0x20] sm:$0xf]
      %v289 = vld [vmem:[%s1 + $0x24] sm:$0xf]
      %v290 = vld [vmem:[%s1 + $0x28] sm:$0xf]
      %v291 = vld [vmem:[%s1 + $0x2c] sm:$0xf]
      %v292 = vld [vmem:[%s1 + $0x30] sm:$0xf]
      %v293 = vld [vmem:[%s1 + $0x34] sm:$0xf]
      %v294 = vld [vmem:[%s1 + $0x38] sm:$0xf]
      %v295 = vld [vmem:[%s1 + $0x3c] sm:$0xf]
      %v296 = vld [vmem:[%s257 + $0x28] sm:$0x1]
      %s297 = scalar_lea.vmem %s1, 64
      %v298 = vld [vmem:[%s297] sm:$0xf]
      %v299 = vld [vmem:[%s297 + $0x4] sm:$0xf]
      %v300 = vld [vmem:[%s297 + $0x8] sm:$0xf]
      %v301 = vld [vmem:[%s297 + $0xc] sm:$0xf]
      %v302 = vld [vmem:[%s297 + $0x10] sm:$0xf]
      %v303 = vld [vmem:[%s297 + $0x14] sm:$0xf]
      %v304 = vld [vmem:[%s297 + $0x18] sm:$0xf]
      %v305 = vld [vmem:[%s297 + $0x1c] sm:$0xf]
      %v306 = vld [vmem:[%s297 + $0x20] sm:$0xf]
      %v307 = vld [vmem:[%s297 + $0x24] sm:$0xf]
      %v308 = vld [vmem:[%s297 + $0x28] sm:$0xf]
      %v309 = vld [vmem:[%s297 + $0x2c] sm:$0xf]
      %v310 = vld [vmem:[%s297 + $0x30] sm:$0xf]
      %v311 = vld [vmem:[%s297 + $0x34] sm:$0xf]
      %v312 = vld [vmem:[%s297 + $0x38] sm:$0xf]
      %v313 = vld [vmem:[%s297 + $0x3c] sm:$0xf]
      %v325 = vunpack.c.l.b16 %v270
      %v326 = vunpack.c.l.b16 %v271
      %v327 = vunpack.c.l.b16 %v272
      %v328 = vunpack.c.l.b16 %v273
      %v329 = vunpack.c.l.b16 %v274
      %v330 = vunpack.c.l.b16 %v275
      %v331 = vunpack.c.l.b16 %v276
      %v332 = vunpack.c.l.b16 %v277
      %v333 = vunpack.c.l.b16 %v278
      %v334 = vunpack.c.l.b16 %v279
      %v335 = vunpack.c.l.b16 %v296
      %v336 = vpack.c.b16 %v326, %v325
      %v337 = vpack.c.b16 %v328, %v327
      %v338 = vpack.c.b16 %v330, %v329
      %v339 = vpack.c.b16 %v332, %v331
      %v340 = vpack.c.b16 %v334, %v333
      %v341 = vpack.c.b16 %v335, %v335
      %vm342 = vsmask.f32 7424
      %v344 = vshrl.u32 %v336, 16
      %v346 = vshll.u32 %v336, 16
      %v348 = vrot.slane %v346, 1
      %v349 = vor.u32 %v344, %v348
      %v351 = vshll.u32 %v337, 16
      %v353 = vrot.slane %v351, 1
      %v354 = vsel %vm342, %v349, %v353
      %v355 = vshrl.u32 %v337, 16
      %v357 = vor.u32 %v355, %v353
      %v359 = vshll.u32 %v338, 16
      %v361 = vrot.slane %v359, 1
      %v362 = vsel %vm342, %v357, %v361
      %v363 = vshrl.u32 %v338, 16
      %v365 = vor.u32 %v363, %v361
      %v367 = vshll.u32 %v339, 16
      %v369 = vrot.slane %v367, 1
      %v370 = vsel %vm342, %v365, %v369
      %v371 = vshrl.u32 %v339, 16
      %v373 = vor.u32 %v371, %v369
      %v375 = vshll.u32 %v340, 16
      %v377 = vrot.slane %v375, 1
      %v378 = vsel %vm342, %v373, %v377
      %v379 = vshrl.u32 %v340, 16
      %v381 = vor.u32 %v379, %v377
      %v383 = vshll.u32 %v341, 16
      %v385 = vrot.slane %v383, 1
      %v386 = vsel %vm342, %v381, %v385
      %v408 = vunpack.c.l.b16 %v298
      %v409 = vunpack.c.l.b16 %v299
      %v410 = vunpack.c.l.b16 %v300
      %v411 = vunpack.c.l.b16 %v301
      %v412 = vunpack.c.l.b16 %v302
      %v413 = vunpack.c.l.b16 %v303
      %v414 = vunpack.c.l.b16 %v304
      %v415 = vunpack.c.l.b16 %v305
      %v416 = vunpack.c.l.b16 %v306
      %v417 = vunpack.c.l.b16 %v307
      %v418 = vunpack.c.l.b16 %v308
      %v419 = vunpack.c.l.b16 %v309
      %v420 = vunpack.c.l.b16 %v310
      %v421 = vunpack.c.l.b16 %v311
      %v422 = vunpack.c.l.b16 %v312
      %v423 = vunpack.c.l.b16 %v313
      %v424 = vpack.c.b16 %v409, %v408
      %v425 = vpack.c.b16 %v411, %v410
      %v426 = vpack.c.b16 %v413, %v412
      %v427 = vpack.c.b16 %v415, %v414
      %v428 = vpack.c.b16 %v417, %v416
      %v429 = vpack.c.b16 %v419, %v418
      %v430 = vpack.c.b16 %v421, %v420
      %v431 = vpack.c.b16 %v423, %v422
      %440 = vmatprep.subr.bf16.mxu0 0
      %441 = vmatpush1.bf16.msra.mxu0 %v424
      %442 = vmatprep.subr.bf16.mxu0 0
      %443 = vmatpush1.bf16.msra.mxu0 %v425
      %444 = vmatprep.subr.bf16.mxu0 0
      %445 = vmatpush1.bf16.msra.mxu0 %v426
      %446 = vmatprep.subr.bf16.mxu0 0
      %447 = vmatpush1.bf16.msra.mxu0 %v427
      %448 = vmatprep.subr.bf16.mxu0 0
      %449 = vmatpush1.bf16.msra.mxu0 %v428
      %450 = vmatprep.subr.bf16.mxu0 0
      %451 = vmatpush1.bf16.msra.mxu0 %v429
      %452 = vmatprep.subr.bf16.mxu0 0
      %453 = vmatpush1.bf16.msra.mxu0 %v430
      %454 = vmatprep.subr.bf16.mxu0 0
      %455 = vmatpush1.bf16.msra.mxu0 %v431
      %456 = vmatprep.subr.bf16.mxu0 0
      %457 = vmatpush1.bf16.msra.mxu0 0
      %458 = vmatprep.subr.bf16.mxu0 0
      %459 = vmatpush1.bf16.msra.mxu0 0
      %460 = vmatprep.subr.bf16.mxu0 0
      %461 = vmatpush1.bf16.msra.mxu0 0
      %462 = vmatprep.subr.bf16.mxu0 0
      %463 = vmatpush1.bf16.msra.mxu0 0
      %464 = vmatprep.subr.bf16.mxu0 0
      %465 = vmatpush1.bf16.msra.mxu0 0
      %466 = vmatprep.subr.bf16.mxu0 0
      %467 = vmatpush1.bf16.msra.mxu0 0
      %468 = vmatprep.subr.bf16.mxu0 0
      %469 = vmatpush1.bf16.msra.mxu0 0
      %470 = vmatprep.subr.bf16.mxu0 0
      %471 = vmatpush1.bf16.msra.mxu0 0
      %472 = vmatprep.mubr.bf16.mxu0 0
      %473 = vmatmul.mubr.bf16.gmra.mrb[0].mxu0 %v354
      %v474 = vpop.f32.mrb[0].mxu0
      %v475 = vadd.f32 0.0, %v474
      %v476 = vpop.f32.mrb[0].mxu0
      %v477 = vpop.f32.mrb[0].mxu0
      %v478 = vadd.f32 0.0, %v477
      %v479 = vpop.f32.mrb[0].mxu0
      %480 = vmatprep.mubr.bf16.mxu0 0
      %481 = vmatmul.mubr.bf16.gmra.mrb[0].mxu0 %v362
      %v482 = vpop.f32.mrb[0].mxu0
      %v483 = vadd.f32 0.0, %v482
      %v484 = vpop.f32.mrb[0].mxu0
      %v485 = vpop.f32.mrb[0].mxu0
      %v486 = vadd.f32 0.0, %v485
      %v487 = vpop.f32.mrb[0].mxu0
      %488 = vmatprep.mubr.bf16.mxu0 0
      %489 = vmatmul.mubr.bf16.gmra.mrb[0].mxu0 %v370
      %v490 = vpop.f32.mrb[0].mxu0
      %v491 = vadd.f32 0.0, %v490
      %v492 = vpop.f32.mrb[0].mxu0
      %v493 = vpop.f32.mrb[0].mxu0
      %v494 = vadd.f32 0.0, %v493
      %v495 = vpop.f32.mrb[0].mxu0
      %496 = vmatprep.mubr.bf16.mxu0 0
      %497 = vmatmul.mubr.bf16.gmra.mrb[0].mxu0 %v378
      %v498 = vpop.f32.mrb[0].mxu0
      %v499 = vadd.f32 0.0, %v498
      %v500 = vpop.f32.mrb[0].mxu0
      %v501 = vpop.f32.mrb[0].mxu0
      %v502 = vadd.f32 0.0, %v501
      %v503 = vpop.f32.mrb[0].mxu0
      %504 = vmatprep.mubr.bf16.mxu0 0
      %505 = vmatmul.mubr.bf16.gmra.mrb[0].mxu0 %v386
      %v506 = vpop.f32.mrb[0].mxu0
      %v507 = vadd.f32 0.0, %v506
      %v508 = vpop.f32.mrb[0].mxu0
      %v509 = vpop.f32.mrb[0].mxu0
      %v510 = vadd.f32 0.0, %v509
      %v511 = vpop.f32.mrb[0].mxu0
      %512 = vdwg.mxu0
      %v534 = vunpack.c.l.b16 %v280
      %v535 = vunpack.c.l.b16 %v281
      %v536 = vunpack.c.l.b16 %v282
      %v537 = vunpack.c.l.b16 %v283
      %v538 = vunpack.c.l.b16 %v284
      %v539 = vunpack.c.l.b16 %v285
      %v540 = vunpack.c.l.b16 %v286
      %v541 = vunpack.c.l.b16 %v287
      %v542 = vunpack.c.l.b16 %v288
      %v543 = vunpack.c.l.b16 %v289
      %v544 = vunpack.c.l.b16 %v290
      %v545 = vunpack.c.l.b16 %v291
      %v546 = vunpack.c.l.b16 %v292
      %v547 = vunpack.c.l.b16 %v293
      %v548 = vunpack.c.l.b16 %v294
      %v549 = vunpack.c.l.b16 %v295
      %v550 = vpack.c.b16 %v535, %v534
      %v551 = vpack.c.b16 %v537, %v536
      %v552 = vpack.c.b16 %v539, %v538
      %v553 = vpack.c.b16 %v541, %v540
      %v554 = vpack.c.b16 %v543, %v542
      %v555 = vpack.c.b16 %v545, %v544
      %v556 = vpack.c.b16 %v547, %v546
      %v557 = vpack.c.b16 %v549, %v548
      %566 = vmatprep.subr.bf16.mxu0 0
      %567 = vmatpush1.bf16.msra.mxu0 %v550
      %568 = vmatprep.subr.bf16.mxu0 0
      %569 = vmatpush1.bf16.msra.mxu0 %v551
      %570 = vmatprep.subr.bf16.mxu0 0
      %571 = vmatpush1.bf16.msra.mxu0 %v552
      %572 = vmatprep.subr.bf16.mxu0 0
      %573 = vmatpush1.bf16.msra.mxu0 %v553
      %574 = vmatprep.subr.bf16.mxu0 0
      %575 = vmatpush1.bf16.msra.mxu0 %v554
      %576 = vmatprep.subr.bf16.mxu0 0
      %577 = vmatpush1.bf16.msra.mxu0 %v555
      %578 = vmatprep.subr.bf16.mxu0 0
      %579 = vmatpush1.bf16.msra.mxu0 %v556
      %580 = vmatprep.subr.bf16.mxu0 0
      %581 = vmatpush1.bf16.msra.mxu0 %v557
      %582 = vmatprep.subr.bf16.mxu0 0
      %583 = vmatpush1.bf16.msra.mxu0 0
      %584 = vmatprep.subr.bf16.mxu0 0
      %585 = vmatpush1.bf16.msra.mxu0 0
      %586 = vmatprep.subr.bf16.mxu0 0
      %587 = vmatpush1.bf16.msra.mxu0 0
      %588 = vmatprep.subr.bf16.mxu0 0
      %589 = vmatpush1.bf16.msra.mxu0 0
      %590 = vmatprep.subr.bf16.mxu0 0
      %591 = vmatpush1.bf16.msra.mxu0 0
      %592 = vmatprep.subr.bf16.mxu0 0
      %593 = vmatpush1.bf16.msra.mxu0 0
      %594 = vmatprep.subr.bf16.mxu0 0
      %595 = vmatpush1.bf16.msra.mxu0 0
      %596 = vmatprep.subr.bf16.mxu0 0
      %597 = vmatpush1.bf16.msra.mxu0 0
      %598 = vmatprep.mubr.bf16.mxu0 0
      %599 = vmatmul.mubr.bf16.gmra.mrb[0].mxu0 %v336
      %v600 = vpop.f32.mrb[0].mxu0
      %v601 = vadd.f32 %v475, %v600
      %v602 = vpop.f32.mrb[0].mxu0
      %v603 = vpop.f32.mrb[0].mxu0
      %v604 = vadd.f32 %v478, %v603
      %v605 = vpop.f32.mrb[0].mxu0
      %606 = vmatprep.mubr.bf16.mxu0 0
      %607 = vmatmul.mubr.bf16.gmra.mrb[0].mxu0 %v337
      %v608 = vpop.f32.mrb[0].mxu0
      %v609 = vadd.f32 %v483, %v608
      %v610 = vpop.f32.mrb[0].mxu0
      %v611 = vpop.f32.mrb[0].mxu0
      %v612 = vadd.f32 %v486, %v611
      %v613 = vpop.f32.mrb[0].mxu0
      %614 = vmatprep.mubr.bf16.mxu0 0
      %615 = vmatmul.mubr.bf16.gmra.mrb[0].mxu0 %v338
      %v616 = vpop.f32.mrb[0].mxu0
      %v617 = vadd.f32 %v491, %v616
      %v618 = vpop.f32.mrb[0].mxu0
      %v619 = vpop.f32.mrb[0].mxu0
      %v620 = vadd.f32 %v494, %v619
      %v621 = vpop.f32.mrb[0].mxu0
      %622 = vmatprep.mubr.bf16.mxu0 0
      %623 = vmatmul.mubr.bf16.gmra.mrb[0].mxu0 %v339
      %v624 = vpop.f32.mrb[0].mxu0
      %v625 = vadd.f32 %v499, %v624
      %v626 = vpop.f32.mrb[0].mxu0
      %v627 = vpop.f32.mrb[0].mxu0
      %v628 = vadd.f32 %v502, %v627
      %v629 = vpop.f32.mrb[0].mxu0
      %630 = vmatprep.mubr.bf16.mxu0 0
      %631 = vmatmul.mubr.bf16.gmra.mrb[0].mxu0 %v340
      %v632 = vpop.f32.mrb[0].mxu0
      %v633 = vadd.f32 %v507, %v632
      %v634 = vpop.f32.mrb[0].mxu0
      %v635 = vpop.f32.mrb[0].mxu0
      %v636 = vadd.f32 %v510, %v635
      %v637 = vpop.f32.mrb[0].mxu0
      %638 = vdwg.mxu0
      %v639 = vld [vmem:[%s257] sm:$0xe]
      %s640 = scalar_lea.vmem %s1, 128
      %v641 = vld [vmem:[%s640] sm:$0xf]
      %v642 = vld [vmem:[%s640 + $0x4] sm:$0xf]
      %v643 = vld [vmem:[%s640 + $0x8] sm:$0xf]
      %v644 = vld [vmem:[%s640 + $0xc] sm:$0xf]
      %v645 = vld [vmem:[%s640 + $0x10] sm:$0xf]
      %v646 = vld [vmem:[%s640 + $0x14] sm:$0xf]
      %v647 = vld [vmem:[%s640 + $0x18] sm:$0xf]
      %v648 = vld [vmem:[%s640 + $0x1c] sm:$0xf]
      %v649 = vld [vmem:[%s640 + $0x20] sm:$0xf]
      %v650 = vld [vmem:[%s640 + $0x24] sm:$0xf]
      %v651 = vld [vmem:[%s640 + $0x28] sm:$0xf]
      %v652 = vld [vmem:[%s640 + $0x2c] sm:$0xf]
      %v653 = vld [vmem:[%s640 + $0x30] sm:$0xf]
      %v654 = vld [vmem:[%s640 + $0x34] sm:$0xf]
      %v655 = vld [vmem:[%s640 + $0x38] sm:$0xf]
      %v656 = vld [vmem:[%s640 + $0x3c] sm:$0xf]
      %v658 = vunpack.c.l.b16 %v639
      %v659 = vpack.c.b16 %v326, %v658
      %vm660 = vcmask 1046528
      %v661 = vrot.slane %v659, 1
      %v662 = vrot.slane %v337, 1
      %v663 = vsel %vm660, %v661, %v662
      %v664 = vrot.slane %v338, 1
      %v665 = vsel %vm660, %v662, %v664
      %v666 = vrot.slane %v339, 1
      %v667 = vsel %vm660, %v664, %v666
      %v668 = vrot.slane %v340, 1
      %v669 = vsel %vm660, %v666, %v668
      %v670 = vrot.slane %v341, 1
      %v671 = vsel %vm660, %v668, %v670
      %v693 = vunpack.c.l.b16 %v641
      %v694 = vunpack.c.l.b16 %v642
      %v695 = vunpack.c.l.b16 %v643
      %v696 = vunpack.c.l.b16 %v644
      %v697 = vunpack.c.l.b16 %v645
      %v698 = vunpack.c.l.b16 %v646
      %v699 = vunpack.c.l.b16 %v647
      %v700 = vunpack.c.l.b16 %v648
      %v701 = vunpack.c.l.b16 %v649
      %v702 = vunpack.c.l.b16 %v650
      %v703 = vunpack.c.l.b16 %v651
      %v704 = vunpack.c.l.b16 %v652
      %v705 = vunpack.c.l.b16 %v653
      %v706 = vunpack.c.l.b16 %v654
      %v707 = vunpack.c.l.b16 %v655
      %v708 = vunpack.c.l.b16 %v656
      %v709 = vpack.c.b16 %v694, %v693
      %v710 = vpack.c.b16 %v696, %v695
      %v711 = vpack.c.b16 %v698, %v697
      %v712 = vpack.c.b16 %v700, %v699
      %v713 = vpack.c.b16 %v702, %v701
      %v714 = vpack.c.b16 %v704, %v703
      %v715 = vpack.c.b16 %v706, %v705
      %v716 = vpack.c.b16 %v708, %v707
      %725 = vmatprep.subr.bf16.mxu0 0
      %726 = vmatpush1.bf16.msra.mxu0 %v709
      %727 = vmatprep.subr.bf16.mxu0 0
      %728 = vmatpush1.bf16.msra.mxu0 %v710
      %729 = vmatprep.subr.bf16.mxu0 0
      %730 = vmatpush1.bf16.msra.mxu0 %v711
      %731 = vmatprep.subr.bf16.mxu0 0
      %732 = vmatpush1.bf16.msra.mxu0 %v712
      %733 = vmatprep.subr.bf16.mxu0 0
      %734 = vmatpush1.bf16.msra.mxu0 %v713
      %735 = vmatprep.subr.bf16.mxu0 0
      %736 = vmatpush1.bf16.msra.mxu0 %v714
      %737 = vmatprep.subr.bf16.mxu0 0
      %738 = vmatpush1.bf16.msra.mxu0 %v715
      %739 = vmatprep.subr.bf16.mxu0 0
      %740 = vmatpush1.bf16.msra.mxu0 %v716
      %741 = vmatprep.subr.bf16.mxu0 0
      %742 = vmatpush1.bf16.msra.mxu0 0
      %743 = vmatprep.subr.bf16.mxu0 0
      %744 = vmatpush1.bf16.msra.mxu0 0
      %745 = vmatprep.subr.bf16.mxu0 0
      %746 = vmatpush1.bf16.msra.mxu0 0
      %747 = vmatprep.subr.bf16.mxu0 0
      %748 = vmatpush1.bf16.msra.mxu0 0
      %749 = vmatprep.subr.bf16.mxu0 0
      %750 = vmatpush1.bf16.msra.mxu0 0
      %751 = vmatprep.subr.bf16.mxu0 0
      %752 = vmatpush1.bf16.msra.mxu0 0
      %753 = vmatprep.subr.bf16.mxu0 0
      %754 = vmatpush1.bf16.msra.mxu0 0
      %755 = vmatprep.subr.bf16.mxu0 0
      %756 = vmatpush1.bf16.msra.mxu0 0
      %757 = vmatprep.mubr.bf16.mxu0 0
      %758 = vmatmul.mubr.bf16.gmra.mrb[0].mxu0 %v663
      %v759 = vpop.f32.mrb[0].mxu0
      %v760 = vadd.f32 0.0, %v759
      %v761 = vpop.f32.mrb[0].mxu0
      %v762 = vpop.f32.mrb[0].mxu0
      %v763 = vadd.f32 0.0, %v762
      %v764 = vpop.f32.mrb[0].mxu0
      %765 = vmatprep.mubr.bf16.mxu0 0
      %766 = vmatmul.mubr.bf16.gmra.mrb[0].mxu0 %v665
      %v767 = vpop.f32.mrb[0].mxu0
      %v768 = vadd.f32 0.0, %v767
      %v769 = vpop.f32.mrb[0].mxu0
      %v770 = vpop.f32.mrb[0].mxu0
      %v771 = vadd.f32 0.0, %v770
      %v772 = vpop.f32.mrb[0].mxu0
      %773 = vmatprep.mubr.bf16.mxu0 0
      %774 = vmatmul.mubr.bf16.gmra.mrb[0].mxu0 %v667
      %v775 = vpop.f32.mrb[0].mxu0
      %v776 = vadd.f32 0.0, %v775
      %v777 = vpop.f32.mrb[0].mxu0
      %v778 = vpop.f32.mrb[0].mxu0
      %v779 = vadd.f32 0.0, %v778
      %v780 = vpop.f32.mrb[0].mxu0
      %781 = vmatprep.mubr.bf16.mxu0 0
      %782 = vmatmul.mubr.bf16.gmra.mrb[0].mxu0 %v669
      %v783 = vpop.f32.mrb[0].mxu0
      %v784 = vadd.f32 0.0, %v783
      %v785 = vpop.f32.mrb[0].mxu0
      %v786 = vpop.f32.mrb[0].mxu0
      %v787 = vadd.f32 0.0, %v786
      %v788 = vpop.f32.mrb[0].mxu0
      %789 = vmatprep.mubr.bf16.mxu0 0
      %790 = vmatmul.mubr.bf16.gmra.mrb[0].mxu0 %v671
      %v791 = vpop.f32.mrb[0].mxu0
      %v792 = vadd.f32 0.0, %v791
      %v793 = vpop.f32.mrb[0].mxu0
      %v794 = vpop.f32.mrb[0].mxu0
      %v795 = vadd.f32 0.0, %v794
      %v796 = vpop.f32.mrb[0].mxu0
      %797 = vdwg.mxu0
      %v798 = vadd.f32 %v601, %v760
      %v799 = vadd.f32 %v604, %v763
      %v800 = vadd.f32 %v609, %v768
      %v801 = vadd.f32 %v612, %v771
      %v802 = vadd.f32 %v617, %v776
      %v803 = vadd.f32 %v620, %v779
      %v804 = vadd.f32 %v625, %v784
      %v805 = vadd.f32 %v628, %v787
      %v806 = vadd.f32 %v633, %v792
      %v807 = vadd.f32 %v636, %v795
      %v808 = vld [vmem:[%s257 + $0x4] sm:$0xe]
      %v809 = vld [vmem:[%s257 + $0x8] sm:$0xf]
      %v810 = vld [vmem:[%s257 + $0xc] sm:$0xf]
      %v811 = vld [vmem:[%s257 + $0x10] sm:$0xf]
      %v812 = vld [vmem:[%s257 + $0x14] sm:$0xf]
      %v813 = vld [vmem:[%s257 + $0x18] sm:$0xf]
      %v814 = vld [vmem:[%s257 + $0x1c] sm:$0xf]
      %v815 = vld [vmem:[%s257 + $0x20] sm:$0xf]
      %v816 = vld [vmem:[%s257 + $0x24] sm:$0xf]
      %v817 = vld [vmem:[%s257 + $0x28] sm:$0xf]
      %v818 = vld [vmem:[%s257 + $0x2c] sm:$0x1]
      %s819 = scalar_lea.vmem %s1, 192
      %v820 = vld [vmem:[%s819] sm:$0xf]
      %v821 = vld [vmem:[%s819 + $0x4] sm:$0xf]
      %v822 = vld [vmem:[%s819 + $0x8] sm:$0xf]
      %v823 = vld [vmem:[%s819 + $0xc] sm:$0xf]
      %v824 = vld [vmem:[%s819 + $0x10] sm:$0xf]
      %v825 = vld [vmem:[%s819 + $0x14] sm:$0xf]
      %v826 = vld [vmem:[%s819 + $0x18] sm:$0xf]
      %v827 = vld [vmem:[%s819 + $0x1c] sm:$0xf]
      %v828 = vld [vmem:[%s819 + $0x20] sm:$0xf]
      %v829 = vld [vmem:[%s819 + $0x24] sm:$0xf]
      %v830 = vld [vmem:[%s819 + $0x28] sm:$0xf]
      %v831 = vld [vmem:[%s819 + $0x2c] sm:$0xf]
      %v832 = vld [vmem:[%s819 + $0x30] sm:$0xf]
      %v833 = vld [vmem:[%s819 + $0x34] sm:$0xf]
      %v834 = vld [vmem:[%s819 + $0x38] sm:$0xf]
      %v835 = vld [vmem:[%s819 + $0x3c] sm:$0xf]
      %v847 = vunpack.c.l.b16 %v808
      %v848 = vunpack.c.l.b16 %v809
      %v849 = vunpack.c.l.b16 %v810
      %v850 = vunpack.c.l.b16 %v811
      %v851 = vunpack.c.l.b16 %v812
      %v852 = vunpack.c.l.b16 %v813
      %v853 = vunpack.c.l.b16 %v814
      %v854 = vunpack.c.l.b16 %v815
      %v855 = vunpack.c.l.b16 %v816
      %v856 = vunpack.c.l.b16 %v817
      %v857 = vunpack.c.l.b16 %v818
      %v858 = vpack.c.b16 %v848, %v847
      %v859 = vpack.c.b16 %v850, %v849
      %v860 = vpack.c.b16 %v852, %v851
      %v861 = vpack.c.b16 %v854, %v853
      %v862 = vpack.c.b16 %v856, %v855
      %v863 = vpack.c.b16 %v857, %v857
      %v864 = vrot.slane %v858, 1
      %v865 = vrot.slane %v859, 1
      %v866 = vsel %vm660, %v864, %v865
      %v867 = vrot.slane %v860, 1
      %v868 = vsel %vm660, %v865, %v867
      %v869 = vrot.slane %v861, 1
      %v870 = vsel %vm660, %v867, %v869
      %v871 = vrot.slane %v862, 1
      %v872 = vsel %vm660, %v869, %v871
      %v873 = vrot.slane %v863, 1
      %v874 = vsel %vm660, %v871, %v873
      %v896 = vunpack.c.l.b16 %v820
      %v897 = vunpack.c.l.b16 %v821
      %v898 = vunpack.c.l.b16 %v822
      %v899 = vunpack.c.l.b16 %v823
      %v900 = vunpack.c.l.b16 %v824
      %v901 = vunpack.c.l.b16 %v825
      %v902 = vunpack.c.l.b16 %v826
      %v903 = vunpack.c.l.b16 %v827
      %v904 = vunpack.c.l.b16 %v828
      %v905 = vunpack.c.l.b16 %v829
      %v906 = vunpack.c.l.b16 %v830
      %v907 = vunpack.c.l.b16 %v831
      %v908 = vunpack.c.l.b16 %v832
      %v909 = vunpack.c.l.b16 %v833
      %v910 = vunpack.c.l.b16 %v834
      %v911 = vunpack.c.l.b16 %v835
      %v912 = vpack.c.b16 %v897, %v896
      %v913 = vpack.c.b16 %v899, %v898
      %v914 = vpack.c.b16 %v901, %v900
      %v915 = vpack.c.b16 %v903, %v902
      %v916 = vpack.c.b16 %v905, %v904
      %v917 = vpack.c.b16 %v907, %v906
      %v918 = vpack.c.b16 %v909, %v908
      %v919 = vpack.c.b16 %v911, %v910
      %928 = vmatprep.subr.bf16.mxu0 0
      %929 = vmatpush1.bf16.msra.mxu0 %v912
      %930 = vmatprep.subr.bf16.mxu0 0
      %931 = vmatpush1.bf16.msra.mxu0 %v913
      %932 = vmatprep.subr.bf16.mxu0 0
      %933 = vmatpush1.bf16.msra.mxu0 %v914
      %934 = vmatprep.subr.bf16.mxu0 0
      %935 = vmatpush1.bf16.msra.mxu0 %v915
      %936 = vmatprep.subr.bf16.mxu0 0
      %937 = vmatpush1.bf16.msra.mxu0 %v916
      %938 = vmatprep.subr.bf16.mxu0 0
      %939 = vmatpush1.bf16.msra.mxu0 %v917
      %940 = vmatprep.subr.bf16.mxu0 0
      %941 = vmatpush1.bf16.msra.mxu0 %v918
      %942 = vmatprep.subr.bf16.mxu0 0
      %943 = vmatpush1.bf16.msra.mxu0 %v919
      %944 = vmatprep.subr.bf16.mxu0 0
      %945 = vmatpush1.bf16.msra.mxu0 0
      %946 = vmatprep.subr.bf16.mxu0 0
      %947 = vmatpush1.bf16.msra.mxu0 0
      %948 = vmatprep.subr.bf16.mxu0 0
      %949 = vmatpush1.bf16.msra.mxu0 0
      %950 = vmatprep.subr.bf16.mxu0 0
      %951 = vmatpush1.bf16.msra.mxu0 0
      %952 = vmatprep.subr.bf16.mxu0 0
      %953 = vmatpush1.bf16.msra.mxu0 0
      %954 = vmatprep.subr.bf16.mxu0 0
      %955 = vmatpush1.bf16.msra.mxu0 0
      %956 = vmatprep.subr.bf16.mxu0 0
      %957 = vmatpush1.bf16.msra.mxu0 0
      %958 = vmatprep.subr.bf16.mxu0 0
      %959 = vmatpush1.bf16.msra.mxu0 0
      %960 = vmatprep.mubr.bf16.mxu0 0
      %961 = vmatmul.mubr.bf16.gmra.mrb[0].mxu0 %v866
      %v962 = vpop.f32.mrb[0].mxu0
      %v963 = vadd.f32 0.0, %v962
      %v964 = vpop.f32.mrb[0].mxu0
      %v965 = vpop.f32.mrb[0].mxu0
      %v966 = vadd.f32 0.0, %v965
      %v967 = vpop.f32.mrb[0].mxu0
      %968 = vmatprep.mubr.bf16.mxu0 0
      %969 = vmatmul.mubr.bf16.gmra.mrb[0].mxu0 %v868
      %v970 = vpop.f32.mrb[0].mxu0
      %v971 = vadd.f32 0.0, %v970
      %v972 = vpop.f32.mrb[0].mxu0
      %v973 = vpop.f32.mrb[0].mxu0
      %v974 = vadd.f32 0.0, %v973
      %v975 = vpop.f32.mrb[0].mxu0
      %976 = vmatprep.mubr.bf16.mxu0 0
      %977 = vmatmul.mubr.bf16.gmra.mrb[0].mxu0 %v870
      %v978 = vpop.f32.mrb[0].mxu0
      %v979 = vadd.f32 0.0, %v978
      %v980 = vpop.f32.mrb[0].mxu0
      %v981 = vpop.f32.mrb[0].mxu0
      %v982 = vadd.f32 0.0, %v981
      %v983 = vpop.f32.mrb[0].mxu0
      %984 = vmatprep.mubr.bf16.mxu0 0
      %985 = vmatmul.mubr.bf16.gmra.mrb[0].mxu0 %v872
      %v986 = vpop.f32.mrb[0].mxu0
      %v987 = vadd.f32 0.0, %v986
      %v988 = vpop.f32.mrb[0].mxu0
      %v989 = vpop.f32.mrb[0].mxu0
      %v990 = vadd.f32 0.0, %v989
      %v991 = vpop.f32.mrb[0].mxu0
      %992 = vmatprep.mubr.bf16.mxu0 0
      %993 = vmatmul.mubr.bf16.gmra.mrb[0].mxu0 %v874
      %v994 = vpop.f32.mrb[0].mxu0
      %v995 = vadd.f32 0.0, %v994
      %v996 = vpop.f32.mrb[0].mxu0
      %v997 = vpop.f32.mrb[0].mxu0
      %v998 = vadd.f32 0.0, %v997
      %v999 = vpop.f32.mrb[0].mxu0
      %1000 = vdwg.mxu0
      %v1001 = vadd.f32 %v798, %v963
      %v1002 = vadd.f32 %v799, %v966
      %v1003 = vadd.f32 %v800, %v971
      %v1004 = vadd.f32 %v801, %v974
      %v1005 = vadd.f32 %v802, %v979
      %v1006 = vadd.f32 %v803, %v982
      %v1007 = vadd.f32 %v804, %v987
      %v1008 = vadd.f32 %v805, %v990
      %v1009 = vadd.f32 %v806, %v995
      %v1010 = vadd.f32 %v807, %v998
      %v1011 = vld [vmem:[%s257 + $0x2c] sm:$0x3]
      %s1012 = scalar_lea.vmem %s1, 256
      %v1013 = vld [vmem:[%s1012] sm:$0xf]
      %v1014 = vld [vmem:[%s1012 + $0x4] sm:$0xf]
      %v1015 = vld [vmem:[%s1012 + $0x8] sm:$0xf]
      %v1016 = vld [vmem:[%s1012 + $0xc] sm:$0xf]
      %v1017 = vld [vmem:[%s1012 + $0x10] sm:$0xf]
      %v1018 = vld [vmem:[%s1012 + $0x14] sm:$0xf]
      %v1019 = vld [vmem:[%s1012 + $0x18] sm:$0xf]
      %v1020 = vld [vmem:[%s1012 + $0x1c] sm:$0xf]
      %v1021 = vld [vmem:[%s1012 + $0x20] sm:$0xf]
      %v1022 = vld [vmem:[%s1012 + $0x24] sm:$0xf]
      %v1023 = vld [vmem:[%s1012 + $0x28] sm:$0xf]
      %v1024 = vld [vmem:[%s1012 + $0x2c] sm:$0xf]
      %v1025 = vld [vmem:[%s1012 + $0x30] sm:$0xf]
      %v1026 = vld [vmem:[%s1012 + $0x34] sm:$0xf]
      %v1027 = vld [vmem:[%s1012 + $0x38] sm:$0xf]
      %v1028 = vld [vmem:[%s1012 + $0x3c] sm:$0xf]
      %v1030 = vunpack.c.l.b16 %v1011
      %v1031 = vpack.c.b16 %v1030, %v1030
      %vm1032 = vsmask.f32 6400
      %v1034 = vshrl.u32 %v858, 16
      %v1036 = vrot.slane %v1034, 1
      %v1037 = vshll.u32 %v858, 16
      %v1039 = vrot.slane %v1037, 2
      %v1040 = vor.u32 %v1036, %v1039
      %v1042 = vshrl.u32 %v859, 16
      %v1044 = vrot.slane %v1042, 1
      %v1045 = vshll.u32 %v859, 16
      %v1047 = vrot.slane %v1045, 2
      %v1048 = vor.u32 %v1044, %v1047
      %v1049 = vsel %vm1032, %v1040, %v1048
      %v1051 = vshrl.u32 %v860, 16
      %v1053 = vrot.slane %v1051, 1
      %v1054 = vshll.u32 %v860, 16
      %v1056 = vrot.slane %v1054, 2
      %v1057 = vor.u32 %v1053, %v1056
      %v1058 = vsel %vm1032, %v1048, %v1057
      %v1060 = vshrl.u32 %v861, 16
      %v1062 = vrot.slane %v1060, 1
      %v1063 = vshll.u32 %v861, 16
      %v1065 = vrot.slane %v1063, 2
      %v1066 = vor.u32 %v1062, %v1065
      %v1067 = vsel %vm1032, %v1057, %v1066
      %v1069 = vshrl.u32 %v862, 16
      %v1071 = vrot.slane %v1069, 1
      %v1072 = vshll.u32 %v862, 16
      %v1074 = vrot.slane %v1072, 2
      %v1075 = vor.u32 %v1071, %v1074
      %v1076 = vsel %vm1032, %v1066, %v1075
      %v1078 = vshrl.u32 %v1031, 16
      %v1080 = vrot.slane %v1078, 1
      %v1081 = vshll.u32 %v1031, 16
      %v1083 = vrot.slane %v1081, 2
      %v1084 = vor.u32 %v1080, %v1083
      %v1085 = vsel %vm1032, %v1075, %v1084
      %v1107 = vunpack.c.l.b16 %v1013
      %v1108 = vunpack.c.l.b16 %v1014
      %v1109 = vunpack.c.l.b16 %v1015
      %v1110 = vunpack.c.l.b16 %v1016
      %v1111 = vunpack.c.l.b16 %v1017
      %v1112 = vunpack.c.l.b16 %v1018
      %v1113 = vunpack.c.l.b16 %v1019
      %v1114 = vunpack.c.l.b16 %v1020
      %v1115 = vunpack.c.l.b16 %v1021
      %v1116 = vunpack.c.l.b16 %v1022
      %v1117 = vunpack.c.l.b16 %v1023
      %v1118 = vunpack.c.l.b16 %v1024
      %v1119 = vunpack.c.l.b16 %v1025
      %v1120 = vunpack.c.l.b16 %v1026
      %v1121 = vunpack.c.l.b16 %v1027
      %v1122 = vunpack.c.l.b16 %v1028
      %v1123 = vpack.c.b16 %v1108, %v1107
      %v1124 = vpack.c.b16 %v1110, %v1109
      %v1125 = vpack.c.b16 %v1112, %v1111
      %v1126 = vpack.c.b16 %v1114, %v1113
      %v1127 = vpack.c.b16 %v1116, %v1115
      %v1128 = vpack.c.b16 %v1118, %v1117
      %v1129 = vpack.c.b16 %v1120, %v1119
      %v1130 = vpack.c.b16 %v1122, %v1121
      %1139 = vmatprep.subr.bf16.mxu0 0
      %1140 = vmatpush1.bf16.msra.mxu0 %v1123
      %1141 = vmatprep.subr.bf16.mxu0 0
      %1142 = vmatpush1.bf16.msra.mxu0 %v1124
      %1143 = vmatprep.subr.bf16.mxu0 0
      %1144 = vmatpush1.bf16.msra.mxu0 %v1125
      %1145 = vmatprep.subr.bf16.mxu0 0
      %1146 = vmatpush1.bf16.msra.mxu0 %v1126
      %1147 = vmatprep.subr.bf16.mxu0 0
      %1148 = vmatpush1.bf16.msra.mxu0 %v1127
      %1149 = vmatprep.subr.bf16.mxu0 0
      %1150 = vmatpush1.bf16.msra.mxu0 %v1128
      %1151 = vmatprep.subr.bf16.mxu0 0
      %1152 = vmatpush1.bf16.msra.mxu0 %v1129
      %1153 = vmatprep.subr.bf16.mxu0 0
      %1154 = vmatpush1.bf16.msra.mxu0 %v1130
      %1155 = vmatprep.subr.bf16.mxu0 0
      %1156 = vmatpush1.bf16.msra.mxu0 0
      %1157 = vmatprep.subr.bf16.mxu0 0
      %1158 = vmatpush1.bf16.msra.mxu0 0
      %1159 = vmatprep.subr.bf16.mxu0 0
      %1160 = vmatpush1.bf16.msra.mxu0 0
      %1161 = vmatprep.subr.bf16.mxu0 0
      %1162 = vmatpush1.bf16.msra.mxu0 0
      %1163 = vmatprep.subr.bf16.mxu0 0
      %1164 = vmatpush1.bf16.msra.mxu0 0
      %1165 = vmatprep.subr.bf16.mxu0 0
      %1166 = vmatpush1.bf16.msra.mxu0 0
      %1167 = vmatprep.subr.bf16.mxu0 0
      %1168 = vmatpush1.bf16.msra.mxu0 0
      %1169 = vmatprep.subr.bf16.mxu0 0
      %1170 = vmatpush1.bf16.msra.mxu0 0
      %1171 = vmatprep.mubr.bf16.mxu0 0
      %1172 = vmatmul.mubr.bf16.gmra.mrb[0].mxu0 %v1049
      %v1173 = vpop.f32.mrb[0].mxu0
      %v1174 = vadd.f32 0.0, %v1173
      %v1175 = vpop.f32.mrb[0].mxu0
      %v1176 = vpop.f32.mrb[0].mxu0
      %v1177 = vadd.f32 0.0, %v1176
      %v1178 = vpop.f32.mrb[0].mxu0
      %1179 = vmatprep.mubr.bf16.mxu0 0
      %1180 = vmatmul.mubr.bf16.gmra.mrb[0].mxu0 %v1058
      %v1181 = vpop.f32.mrb[0].mxu0
      %v1182 = vadd.f32 0.0, %v1181
      %v1183 = vpop.f32.mrb[0].mxu0
      %v1184 = vpop.f32.mrb[0].mxu0
      %v1185 = vadd.f32 0.0, %v1184
      %v1186 = vpop.f32.mrb[0].mxu0
      %1187 = vmatprep.mubr.bf16.mxu0 0
      %1188 = vmatmul.mubr.bf16.gmra.mrb[0].mxu0 %v1067
      %v1189 = vpop.f32.mrb[0].mxu0
      %v1190 = vadd.f32 0.0, %v1189
      %v1191 = vpop.f32.mrb[0].mxu0
      %v1192 = vpop.f32.mrb[0].mxu0
      %v1193 = vadd.f32 0.0, %v1192
      %v1194 = vpop.f32.mrb[0].mxu0
      %1195 = vmatprep.mubr.bf16.mxu0 0
      %1196 = vmatmul.mubr.bf16.gmra.mrb[0].mxu0 %v1076
      %v1197 = vpop.f32.mrb[0].mxu0
      %v1198 = vadd.f32 0.0, %v1197
      %v1199 = vpop.f32.mrb[0].mxu0
      %v1200 = vpop.f32.mrb[0].mxu0
      %v1201 = vadd.f32 0.0, %v1200
      %v1202 = vpop.f32.mrb[0].mxu0
      %1203 = vmatprep.mubr.bf16.mxu0 0
      %1204 = vmatmul.mubr.bf16.gmra.mrb[0].mxu0 %v1085
      %v1205 = vpop.f32.mrb[0].mxu0
      %v1206 = vadd.f32 0.0, %v1205
      %v1207 = vpop.f32.mrb[0].mxu0
      %v1208 = vpop.f32.mrb[0].mxu0
      %v1209 = vadd.f32 0.0, %v1208
      %v1210 = vpop.f32.mrb[0].mxu0
      %1211 = vdwg.mxu0
      %v1212 = vadd.f32 %v1001, %v1174
      %v1213 = vadd.f32 %v1002, %v1177
      %v1214 = vadd.f32 %v1003, %v1182
      %v1215 = vadd.f32 %v1004, %v1185
      %v1216 = vadd.f32 %v1005, %v1190
      %v1217 = vadd.f32 %v1006, %v1193
      %v1218 = vadd.f32 %v1007, %v1198
      %v1219 = vadd.f32 %v1008, %v1201
      %v1220 = vadd.f32 %v1009, %v1206
      %v1221 = vadd.f32 %v1010, %v1209
      %v1222 = vld [vmem:[%s257 + $0x4] sm:$0xc]
      %s1223 = scalar_lea.vmem %s1, 320
      %v1224 = vld [vmem:[%s1223] sm:$0xf]
      %v1225 = vld [vmem:[%s1223 + $0x4] sm:$0xf]
      %v1226 = vld [vmem:[%s1223 + $0x8] sm:$0xf]
      %v1227 = vld [vmem:[%s1223 + $0xc] sm:$0xf]
      %v1228 = vld [vmem:[%s1223 + $0x10] sm:$0xf]
      %v1229 = vld [vmem:[%s1223 + $0x14] sm:$0xf]
      %v1230 = vld [vmem:[%s1223 + $0x18] sm:$0xf]
      %v1231 = vld [vmem:[%s1223 + $0x1c] sm:$0xf]
      %v1232 = vld [vmem:[%s1223 + $0x20] sm:$0xf]
      %v1233 = vld [vmem:[%s1223 + $0x24] sm:$0xf]
      %v1234 = vld [vmem:[%s1223 + $0x28] sm:$0xf]
      %v1235 = vld [vmem:[%s1223 + $0x2c] sm:$0xf]
      %v1236 = vld [vmem:[%s1223 + $0x30] sm:$0xf]
      %v1237 = vld [vmem:[%s1223 + $0x34] sm:$0xf]
      %v1238 = vld [vmem:[%s1223 + $0x38] sm:$0xf]
      %v1239 = vld [vmem:[%s1223 + $0x3c] sm:$0xf]
      %v1241 = vunpack.c.l.b16 %v1222
      %v1242 = vpack.c.b16 %v848, %v1241
      %vm1243 = vcmask 1045504
      %v1244 = vrot.slane %v1242, 2
      %v1245 = vrot.slane %v859, 2
      %v1246 = vsel %vm1243, %v1244, %v1245
      %v1247 = vrot.slane %v860, 2
      %v1248 = vsel %vm1243, %v1245, %v1247
      %v1249 = vrot.slane %v861, 2
      %v1250 = vsel %vm1243, %v1247, %v1249
      %v1251 = vrot.slane %v862, 2
      %v1252 = vsel %vm1243, %v1249, %v1251
      %v1253 = vrot.slane %v1031, 2
      %v1254 = vsel %vm1243, %v1251, %v1253
      %v1276 = vunpack.c.l.b16 %v1224
      %v1277 = vunpack.c.l.b16 %v1225
      %v1278 = vunpack.c.l.b16 %v1226
      %v1279 = vunpack.c.l.b16 %v1227
      %v1280 = vunpack.c.l.b16 %v1228
      %v1281 = vunpack.c.l.b16 %v1229
      %v1282 = vunpack.c.l.b16 %v1230
      %v1283 = vunpack.c.l.b16 %v1231
      %v1284 = vunpack.c.l.b16 %v1232
      %v1285 = vunpack.c.l.b16 %v1233
      %v1286 = vunpack.c.l.b16 %v1234
      %v1287 = vunpack.c.l.b16 %v1235
      %v1288 = vunpack.c.l.b16 %v1236
      %v1289 = vunpack.c.l.b16 %v1237
      %v1290 = vunpack.c.l.b16 %v1238
      %v1291 = vunpack.c.l.b16 %v1239
      %v1292 = vpack.c.b16 %v1277, %v1276
      %v1293 = vpack.c.b16 %v1279, %v1278
      %v1294 = vpack.c.b16 %v1281, %v1280
      %v1295 = vpack.c.b16 %v1283, %v1282
      %v1296 = vpack.c.b16 %v1285, %v1284
      %v1297 = vpack.c.b16 %v1287, %v1286
      %v1298 = vpack.c.b16 %v1289, %v1288
      %v1299 = vpack.c.b16 %v1291, %v1290
      %1308 = vmatprep.subr.bf16.mxu0 0
      %1309 = vmatpush1.bf16.msra.mxu0 %v1292
      %1310 = vmatprep.subr.bf16.mxu0 0
      %1311 = vmatpush1.bf16.msra.mxu0 %v1293
      %1312 = vmatprep.subr.bf16.mxu0 0
      %1313 = vmatpush1.bf16.msra.mxu0 %v1294
      %1314 = vmatprep.subr.bf16.mxu0 0
      %1315 = vmatpush1.bf16.msra.mxu0 %v1295
      %1316 = vmatprep.subr.bf16.mxu0 0
      %1317 = vmatpush1.bf16.msra.mxu0 %v1296
      %1318 = vmatprep.subr.bf16.mxu0 0
      %1319 = vmatpush1.bf16.msra.mxu0 %v1297
      %1320 = vmatprep.subr.bf16.mxu0 0
      %1321 = vmatpush1.bf16.msra.mxu0 %v1298
      %1322 = vmatprep.subr.bf16.mxu0 0
      %1323 = vmatpush1.bf16.msra.mxu0 %v1299
      %1324 = vmatprep.subr.bf16.mxu0 0
      %1325 = vmatpush1.bf16.msra.mxu0 0
      %1326 = vmatprep.subr.bf16.mxu0 0
      %1327 = vmatpush1.bf16.msra.mxu0 0
      %1328 = vmatprep.subr.bf16.mxu0 0
      %1329 = vmatpush1.bf16.msra.mxu0 0
      %1330 = vmatprep.subr.bf16.mxu0 0
      %1331 = vmatpush1.bf16.msra.mxu0 0
      %1332 = vmatprep.subr.bf16.mxu0 0
      %1333 = vmatpush1.bf16.msra.mxu0 0
      %1334 = vmatprep.subr.bf16.mxu0 0
      %1335 = vmatpush1.bf16.msra.mxu0 0
      %1336 = vmatprep.subr.bf16.mxu0 0
      %1337 = vmatpush1.bf16.msra.mxu0 0
      %1338 = vmatprep.subr.bf16.mxu0 0
      %1339 = vmatpush1.bf16.msra.mxu0 0
      %1340 = vmatprep.mubr.bf16.mxu0 0
      %1341 = vmatmul.mubr.bf16.gmra.mrb[0].mxu0 %v1246
      %v1342 = vpop.f32.mrb[0].mxu0
      %v1343 = vadd.f32 0.0, %v1342
      %v1344 = vpop.f32.mrb[0].mxu0
      %v1345 = vpop.f32.mrb[0].mxu0
      %v1346 = vadd.f32 0.0, %v1345
      %v1347 = vpop.f32.mrb[0].mxu0
      %1348 = vmatprep.mubr.bf16.mxu0 0
      %1349 = vmatmul.mubr.bf16.gmra.mrb[0].mxu0 %v1248
      %v1350 = vpop.f32.mrb[0].mxu0
      %v1351 = vadd.f32 0.0, %v1350
      %v1352 = vpop.f32.mrb[0].mxu0
      %v1353 = vpop.f32.mrb[0].mxu0
      %v1354 = vadd.f32 0.0, %v1353
      %v1355 = vpop.f32.mrb[0].mxu0
      %1356 = vmatprep.mubr.bf16.mxu0 0
      %1357 = vmatmul.mubr.bf16.gmra.mrb[0].mxu0 %v1250
      %v1358 = vpop.f32.mrb[0].mxu0
      %v1359 = vadd.f32 0.0, %v1358
      %v1360 = vpop.f32.mrb[0].mxu0
      %v1361 = vpop.f32.mrb[0].mxu0
      %v1362 = vadd.f32 0.0, %v1361
      %v1363 = vpop.f32.mrb[0].mxu0
      %1364 = vmatprep.mubr.bf16.mxu0 0
      %1365 = vmatmul.mubr.bf16.gmra.mrb[0].mxu0 %v1252
      %v1366 = vpop.f32.mrb[0].mxu0
      %v1367 = vadd.f32 0.0, %v1366
      %v1368 = vpop.f32.mrb[0].mxu0
      %v1369 = vpop.f32.mrb[0].mxu0
      %v1370 = vadd.f32 0.0, %v1369
      %v1371 = vpop.f32.mrb[0].mxu0
      %1372 = vmatprep.mubr.bf16.mxu0 0
      %1373 = vmatmul.mubr.bf16.gmra.mrb[0].mxu0 %v1254
      %v1374 = vpop.f32.mrb[0].mxu0
      %v1375 = vadd.f32 0.0, %v1374
      %v1376 = vpop.f32.mrb[0].mxu0
      %v1377 = vpop.f32.mrb[0].mxu0
      %v1378 = vadd.f32 0.0, %v1377
      %v1379 = vpop.f32.mrb[0].mxu0
      %1380 = vdwg.mxu0
      %v1381 = vadd.f32 %v1212, %v1343
      %v1382 = vadd.f32 %v1213, %v1346
      %v1383 = vadd.f32 %v1214, %v1351
      %v1384 = vadd.f32 %v1215, %v1354
      %v1385 = vadd.f32 %v1216, %v1359
      %v1386 = vadd.f32 %v1217, %v1362
      %v1387 = vadd.f32 %v1218, %v1367
      %v1388 = vadd.f32 %v1219, %v1370
      %v1389 = vadd.f32 %v1220, %v1375
      %v1390 = vadd.f32 %v1221, %v1378
      %v1391 = vld [vmem:[%s257 + $0x8] sm:$0xc]
      %v1392 = vld [vmem:[%s257 + $0xc] sm:$0xf]
      %v1393 = vld [vmem:[%s257 + $0x10] sm:$0xf]
      %v1394 = vld [vmem:[%s257 + $0x14] sm:$0xf]
      %v1395 = vld [vmem:[%s257 + $0x18] sm:$0xf]
      %v1396 = vld [vmem:[%s257 + $0x1c] sm:$0xf]
      %v1397 = vld [vmem:[%s257 + $0x20] sm:$0xf]
      %v1398 = vld [vmem:[%s257 + $0x24] sm:$0xf]
      %v1399 = vld [vmem:[%s257 + $0x28] sm:$0xf]
      %v1400 = vld [vmem:[%s257 + $0x2c] sm:$0xf]
      %v1401 = vld [vmem:[%s257 + $0x30] sm:$0x3]
      %s1402 = scalar_lea.vmem %s1, 384
      %v1403 = vld [vmem:[%s1402] sm:$0xf]
      %v1404 = vld [vmem:[%s1402 + $0x4] sm:$0xf]
      %v1405 = vld [vmem:[%s1402 + $0x8] sm:$0xf]
      %v1406 = vld [vmem:[%s1402 + $0xc] sm:$0xf]
      %v1407 = vld [vmem:[%s1402 + $0x10] sm:$0xf]
      %v1408 = vld [vmem:[%s1402 + $0x14] sm:$0xf]
      %v1409 = vld [vmem:[%s1402 + $0x18] sm:$0xf]
      %v1410 = vld [vmem:[%s1402 + $0x1c] sm:$0xf]
      %v1411 = vld [vmem:[%s1402 + $0x20] sm:$0xf]
      %v1412 = vld [vmem:[%s1402 + $0x24] sm:$0xf]
      %v1413 = vld [vmem:[%s1402 + $0x28] sm:$0xf]
      %v1414 = vld [vmem:[%s1402 + $0x2c] sm:$0xf]
      %v1415 = vld [vmem:[%s1402 + $0x30] sm:$0xf]
      %v1416 = vld [vmem:[%s1402 + $0x34] sm:$0xf]
      %v1417 = vld [vmem:[%s1402 + $0x38] sm:$0xf]
      %v1418 = vld [vmem:[%s1402 + $0x3c] sm:$0xf]
      %v1430 = vunpack.c.l.b16 %v1391
      %v1431 = vunpack.c.l.b16 %v1392
      %v1432 = vunpack.c.l.b16 %v1393
      %v1433 = vunpack.c.l.b16 %v1394
      %v1434 = vunpack.c.l.b16 %v1395
      %v1435 = vunpack.c.l.b16 %v1396
      %v1436 = vunpack.c.l.b16 %v1397
      %v1437 = vunpack.c.l.b16 %v1398
      %v1438 = vunpack.c.l.b16 %v1399
      %v1439 = vunpack.c.l.b16 %v1400
      %v1440 = vunpack.c.l.b16 %v1401
      %v1441 = vpack.c.b16 %v1431, %v1430
      %v1442 = vpack.c.b16 %v1433, %v1432
      %v1443 = vpack.c.b16 %v1435, %v1434
      %v1444 = vpack.c.b16 %v1437, %v1436
      %v1445 = vpack.c.b16 %v1439, %v1438
      %v1446 = vpack.c.b16 %v1440, %v1440
      %v1447 = vrot.slane %v1441, 2
      %v1448 = vrot.slane %v1442, 2
      %v1449 = vsel %vm1243, %v1447, %v1448
      %v1450 = vrot.slane %v1443, 2
      %v1451 = vsel %vm1243, %v1448, %v1450
      %v1452 = vrot.slane %v1444, 2
      %v1453 = vsel %vm1243, %v1450, %v1452
      %v1454 = vrot.slane %v1445, 2
      %v1455 = vsel %vm1243, %v1452, %v1454
      %v1456 = vrot.slane %v1446, 2
      %v1457 = vsel %vm1243, %v1454, %v1456
      %v1479 = vunpack.c.l.b16 %v1403
      %v1480 = vunpack.c.l.b16 %v1404
      %v1481 = vunpack.c.l.b16 %v1405
      %v1482 = vunpack.c.l.b16 %v1406
      %v1483 = vunpack.c.l.b16 %v1407
      %v1484 = vunpack.c.l.b16 %v1408
      %v1485 = vunpack.c.l.b16 %v1409
      %v1486 = vunpack.c.l.b16 %v1410
      %v1487 = vunpack.c.l.b16 %v1411
      %v1488 = vunpack.c.l.b16 %v1412
      %v1489 = vunpack.c.l.b16 %v1413
      %v1490 = vunpack.c.l.b16 %v1414
      %v1491 = vunpack.c.l.b16 %v1415
      %v1492 = vunpack.c.l.b16 %v1416
      %v1493 = vunpack.c.l.b16 %v1417
      %v1494 = vunpack.c.l.b16 %v1418
      %v1495 = vpack.c.b16 %v1480, %v1479
      %v1496 = vpack.c.b16 %v1482, %v1481
      %v1497 = vpack.c.b16 %v1484, %v1483
      %v1498 = vpack.c.b16 %v1486, %v1485
      %v1499 = vpack.c.b16 %v1488, %v1487
      %v1500 = vpack.c.b16 %v1490, %v1489
      %v1501 = vpack.c.b16 %v1492, %v1491
      %v1502 = vpack.c.b16 %v1494, %v1493
      %1511 = vmatprep.subr.bf16.mxu0 0
      %1512 = vmatpush1.bf16.msra.mxu0 %v1495
      %1513 = vmatprep.subr.bf16.mxu0 0
      %1514 = vmatpush1.bf16.msra.mxu0 %v1496
      %1515 = vmatprep.subr.bf16.mxu0 0
      %1516 = vmatpush1.bf16.msra.mxu0 %v1497
      %1517 = vmatprep.subr.bf16.mxu0 0
      %1518 = vmatpush1.bf16.msra.mxu0 %v1498
      %1519 = vmatprep.subr.bf16.mxu0 0
      %1520 = vmatpush1.bf16.msra.mxu0 %v1499
      %1521 = vmatprep.subr.bf16.mxu0 0
      %1522 = vmatpush1.bf16.msra.mxu0 %v1500
      %1523 = vmatprep.subr.bf16.mxu0 0
      %1524 = vmatpush1.bf16.msra.mxu0 %v1501
      %1525 = vmatprep.subr.bf16.mxu0 0
      %1526 = vmatpush1.bf16.msra.mxu0 %v1502
      %1527 = vmatprep.subr.bf16.mxu0 0
      %1528 = vmatpush1.bf16.msra.mxu0 0
      %1529 = vmatprep.subr.bf16.mxu0 0
      %1530 = vmatpush1.bf16.msra.mxu0 0
      %1531 = vmatprep.subr.bf16.mxu0 0
      %1532 = vmatpush1.bf16.msra.mxu0 0
      %1533 = vmatprep.subr.bf16.mxu0 0
      %1534 = vmatpush1.bf16.msra.mxu0 0
      %1535 = vmatprep.subr.bf16.mxu0 0
      %1536 = vmatpush1.bf16.msra.mxu0 0
      %1537 = vmatprep.subr.bf16.mxu0 0
      %1538 = vmatpush1.bf16.msra.mxu0 0
      %1539 = vmatprep.subr.bf16.mxu0 0
      %1540 = vmatpush1.bf16.msra.mxu0 0
      %1541 = vmatprep.subr.bf16.mxu0 0
      %1542 = vmatpush1.bf16.msra.mxu0 0
      %1543 = vmatprep.mubr.bf16.mxu0 0
      %1544 = vmatmul.mubr.bf16.gmra.mrb[0].mxu0 %v1449
      %v1545 = vpop.f32.mrb[0].mxu0
      %v1546 = vadd.f32 0.0, %v1545
      %v1547 = vpop.f32.mrb[0].mxu0
      %v1548 = vpop.f32.mrb[0].mxu0
      %v1549 = vadd.f32 0.0, %v1548
      %v1550 = vpop.f32.mrb[0].mxu0
      %1551 = vmatprep.mubr.bf16.mxu0 0
      %1552 = vmatmul.mubr.bf16.gmra.mrb[0].mxu0 %v1451
      %v1553 = vpop.f32.mrb[0].mxu0
      %v1554 = vadd.f32 0.0, %v1553
      %v1555 = vpop.f32.mrb[0].mxu0
      %v1556 = vpop.f32.mrb[0].mxu0
      %v1557 = vadd.f32 0.0, %v1556
      %v1558 = vpop.f32.mrb[0].mxu0
      %1559 = vmatprep.mubr.bf16.mxu0 0
      %1560 = vmatmul.mubr.bf16.gmra.mrb[0].mxu0 %v1453
      %v1561 = vpop.f32.mrb[0].mxu0
      %v1562 = vadd.f32 0.0, %v1561
      %v1563 = vpop.f32.mrb[0].mxu0
      %v1564 = vpop.f32.mrb[0].mxu0
      %v1565 = vadd.f32 0.0, %v1564
      %v1566 = vpop.f32.mrb[0].mxu0
      %1567 = vmatprep.mubr.bf16.mxu0 0
      %1568 = vmatmul.mubr.bf16.gmra.mrb[0].mxu0 %v1455
      %v1569 = vpop.f32.mrb[0].mxu0
      %v1570 = vadd.f32 0.0, %v1569
      %v1571 = vpop.f32.mrb[0].mxu0
      %v1572 = vpop.f32.mrb[0].mxu0
      %v1573 = vadd.f32 0.0, %v1572
      %v1574 = vpop.f32.mrb[0].mxu0
      %1575 = vmatprep.mubr.bf16.mxu0 0
      %1576 = vmatmul.mubr.bf16.gmra.mrb[0].mxu0 %v1457
      %v1577 = vpop.f32.mrb[0].mxu0
      %v1578 = vadd.f32 0.0, %v1577
      %v1579 = vpop.f32.mrb[0].mxu0
      %v1580 = vpop.f32.mrb[0].mxu0
      %v1581 = vadd.f32 0.0, %v1580
      %v1582 = vpop.f32.mrb[0].mxu0
      %1583 = vdwg.mxu0
      %v1584 = vadd.f32 %v1381, %v1546
      %v1585 = vadd.f32 %v1382, %v1549
      %v1586 = vadd.f32 %v1383, %v1554
      %v1587 = vadd.f32 %v1384, %v1557
      %v1588 = vadd.f32 %v1385, %v1562
      %v1589 = vadd.f32 %v1386, %v1565
      %v1590 = vadd.f32 %v1387, %v1570
      %v1591 = vadd.f32 %v1388, %v1573
      %v1592 = vadd.f32 %v1389, %v1578
      %v1593 = vadd.f32 %v1390, %v1581
      %v1594 = vld [vmem:[%s257 + $0x30] sm:$0x7]
      %s1595 = scalar_lea.vmem %s1, 448
      %v1596 = vld [vmem:[%s1595] sm:$0xf]
      %v1597 = vld [vmem:[%s1595 + $0x4] sm:$0xf]
      %v1598 = vld [vmem:[%s1595 + $0x8] sm:$0xf]
      %v1599 = vld [vmem:[%s1595 + $0xc] sm:$0xf]
      %v1600 = vld [vmem:[%s1595 + $0x10] sm:$0xf]
      %v1601 = vld [vmem:[%s1595 + $0x14] sm:$0xf]
      %v1602 = vld [vmem:[%s1595 + $0x18] sm:$0xf]
      %v1603 = vld [vmem:[%s1595 + $0x1c] sm:$0xf]
      %v1604 = vld [vmem:[%s1595 + $0x20] sm:$0xf]
      %v1605 = vld [vmem:[%s1595 + $0x24] sm:$0xf]
      %v1606 = vld [vmem:[%s1595 + $0x28] sm:$0xf]
      %v1607 = vld [vmem:[%s1595 + $0x2c] sm:$0xf]
      %v1608 = vld [vmem:[%s1595 + $0x30] sm:$0xf]
      %v1609 = vld [vmem:[%s1595 + $0x34] sm:$0xf]
      %v1610 = vld [vmem:[%s1595 + $0x38] sm:$0xf]
      %v1611 = vld [vmem:[%s1595 + $0x3c] sm:$0xf]
      %v1613 = vunpack.c.l.b16 %v1594
      %v1614 = vpack.c.b16 %v1613, %v1613
      %vm1615 = vsmask.f32 5376
      %v1617 = vshrl.u32 %v1441, 16
      %v1619 = vrot.slane %v1617, 2
      %v1620 = vshll.u32 %v1441, 16
      %v1622 = vrot.slane %v1620, 3
      %v1623 = vor.u32 %v1619, %v1622
      %v1625 = vshrl.u32 %v1442, 16
      %v1627 = vrot.slane %v1625, 2
      %v1628 = vshll.u32 %v1442, 16
      %v1630 = vrot.slane %v1628, 3
      %v1631 = vor.u32 %v1627, %v1630
      %v1632 = vsel %vm1615, %v1623, %v1631
      %v1634 = vshrl.u32 %v1443, 16
      %v1636 = vrot.slane %v1634, 2
      %v1637 = vshll.u32 %v1443, 16
      %v1639 = vrot.slane %v1637, 3
      %v1640 = vor.u32 %v1636, %v1639
      %v1641 = vsel %vm1615, %v1631, %v1640
      %v1643 = vshrl.u32 %v1444, 16
      %v1645 = vrot.slane %v1643, 2
      %v1646 = vshll.u32 %v1444, 16
      %v1648 = vrot.slane %v1646, 3
      %v1649 = vor.u32 %v1645, %v1648
      %v1650 = vsel %vm1615, %v1640, %v1649
      %v1652 = vshrl.u32 %v1445, 16
      %v1654 = vrot.slane %v1652, 2
      %v1655 = vshll.u32 %v1445, 16
      %v1657 = vrot.slane %v1655, 3
      %v1658 = vor.u32 %v1654, %v1657
      %v1659 = vsel %vm1615, %v1649, %v1658
      %v1661 = vshrl.u32 %v1614, 16
      %v1663 = vrot.slane %v1661, 2
      %v1664 = vshll.u32 %v1614, 16
      %v1666 = vrot.slane %v1664, 3
      %v1667 = vor.u32 %v1663, %v1666
      %v1668 = vsel %vm1615, %v1658, %v1667
      %v1690 = vunpack.c.l.b16 %v1596
      %v1691 = vunpack.c.l.b16 %v1597
      %v1692 = vunpack.c.l.b16 %v1598
      %v1693 = vunpack.c.l.b16 %v1599
      %v1694 = vunpack.c.l.b16 %v1600
      %v1695 = vunpack.c.l.b16 %v1601
      %v1696 = vunpack.c.l.b16 %v1602
      %v1697 = vunpack.c.l.b16 %v1603
      %v1698 = vunpack.c.l.b16 %v1604
      %v1699 = vunpack.c.l.b16 %v1605
      %v1700 = vunpack.c.l.b16 %v1606
      %v1701 = vunpack.c.l.b16 %v1607
      %v1702 = vunpack.c.l.b16 %v1608
      %v1703 = vunpack.c.l.b16 %v1609
      %v1704 = vunpack.c.l.b16 %v1610
      %v1705 = vunpack.c.l.b16 %v1611
      %v1706 = vpack.c.b16 %v1691, %v1690
      %v1707 = vpack.c.b16 %v1693, %v1692
      %v1708 = vpack.c.b16 %v1695, %v1694
      %v1709 = vpack.c.b16 %v1697, %v1696
      %v1710 = vpack.c.b16 %v1699, %v1698
      %v1711 = vpack.c.b16 %v1701, %v1700
      %v1712 = vpack.c.b16 %v1703, %v1702
      %v1713 = vpack.c.b16 %v1705, %v1704
      %1722 = vmatprep.subr.bf16.mxu0 0
      %1723 = vmatpush1.bf16.msra.mxu0 %v1706
      %1724 = vmatprep.subr.bf16.mxu0 0
      %1725 = vmatpush1.bf16.msra.mxu0 %v1707
      %1726 = vmatprep.subr.bf16.mxu0 0
      %1727 = vmatpush1.bf16.msra.mxu0 %v1708
      %1728 = vmatprep.subr.bf16.mxu0 0
      %1729 = vmatpush1.bf16.msra.mxu0 %v1709
      %1730 = vmatprep.subr.bf16.mxu0 0
      %1731 = vmatpush1.bf16.msra.mxu0 %v1710
      %1732 = vmatprep.subr.bf16.mxu0 0
      %1733 = vmatpush1.bf16.msra.mxu0 %v1711
      %1734 = vmatprep.subr.bf16.mxu0 0
      %1735 = vmatpush1.bf16.msra.mxu0 %v1712
      %1736 = vmatprep.subr.bf16.mxu0 0
      %1737 = vmatpush1.bf16.msra.mxu0 %v1713
      %1738 = vmatprep.subr.bf16.mxu0 0
      %1739 = vmatpush1.bf16.msra.mxu0 0
      %1740 = vmatprep.subr.bf16.mxu0 0
      %1741 = vmatpush1.bf16.msra.mxu0 0
      %1742 = vmatprep.subr.bf16.mxu0 0
      %1743 = vmatpush1.bf16.msra.mxu0 0
      %1744 = vmatprep.subr.bf16.mxu0 0
      %1745 = vmatpush1.bf16.msra.mxu0 0
      %1746 = vmatprep.subr.bf16.mxu0 0
      %1747 = vmatpush1.bf16.msra.mxu0 0
      %1748 = vmatprep.subr.bf16.mxu0 0
      %1749 = vmatpush1.bf16.msra.mxu0 0
      %1750 = vmatprep.subr.bf16.mxu0 0
      %1751 = vmatpush1.bf16.msra.mxu0 0
      %1752 = vmatprep.subr.bf16.mxu0 0
      %1753 = vmatpush1.bf16.msra.mxu0 0
      %1754 = vmatprep.mubr.bf16.mxu0 0
      %1755 = vmatmul.mubr.bf16.gmra.mrb[0].mxu0 %v1632
      %v1756 = vpop.f32.mrb[0].mxu0
      %v1757 = vadd.f32 0.0, %v1756
      %v1758 = vpop.f32.mrb[0].mxu0
      %v1759 = vpop.f32.mrb[0].mxu0
      %v1760 = vadd.f32 0.0, %v1759
      %v1761 = vpop.f32.mrb[0].mxu0
      %1762 = vmatprep.mubr.bf16.mxu0 0
      %1763 = vmatmul.mubr.bf16.gmra.mrb[0].mxu0 %v1641
      %v1764 = vpop.f32.mrb[0].mxu0
      %v1765 = vadd.f32 0.0, %v1764
      %v1766 = vpop.f32.mrb[0].mxu0
      %v1767 = vpop.f32.mrb[0].mxu0
      %v1768 = vadd.f32 0.0, %v1767
      %v1769 = vpop.f32.mrb[0].mxu0
      %1770 = vmatprep.mubr.bf16.mxu0 0
      %1771 = vmatmul.mubr.bf16.gmra.mrb[0].mxu0 %v1650
      %v1772 = vpop.f32.mrb[0].mxu0
      %v1773 = vadd.f32 0.0, %v1772
      %v1774 = vpop.f32.mrb[0].mxu0
      %v1775 = vpop.f32.mrb[0].mxu0
      %v1776 = vadd.f32 0.0, %v1775
      %v1777 = vpop.f32.mrb[0].mxu0
      %1778 = vmatprep.mubr.bf16.mxu0 0
      %1779 = vmatmul.mubr.bf16.gmra.mrb[0].mxu0 %v1659
      %v1780 = vpop.f32.mrb[0].mxu0
      %v1781 = vadd.f32 0.0, %v1780
      %v1782 = vpop.f32.mrb[0].mxu0
      %v1783 = vpop.f32.mrb[0].mxu0
      %v1784 = vadd.f32 0.0, %v1783
      %v1785 = vpop.f32.mrb[0].mxu0
      %1786 = vmatprep.mubr.bf16.mxu0 0
      %1787 = vmatmul.mubr.bf16.gmra.mrb[0].mxu0 %v1668
      %v1788 = vpop.f32.mrb[0].mxu0
      %v1789 = vadd.f32 0.0, %v1788
      %v1790 = vpop.f32.mrb[0].mxu0
      %v1791 = vpop.f32.mrb[0].mxu0
      %v1792 = vadd.f32 0.0, %v1791
      %v1793 = vpop.f32.mrb[0].mxu0
      %1794 = vdwg.mxu0
      %v1795 = vadd.f32 %v1584, %v1757
      %v1796 = vadd.f32 %v1585, %v1760
      %v1797 = vadd.f32 %v1586, %v1765
      %v1798 = vadd.f32 %v1587, %v1768
      %v1799 = vadd.f32 %v1588, %v1773
      %v1800 = vadd.f32 %v1589, %v1776
      %v1801 = vadd.f32 %v1590, %v1781
      %v1802 = vadd.f32 %v1591, %v1784
      %v1803 = vadd.f32 %v1592, %v1789
      %v1804 = vadd.f32 %v1593, %v1792
      %v1805 = vld [vmem:[%s257 + $0x8] sm:$0x8]
      %s1806 = scalar_lea.vmem %s1, 512
      %v1807 = vld [vmem:[%s1806] sm:$0xf]
      %v1808 = vld [vmem:[%s1806 + $0x4] sm:$0xf]
      %v1809 = vld [vmem:[%s1806 + $0x8] sm:$0xf]
      %v1810 = vld [vmem:[%s1806 + $0xc] sm:$0xf]
      %v1811 = vld [vmem:[%s1806 + $0x10] sm:$0xf]
      %v1812 = vld [vmem:[%s1806 + $0x14] sm:$0xf]
      %v1813 = vld [vmem:[%s1806 + $0x18] sm:$0xf]
      %v1814 = vld [vmem:[%s1806 + $0x1c] sm:$0xf]
      %v1815 = vld [vmem:[%s1806 + $0x20] sm:$0xf]
      %v1816 = vld [vmem:[%s1806 + $0x24] sm:$0xf]
      %v1817 = vld [vmem:[%s1806 + $0x28] sm:$0xf]
      %v1818 = vld [vmem:[%s1806 + $0x2c] sm:$0xf]
      %v1819 = vld [vmem:[%s1806 + $0x30] sm:$0xf]
      %v1820 = vld [vmem:[%s1806 + $0x34] sm:$0xf]
      %v1821 = vld [vmem:[%s1806 + $0x38] sm:$0xf]
      %v1822 = vld [vmem:[%s1806 + $0x3c] sm:$0xf]
      %v1824 = vunpack.c.l.b16 %v1805
      %v1825 = vpack.c.b16 %v1431, %v1824
      %vm1826 = vcmask 1044480
      %v1827 = vrot.slane %v1825, 3
      %v1828 = vrot.slane %v1442, 3
      %v1829 = vsel %vm1826, %v1827, %v1828
      %v1830 = vrot.slane %v1443, 3
      %v1831 = vsel %vm1826, %v1828, %v1830
      %v1832 = vrot.slane %v1444, 3
      %v1833 = vsel %vm1826, %v1830, %v1832
      %v1834 = vrot.slane %v1445, 3
      %v1835 = vsel %vm1826, %v1832, %v1834
      %v1836 = vrot.slane %v1614, 3
      %v1837 = vsel %vm1826, %v1834, %v1836
      %v1859 = vunpack.c.l.b16 %v1807
      %v1860 = vunpack.c.l.b16 %v1808
      %v1861 = vunpack.c.l.b16 %v1809
      %v1862 = vunpack.c.l.b16 %v1810
      %v1863 = vunpack.c.l.b16 %v1811
      %v1864 = vunpack.c.l.b16 %v1812
      %v1865 = vunpack.c.l.b16 %v1813
      %v1866 = vunpack.c.l.b16 %v1814
      %v1867 = vunpack.c.l.b16 %v1815
      %v1868 = vunpack.c.l.b16 %v1816
      %v1869 = vunpack.c.l.b16 %v1817
      %v1870 = vunpack.c.l.b16 %v1818
      %v1871 = vunpack.c.l.b16 %v1819
      %v1872 = vunpack.c.l.b16 %v1820
      %v1873 = vunpack.c.l.b16 %v1821
      %v1874 = vunpack.c.l.b16 %v1822
      %v1875 = vpack.c.b16 %v1860, %v1859
      %v1876 = vpack.c.b16 %v1862, %v1861
      %v1877 = vpack.c.b16 %v1864, %v1863
      %v1878 = vpack.c.b16 %v1866, %v1865
      %v1879 = vpack.c.b16 %v1868, %v1867
      %v1880 = vpack.c.b16 %v1870, %v1869
      %v1881 = vpack.c.b16 %v1872, %v1871
      %v1882 = vpack.c.b16 %v1874, %v1873
      %1891 = vmatprep.subr.bf16.mxu0 0
      %1892 = vmatpush1.bf16.msra.mxu0 %v1875
      %1893 = vmatprep.subr.bf16.mxu0 0
      %1894 = vmatpush1.bf16.msra.mxu0 %v1876
      %1895 = vmatprep.subr.bf16.mxu0 0
      %1896 = vmatpush1.bf16.msra.mxu0 %v1877
      %1897 = vmatprep.subr.bf16.mxu0 0
      %1898 = vmatpush1.bf16.msra.mxu0 %v1878
      %1899 = vmatprep.subr.bf16.mxu0 0
      %1900 = vmatpush1.bf16.msra.mxu0 %v1879
      %1901 = vmatprep.subr.bf16.mxu0 0
      %1902 = vmatpush1.bf16.msra.mxu0 %v1880
      %1903 = vmatprep.subr.bf16.mxu0 0
      %1904 = vmatpush1.bf16.msra.mxu0 %v1881
      %1905 = vmatprep.subr.bf16.mxu0 0
      %1906 = vmatpush1.bf16.msra.mxu0 %v1882
      %1907 = vmatprep.subr.bf16.mxu0 0
      %1908 = vmatpush1.bf16.msra.mxu0 0
      %1909 = vmatprep.subr.bf16.mxu0 0
      %1910 = vmatpush1.bf16.msra.mxu0 0
      %1911 = vmatprep.subr.bf16.mxu0 0
      %1912 = vmatpush1.bf16.msra.mxu0 0
      %1913 = vmatprep.subr.bf16.mxu0 0
      %1914 = vmatpush1.bf16.msra.mxu0 0
      %1915 = vmatprep.subr.bf16.mxu0 0
      %1916 = vmatpush1.bf16.msra.mxu0 0
      %1917 = vmatprep.subr.bf16.mxu0 0
      %1918 = vmatpush1.bf16.msra.mxu0 0
      %1919 = vmatprep.subr.bf16.mxu0 0
      %1920 = vmatpush1.bf16.msra.mxu0 0
      %1921 = vmatprep.subr.bf16.mxu0 0
      %1922 = vmatpush1.bf16.msra.mxu0 0
      %1923 = vmatprep.mubr.bf16.mxu0 0
      %1924 = vmatmul.mubr.bf16.gmra.mrb[0].mxu0 %v1829
      %v1925 = vpop.f32.mrb[0].mxu0
      %v1926 = vadd.f32 0.0, %v1925
      %v1927 = vpop.f32.mrb[0].mxu0
      %v1928 = vpop.f32.mrb[0].mxu0
      %v1929 = vadd.f32 0.0, %v1928
      %v1930 = vpop.f32.mrb[0].mxu0
      %1931 = vmatprep.mubr.bf16.mxu0 0
      %1932 = vmatmul.mubr.bf16.gmra.mrb[0].mxu0 %v1831
      %v1933 = vpop.f32.mrb[0].mxu0
      %v1934 = vadd.f32 0.0, %v1933
      %v1935 = vpop.f32.mrb[0].mxu0
      %v1936 = vpop.f32.mrb[0].mxu0
      %v1937 = vadd.f32 0.0, %v1936
      %v1938 = vpop.f32.mrb[0].mxu0
      %1939 = vmatprep.mubr.bf16.mxu0 0
      %1940 = vmatmul.mubr.bf16.gmra.mrb[0].mxu0 %v1833
      %v1941 = vpop.f32.mrb[0].mxu0
      %v1942 = vadd.f32 0.0, %v1941
      %v1943 = vpop.f32.mrb[0].mxu0
      %v1944 = vpop.f32.mrb[0].mxu0
      %v1945 = vadd.f32 0.0, %v1944
      %v1946 = vpop.f32.mrb[0].mxu0
      %1947 = vmatprep.mubr.bf16.mxu0 0
      %1948 = vmatmul.mubr.bf16.gmra.mrb[0].mxu0 %v1835
      %v1949 = vpop.f32.mrb[0].mxu0
      %v1950 = vadd.f32 0.0, %v1949
      %v1951 = vpop.f32.mrb[0].mxu0
      %v1952 = vpop.f32.mrb[0].mxu0
      %v1953 = vadd.f32 0.0, %v1952
      %v1954 = vpop.f32.mrb[0].mxu0
      %1955 = vmatprep.mubr.bf16.mxu0 0
      %1956 = vmatmul.mubr.bf16.gmra.mrb[0].mxu0 %v1837
      %v1957 = vpop.f32.mrb[0].mxu0
      %v1958 = vadd.f32 0.0, %v1957
      %v1959 = vpop.f32.mrb[0].mxu0
      %v1960 = vpop.f32.mrb[0].mxu0
      %v1961 = vadd.f32 0.0, %v1960
      %v1962 = vpop.f32.mrb[0].mxu0
      %1963 = vdwg.mxu0
      %v1964 = vadd.f32 %v1795, %v1926
      %v1965 = vadd.f32 %v1796, %v1929
      %v1966 = vadd.f32 %v1797, %v1934
      %v1967 = vadd.f32 %v1798, %v1937
      %v1968 = vadd.f32 %v1799, %v1942
      %v1969 = vadd.f32 %v1800, %v1945
      %v1970 = vadd.f32 %v1801, %v1950
      %v1971 = vadd.f32 %v1802, %v1953
      %v1972 = vadd.f32 %v1803, %v1958
      %v1973 = vadd.f32 %v1804, %v1961
      %v1974 = vld [vmem:[%s2] sm:$0x1]
      %v1976 = vlaneseq
      %v1977 = vshrl.u32 %v1976, 7
      %v1978 = vsub.s32 0, %v1977
      %v1979 = vrot.slane %v1974, %v1978
      %v1981 = vadd.f32 %v1964, %v1979
      %v1982 = vadd.f32 %v1965, %v1979
      %v1983 = vadd.f32 %v1966, %v1979
      %v1984 = vadd.f32 %v1967, %v1979
      %v1985 = vadd.f32 %v1968, %v1979
      %v1986 = vadd.f32 %v1969, %v1979
      %v1987 = vadd.f32 %v1970, %v1979
      %v1988 = vadd.f32 %v1971, %v1979
      %v1989 = vadd.f32 %v1972, %v1979
      %v1990 = vadd.f32 %v1973, %v1979
      %v1991 = vpack.c.bf16 %v1982, %v1981
      %v1992 = vpack.c.bf16 %v1984, %v1983
      %v1993 = vpack.c.bf16 %v1986, %v1985
      %v1994 = vpack.c.bf16 %v1988, %v1987
      %v1995 = vpack.c.bf16 %v1990, %v1989
      %v2001 = vunpack.c.l.b16 %v1991
      %v2002 = vunpack.c.h.b16 %v1991
      %v2003 = vunpack.c.l.b16 %v1992
      %v2004 = vunpack.c.h.b16 %v1992
      %v2005 = vunpack.c.l.b16 %v1993
      %v2006 = vunpack.c.h.b16 %v1993
      %v2007 = vunpack.c.l.b16 %v1994
      %v2008 = vunpack.c.h.b16 %v1994
      %v2009 = vunpack.c.l.b16 %v1995
      %v2010 = vunpack.c.h.b16 %v1995
      %v2011 = vpack.c.b16 %v2001, %v2001
      %v2012 = vpack.c.b16 %v2002, %v2002
      %v2013 = vpack.c.b16 %v2003, %v2003
      %v2014 = vpack.c.b16 %v2004, %v2004
      %v2015 = vpack.c.b16 %v2005, %v2005
      %v2016 = vpack.c.b16 %v2006, %v2006
      %v2017 = vpack.c.b16 %v2007, %v2007
      %v2018 = vpack.c.b16 %v2008, %v2008
      %v2019 = vpack.c.b16 %v2009, %v2009
      %v2020 = vpack.c.b16 %v2010, %v2010
      %2031 = vst [vmem:[%s262] sm:$0xf] %v2011
      %2032 = vst [vmem:[%s262 + $0x4] sm:$0xf] %v2012
      %2033 = vst [vmem:[%s262 + $0x8] sm:$0xf] %v2013
      %2034 = vst [vmem:[%s262 + $0xc] sm:$0xf] %v2014
      %2035 = vst [vmem:[%s262 + $0x10] sm:$0xf] %v2015
      %2036 = vst [vmem:[%s262 + $0x14] sm:$0xf] %v2016
      %2037 = vst [vmem:[%s262 + $0x18] sm:$0xf] %v2017
      %2038 = vst [vmem:[%s262 + $0x1c] sm:$0xf] %v2018
      %2039 = vst [vmem:[%s262 + $0x20] sm:$0xf] %v2019
      %2040 = vst [vmem:[%s262 + $0x24] sm:$0xf] %v2020
      %v2041 = vld [vmem:[%s3] sm:$0xff]
      %v2042 = vld [vmem:[%s3 + $0x8] sm:$0xff]
      %v2043 = vld [vmem:[%s3 + $0x10] sm:$0xff]
      %v2044 = vld [vmem:[%s3 + $0x18] sm:$0xff]
      %v2045 = vld [vmem:[%s3 + $0x20] sm:$0xff]
      %v2046 = vld [vmem:[%s3 + $0x28] sm:$0xff]
      %v2047 = vld [vmem:[%s3 + $0x30] sm:$0xff]
      %v2048 = vld [vmem:[%s3 + $0x38] sm:$0xff]
      %v2049 = vld [vmem:[%s3 + $0x40] sm:$0xff]
      %v2050 = vld [vmem:[%s3 + $0x48] sm:$0xff]
      %2052 = vset.pattern.permute.xlu0 0
      %2053 = vperm.xlu0 %2052, %v2041
      %v2054 = vpop.permute.xlu0 %2053
      %2057 = vset.pattern.permute.xlu0 0
      %2058 = vperm.xlu0 %2057, %v2042
      %v2059 = vpop.permute.xlu0 %2058
      %2062 = vset.pattern.permute.xlu0 0
      %2063 = vperm.xlu0 %2062, %v2043
      %v2064 = vpop.permute.xlu0 %2063
      %2067 = vset.pattern.permute.xlu0 0
      %2068 = vperm.xlu0 %2067, %v2044
      %v2069 = vpop.permute.xlu0 %2068
      %2072 = vset.pattern.permute.xlu0 0
      %2073 = vperm.xlu0 %2072, %v2045
      %v2074 = vpop.permute.xlu0 %2073
      %2077 = vset.pattern.permute.xlu0 0
      %2078 = vperm.xlu0 %2077, %v2046
      %v2079 = vpop.permute.xlu0 %2078
      %2082 = vset.pattern.permute.xlu0 0
      %2083 = vperm.xlu0 %2082, %v2047
      %v2084 = vpop.permute.xlu0 %2083
      %2087 = vset.pattern.permute.xlu0 0
      %2088 = vperm.xlu0 %2087, %v2048
      %v2089 = vpop.permute.xlu0 %2088
      %2092 = vset.pattern.permute.xlu0 0
      %2093 = vperm.xlu0 %2092, %v2049
      %v2094 = vpop.permute.xlu0 %2093
      %2097 = vset.pattern.permute.xlu0 0
      %2098 = vperm.xlu0 %2097, %v2050
      %v2099 = vpop.permute.xlu0 %2098
      %v2101 = vmul.f32 %v1981, %v2054
      %v2102 = vmul.f32 %v1982, %v2059
      %v2103 = vmul.f32 %v1983, %v2064
      %v2104 = vmul.f32 %v1984, %v2069
      %v2105 = vmul.f32 %v1985, %v2074
      %v2106 = vmul.f32 %v1986, %v2079
      %v2107 = vmul.f32 %v1987, %v2084
      %v2108 = vmul.f32 %v1988, %v2089
      %v2109 = vmul.f32 %v1989, %v2094
      %v2110 = vmul.f32 %v1990, %v2099
      %v2111 = vadd.f32 %v2101, %v2102
      %v2112 = vadd.f32 %v2111, %v2103
      %v2113 = vadd.f32 %v2112, %v2104
      %v2114 = vadd.f32 %v2113, %v2105
      %v2115 = vadd.f32 %v2114, %v2106
      %v2116 = vadd.f32 %v2115, %v2107
      %v2117 = vadd.f32 %v2116, %v2108
      %v2118 = vadd.f32 %v2117, %v2109
      %v2119 = vadd.f32 %v2118, %v2110
      %v2120 = vrot.slane %v2119, 4
      %v2121 = vadd.f32 %v2119, %v2120
      %v2122 = vrot.slane %v2121, 2
      %v2123 = vadd.f32 %v2121, %v2122
      %v2124 = vrot.slane %v2123, 1
      %v2125 = vadd.f32 %v2123, %v2124
      %2126 = vst [vmem:[%s265] sm:$0x1] %v2125
      %v2127 = vmul.f32 %v2101, %v1981
      %v2128 = vmul.f32 %v2102, %v1982
      %v2129 = vmul.f32 %v2103, %v1983
      %v2130 = vmul.f32 %v2104, %v1984
      %v2131 = vmul.f32 %v2105, %v1985
      %v2132 = vmul.f32 %v2106, %v1986
      %v2133 = vmul.f32 %v2107, %v1987
      %v2134 = vmul.f32 %v2108, %v1988
      %v2135 = vmul.f32 %v2109, %v1989
      %v2136 = vmul.f32 %v2110, %v1990
      %v2137 = vadd.f32 %v2127, %v2128
      %v2138 = vadd.f32 %v2137, %v2129
      %v2139 = vadd.f32 %v2138, %v2130
      %v2140 = vadd.f32 %v2139, %v2131
      %v2141 = vadd.f32 %v2140, %v2132
      %v2142 = vadd.f32 %v2141, %v2133
      %v2143 = vadd.f32 %v2142, %v2134
      %v2144 = vadd.f32 %v2143, %v2135
      %v2145 = vadd.f32 %v2144, %v2136
      %v2146 = vrot.slane %v2145, 4
      %v2147 = vadd.f32 %v2145, %v2146
      %v2148 = vrot.slane %v2147, 2
      %v2149 = vadd.f32 %v2147, %v2148
      %v2150 = vrot.slane %v2149, 1
      %v2151 = vadd.f32 %v2149, %v2150
      %2152 = vst [vmem:[%s268] sm:$0x1] %v2151
      %p2153 = scmp.lt.s32.totalorder %s18, 1
      %s2154 = scalar_select %p2153, %s18, 1
      %s2155 = smul.addr %s2154, 10
      %s2156 = smul.addr %s2155, 4
      %s2157 = scalar_lea.vmem %s4, %s2156
      %p2158 = scmp.lt.s32.totalorder %s18, 1
      %s2159 = scalar_select %p2158, %s18, 1
      %s2160 = scalar_lea.vmem %s5, %s2159
      %p2161 = scmp.lt.s32.totalorder %s18, 1
      %s2162 = scalar_select %p2161, %s18, 1
      %s2163 = scalar_lea.vmem %s6, %s2162
      // Predicated region
      $region37: #{unet_up_forward.3} parent=35 // pred_check
        %p2164 = pneg %p125
      $region38: #{unet_up_forward.3} parent=35 // pred_check_branch
        %2166 = sbr.rel (%p2164) target = $region40
      $region39: #{unet_up_forward.3} parent=35 // pred_region
        _
      $region40: #{unet_up_forward.3} parent=35 // pred_fallthru
        _
      // Predicated region
      $region41: #{unet_up_forward.3} parent=35 // pred_check
        %p2167 = pneg %p151
      $region42: #{unet_up_forward.3} parent=35 // pred_check_branch
        %2169 = sbr.rel (%p2167) target = $region44
      $region43: #{unet_up_forward.3} parent=35 // pred_region
        _
      $region44: #{unet_up_forward.3} parent=35 // pred_fallthru
        _
      // Predicated region
      $region45: #{unet_up_forward.3} parent=35 // pred_check
        %p2170 = pneg %p177
      $region46: #{unet_up_forward.3} parent=35 // pred_check_branch
        %2172 = sbr.rel (%p2170) target = $region48
      $region47: #{unet_up_forward.3} parent=35 // pred_region
        _
      $region48: #{unet_up_forward.3} parent=35 // pred_fallthru
        _
    $region36: #{unet_up_forward.3} parent=5 // pred_fallthru
      _
    %p2173 = scmp.le.s32.totalorder 2, %s13
    // Predicated region
    $region49: #{unet_up_forward.3} parent=5 // pred_check
      %p2174 = pneg %p2173
    $region50: #{unet_up_forward.3} parent=5 // pred_check_branch
      %2176 = sbr.rel (%p2174) target = $region52
    $region51: #{unet_up_forward.3} parent=5 // pred_region
      %s2177 = ssub.s32 %s13, 2
      // Predicated region
      $region53: #{unet_up_forward.3} parent=51 // pred_check
        %p2178 = pneg %p131
      $region54: #{unet_up_forward.3} parent=51 // pred_check_branch
        %2180 = sbr.rel (%p2178) target = $region56
      $region55: #{unet_up_forward.3} parent=51 // pred_region
        %p2181 = scmp.lt.s32.totalorder %s19, 1
        %s2182 = scalar_select %p2181, %s19, 1
        %s2183 = smul.addr %s2182, 10
        %s2184 = smul.addr %s2183, 4
        %s2185 = scalar_lea.vmem %s4, %s2184
      $region56: #{unet_up_forward.3} parent=51 // pred_fallthru
        _
      // Predicated region
      $region57: #{unet_up_forward.3} parent=51 // pred_check
        %p2186 = pneg %p157
      $region58: #{unet_up_forward.3} parent=51 // pred_check_branch
        %2188 = sbr.rel (%p2186) target = $region60
      $region59: #{unet_up_forward.3} parent=51 // pred_region
        %p2189 = scmp.lt.s32.totalorder %s19, 1
        %s2190 = scalar_select %p2189, %s19, 1
        %s2191 = scalar_lea.vmem %s5, %s2190
      $region60: #{unet_up_forward.3} parent=51 // pred_fallthru
        _
      // Predicated region
      $region61: #{unet_up_forward.3} parent=51 // pred_check
        %p2192 = pneg %p183
      $region62: #{unet_up_forward.3} parent=51 // pred_check_branch
        %2194 = sbr.rel (%p2192) target = $region64
      $region63: #{unet_up_forward.3} parent=51 // pred_region
        %p2195 = scmp.lt.s32.totalorder %s19, 1
        %s2196 = scalar_select %p2195, %s19, 1
        %s2197 = scalar_lea.vmem %s6, %s2196
      $region64: #{unet_up_forward.3} parent=51 // pred_fallthru
        _
    $region52: #{unet_up_forward.3} parent=5 // pred_fallthru
      _
  $region6: #{unet_up_forward.3} parent=0 // loop_footer
    %s17 = sadd.s32 1, %s13
  $region7: #{unet_up_forward.3} parent=0 // loop_footer_branch
    %12 = sbr.rel target = $region3
  $region8: #{unet_up_forward.3} parent=0 // loop_exit
    _

// kernel: unet_up_forward.4
$region0: #{unet_up_forward.4}
  #allocation0 [shape = 'u32[]', space=smem, size = 0x4, offset = 0x4, fixed_abs, tag = 'smem constant byte address 0x4 - core index']
  #allocation1 [shape = 'u32[144,128]{1,0:T(1,128)}', space=vmem, size = 0x12000, scoped, tag = 'internal scratch']
  #allocation2 [shape = 'bf16[1,108,128]{2,1,0:T(8,128)(2,1)}', space=vmem, size = 0x7000, scoped, tag = 'scratch operand']
  %s0 = inlined_call_operand.vmem [shape: bf16[2,80,128], index: 0, kind: input, shape index: {}]
  %s1 = inlined_call_operand.vmem [shape: f32[1,128], index: 1, kind: input, shape index: {}]
  %s2 = inlined_call_operand.vmem [shape: f32[1,128], index: 2, kind: input, shape index: {}]
  %s3 = inlined_call_operand.vmem [shape: bf16[9,128,128], index: 3, kind: input, shape index: {}]
  %s4 = inlined_call_operand.vmem [shape: f32[1,128], index: 4, kind: input, shape index: {}]
  %s5 = inlined_call_operand.vmem [shape: f32[80,1], index: 5, kind: input, shape index: {}]
  %s6 = inlined_call_operand.vmem [shape: f32[2,80,128], index: 6, kind: output, shape index: {0}]
  %s7 = inlined_call_operand.vmem [shape: f32[2,1,128], index: 7, kind: output, shape index: {1}]
  %s8 = inlined_call_operand.vmem [shape: f32[2,1,128], index: 8, kind: output, shape index: {2}]
  %9 = xla_tuple %s6, %s7, %s8
  %s10 = sld [smem:[#allocation0]]
  $region73: #{unet_up_forward.4} parent=0
    _
  %s12 = ssub.s32 1, %s10
  %s13 = scalar_select 0, %s12, %s10
  loop: start=0, step=1, limit=4
  $region2: #{unet_up_forward.4} parent=0 // loop_pre_header
    _
  $region3: #{unet_up_forward.4} parent=0 // loop_header
    %s15 = sphi 0, %s19
    %p16 = scmp.ge.s32.totalorder %s15, 4
    %s25 = sphi 0, %s27
    %s28 = sphi 0, %s25
    %s29 = sphi 0, %s28
    %s45 = sphi 0, %s29
    %s49 = sphi 0, %s49
    %s51 = sphi 0, %s49
    %s52 = sphi 0, %s51
    %s66 = sphi 0, %s52
    %s70 = sphi 0, %s70
    %s72 = sphi 0, %s70
    %s73 = sphi 0, %s72
    %s87 = sphi 0, %s73
    %s91 = sphi 0, %s91
    %s93 = sphi 0, %s91
    %s94 = sphi 0, %s93
    %s108 = sphi 0, %s94
    %s112 = sphi 0, %s112
    %s114 = sphi 0, %s112
    %s115 = sphi 0, %s114
    %s129 = sphi 0, %s115
    %s133 = sphi 0, %s133
    %s135 = sphi 0, %s133
    %s136 = sphi 0, %s135
    %s150 = sphi 0, %s136
    %s156 = sphi 0, %s158
    %s159 = sphi 0, %s156
    %s160 = sphi 0, %s159
    %s176 = sphi 0, %s160
    %s182 = sphi 0, %s184
    %s185 = sphi 0, %s182
    %s186 = sphi 0, %s185
    %s202 = sphi 0, %s186
    %s208 = sphi 0, %s210
    %s211 = sphi 0, %s208
    %s212 = sphi 0, %s211
    %s228 = sphi 0, %s212
  $region4: #{unet_up_forward.4} parent=0 // loop_header_branch
    %18 = sbr.rel (%p16) target = $region8
  $region5: #{unet_up_forward.4} parent=0 // loop_body
    %s20 = ssub.s32 %s15, 1
    %s21 = ssub.s32 %s15, 2
    %s22 = sadd.s32 %s15, 1
    %s23 = ssub.s32 %s15, %s22
    %p24 = scmp.eq.s32.totalorder %s23, 0
    %s26 = sadd.s32 %s25, 1
    %s27 = scalar_select %p24, %s25, %s26
    %p30 = pneg %p24
    %p31 = scmp.eq.s32.totalorder %s15, 1
    %p32 = por %p30, %p31
    %p33 = scmp.ne.s32.totalorder %s25, %s28
    %p34 = scmp.eq.s32.totalorder %s15, 0
    %p35 = por %p33, %p34
    %p36 = scmp.ne.s32.totalorder %s25, %s28
    %p37 = scmp.eq.s32.totalorder %s20, 1
    %p38 = por %p36, %p37
    %p39 = scmp.ne.s32.totalorder %s28, %s29
    %p40 = scmp.eq.s32.totalorder %s20, 0
    %p41 = por %p39, %p40
    %p42 = scmp.ne.s32.totalorder %s28, %s29
    %p43 = scmp.eq.s32.totalorder %s21, 1
    %p44 = por %p42, %p43
    %p46 = scmp.ne.s32.totalorder %s29, %s45
    %p47 = scmp.eq.s32.totalorder %s21, 0
    %p48 = por %p46, %p47
    %s50 = sadd.s32 %s49, 1
    %p53 = scmp.eq.s32.totalorder %s15, 1
    %p54 = scmp.ne.s32.totalorder %s49, %s51
    %p55 = scmp.eq.s32.totalorder %s15, 0
    %p56 = por %p54, %p55
    %p57 = scmp.ne.s32.totalorder %s49, %s51
    %p58 = scmp.eq.s32.totalorder %s20, 1
    %p59 = por %p57, %p58
    %p60 = scmp.ne.s32.totalorder %s51, %s52
    %p61 = scmp.eq.s32.totalorder %s20, 0
    %p62 = por %p60, %p61
    %p63 = scmp.ne.s32.totalorder %s51, %s52
    %p64 = scmp.eq.s32.totalorder %s21, 1
    %p65 = por %p63, %p64
    %p67 = scmp.ne.s32.totalorder %s52, %s66
    %p68 = scmp.eq.s32.totalorder %s21, 0
    %p69 = por %p67, %p68
    %s71 = sadd.s32 %s70, 1
    %p74 = scmp.eq.s32.totalorder %s15, 1
    %p75 = scmp.ne.s32.totalorder %s70, %s72
    %p76 = scmp.eq.s32.totalorder %s15, 0
    %p77 = por %p75, %p76
    %p78 = scmp.ne.s32.totalorder %s70, %s72
    %p79 = scmp.eq.s32.totalorder %s20, 1
    %p80 = por %p78, %p79
    %p81 = scmp.ne.s32.totalorder %s72, %s73
    %p82 = scmp.eq.s32.totalorder %s20, 0
    %p83 = por %p81, %p82
    %p84 = scmp.ne.s32.totalorder %s72, %s73
    %p85 = scmp.eq.s32.totalorder %s21, 1
    %p86 = por %p84, %p85
    %p88 = scmp.ne.s32.totalorder %s73, %s87
    %p89 = scmp.eq.s32.totalorder %s21, 0
    %p90 = por %p88, %p89
    %s92 = sadd.s32 %s91, 1
    %p95 = scmp.eq.s32.totalorder %s15, 1
    %p96 = scmp.ne.s32.totalorder %s91, %s93
    %p97 = scmp.eq.s32.totalorder %s15, 0
    %p98 = por %p96, %p97
    %p99 = scmp.ne.s32.totalorder %s91, %s93
    %p100 = scmp.eq.s32.totalorder %s20, 1
    %p101 = por %p99, %p100
    %p102 = scmp.ne.s32.totalorder %s93, %s94
    %p103 = scmp.eq.s32.totalorder %s20, 0
    %p104 = por %p102, %p103
    %p105 = scmp.ne.s32.totalorder %s93, %s94
    %p106 = scmp.eq.s32.totalorder %s21, 1
    %p107 = por %p105, %p106
    %p109 = scmp.ne.s32.totalorder %s94, %s108
    %p110 = scmp.eq.s32.totalorder %s21, 0
    %p111 = por %p109, %p110
    %s113 = sadd.s32 %s112, 1
    %p116 = scmp.eq.s32.totalorder %s15, 1
    %p117 = scmp.ne.s32.totalorder %s112, %s114
    %p118 = scmp.eq.s32.totalorder %s15, 0
    %p119 = por %p117, %p118
    %p120 = scmp.ne.s32.totalorder %s112, %s114
    %p121 = scmp.eq.s32.totalorder %s20, 1
    %p122 = por %p120, %p121
    %p123 = scmp.ne.s32.totalorder %s114, %s115
    %p124 = scmp.eq.s32.totalorder %s20, 0
    %p125 = por %p123, %p124
    %p126 = scmp.ne.s32.totalorder %s114, %s115
    %p127 = scmp.eq.s32.totalorder %s21, 1
    %p128 = por %p126, %p127
    %p130 = scmp.ne.s32.totalorder %s115, %s129
    %p131 = scmp.eq.s32.totalorder %s21, 0
    %p132 = por %p130, %p131
    %s134 = sadd.s32 %s133, 1
    %p137 = scmp.eq.s32.totalorder %s15, 1
    %p138 = scmp.ne.s32.totalorder %s133, %s135
    %p139 = scmp.eq.s32.totalorder %s15, 0
    %p140 = por %p138, %p139
    %p141 = scmp.ne.s32.totalorder %s133, %s135
    %p142 = scmp.eq.s32.totalorder %s20, 1
    %p143 = por %p141, %p142
    %p144 = scmp.ne.s32.totalorder %s135, %s136
    %p145 = scmp.eq.s32.totalorder %s20, 0
    %p146 = por %p144, %p145
    %p147 = scmp.ne.s32.totalorder %s135, %s136
    %p148 = scmp.eq.s32.totalorder %s21, 1
    %p149 = por %p147, %p148
    %p151 = scmp.ne.s32.totalorder %s136, %s150
    %p152 = scmp.eq.s32.totalorder %s21, 0
    %p153 = por %p151, %p152
    %s154 = ssub.s32 %s15, %s22
    %p155 = scmp.eq.s32.totalorder %s154, 0
    %s157 = sadd.s32 %s156, 1
    %s158 = scalar_select %p155, %s156, %s157
    %p161 = pneg %p155
    %p162 = scmp.eq.s32.totalorder %s15, 1
    %p163 = por %p161, %p162
    %p164 = scmp.ne.s32.totalorder %s156, %s159
    %p165 = scmp.eq.s32.totalorder %s15, 0
    %p166 = por %p164, %p165
    %p167 = scmp.ne.s32.totalorder %s156, %s159
    %p168 = scmp.eq.s32.totalorder %s20, 1
    %p169 = por %p167, %p168
    %p170 = scmp.ne.s32.totalorder %s159, %s160
    %p171 = scmp.eq.s32.totalorder %s20, 0
    %p172 = por %p170, %p171
    %p173 = scmp.ne.s32.totalorder %s159, %s160
    %p174 = scmp.eq.s32.totalorder %s21, 1
    %p175 = por %p173, %p174
    %p177 = scmp.ne.s32.totalorder %s160, %s176
    %p178 = scmp.eq.s32.totalorder %s21, 0
    %p179 = por %p177, %p178
    %s180 = ssub.s32 %s15, %s22
    %p181 = scmp.eq.s32.totalorder %s180, 0
    %s183 = sadd.s32 %s182, 1
    %s184 = scalar_select %p181, %s182, %s183
    %p187 = pneg %p181
    %p188 = scmp.eq.s32.totalorder %s15, 1
    %p189 = por %p187, %p188
    %p190 = scmp.ne.s32.totalorder %s182, %s185
    %p191 = scmp.eq.s32.totalorder %s15, 0
    %p192 = por %p190, %p191
    %p193 = scmp.ne.s32.totalorder %s182, %s185
    %p194 = scmp.eq.s32.totalorder %s20, 1
    %p195 = por %p193, %p194
    %p196 = scmp.ne.s32.totalorder %s185, %s186
    %p197 = scmp.eq.s32.totalorder %s20, 0
    %p198 = por %p196, %p197
    %p199 = scmp.ne.s32.totalorder %s185, %s186
    %p200 = scmp.eq.s32.totalorder %s21, 1
    %p201 = por %p199, %p200
    %p203 = scmp.ne.s32.totalorder %s186, %s202
    %p204 = scmp.eq.s32.totalorder %s21, 0
    %p205 = por %p203, %p204
    %s206 = ssub.s32 %s15, %s22
    %p207 = scmp.eq.s32.totalorder %s206, 0
    %s209 = sadd.s32 %s208, 1
    %s210 = scalar_select %p207, %s208, %s209
    %p213 = pneg %p207
    %p214 = scmp.eq.s32.totalorder %s15, 1
    %p215 = por %p213, %p214
    %p216 = scmp.ne.s32.totalorder %s208, %s211
    %p217 = scmp.eq.s32.totalorder %s15, 0
    %p218 = por %p216, %p217
    %p219 = scmp.ne.s32.totalorder %s208, %s211
    %p220 = scmp.eq.s32.totalorder %s20, 1
    %p221 = por %p219, %p220
    %p222 = scmp.ne.s32.totalorder %s211, %s212
    %p223 = scmp.eq.s32.totalorder %s20, 0
    %p224 = por %p222, %p223
    %p225 = scmp.ne.s32.totalorder %s211, %s212
    %p226 = scmp.eq.s32.totalorder %s21, 1
    %p227 = por %p225, %p226
    %p229 = scmp.ne.s32.totalorder %s212, %s228
    %p230 = scmp.eq.s32.totalorder %s21, 0
    %p231 = por %p229, %p230
    %p232 = scmp.le.s32.totalorder 1, %s15
    %p233 = scmp.lt.s32.totalorder %s15, 3
    %p234 = pnand %p232, %p233
    %p235 = pneg %p234
    // Predicated region
    $region9: #{unet_up_forward.4} parent=5 // pred_check
      _
    $region10: #{unet_up_forward.4} parent=5 // pred_check_branch
      %237 = sbr.rel (%p234) target = $region12
    $region11: #{unet_up_forward.4} parent=5 // pred_region
      %s238 = ssub.s32 %s15, 1
      // Predicated region
      $region13: #{unet_up_forward.4} parent=11 // pred_check
        %p239 = pneg %p62
      $region14: #{unet_up_forward.4} parent=11 // pred_check_branch
        %241 = sbr.rel (%p239) target = $region16
      $region15: #{unet_up_forward.4} parent=11 // pred_region
        _
      $region16: #{unet_up_forward.4} parent=11 // pred_fallthru
        _
      // Predicated region
      $region17: #{unet_up_forward.4} parent=11 // pred_check
        %p242 = pneg %p83
      $region18: #{unet_up_forward.4} parent=11 // pred_check_branch
        %244 = sbr.rel (%p242) target = $region20
      $region19: #{unet_up_forward.4} parent=11 // pred_region
        _
      $region20: #{unet_up_forward.4} parent=11 // pred_fallthru
        _
      // Predicated region
      $region21: #{unet_up_forward.4} parent=11 // pred_check
        %p245 = pneg %p104
      $region22: #{unet_up_forward.4} parent=11 // pred_check_branch
        %247 = sbr.rel (%p245) target = $region24
      $region23: #{unet_up_forward.4} parent=11 // pred_region
        _
      $region24: #{unet_up_forward.4} parent=11 // pred_fallthru
        _
      // Predicated region
      $region25: #{unet_up_forward.4} parent=11 // pred_check
        %p248 = pneg %p125
      $region26: #{unet_up_forward.4} parent=11 // pred_check_branch
        %250 = sbr.rel (%p248) target = $region28
      $region27: #{unet_up_forward.4} parent=11 // pred_region
        _
      $region28: #{unet_up_forward.4} parent=11 // pred_fallthru
        _
      // Predicated region
      $region29: #{unet_up_forward.4} parent=11 // pred_check
        %p251 = pneg %p146
      $region30: #{unet_up_forward.4} parent=11 // pred_check_branch
        %253 = sbr.rel (%p251) target = $region32
      $region31: #{unet_up_forward.4} parent=11 // pred_region
        _
      $region32: #{unet_up_forward.4} parent=11 // pred_fallthru
        _
    $region12: #{unet_up_forward.4} parent=5 // pred_fallthru
      _
    %p254 = scmp.lt.s32.totalorder %s15, 2
    // Predicated region
    $region33: #{unet_up_forward.4} parent=5 // pred_check
      %p255 = pneg %p254
    $region34: #{unet_up_forward.4} parent=5 // pred_check_branch
      %257 = sbr.rel (%p255) target = $region36
    $region35: #{unet_up_forward.4} parent=5 // pred_region
      // Predicated region
      $region37: #{unet_up_forward.4} parent=35 // pred_check
        %p258 = pneg %p35
      $region38: #{unet_up_forward.4} parent=35 // pred_check_branch
        %260 = sbr.rel (%p258) target = $region40
      $region39: #{unet_up_forward.4} parent=35 // pred_region
        %p261 = scmp.lt.s32.totalorder %s15, 1
        %s262 = scalar_select %p261, %s15, 1
        %s263 = smul.addr %s262, 10
        %s264 = smul.addr %s263, 4
        %s265 = scalar_lea.vmem %s0, %s264
      $region40: #{unet_up_forward.4} parent=35 // pred_fallthru
        _
    $region36: #{unet_up_forward.4} parent=5 // pred_fallthru
      _
    %p266 = scmp.le.s32.totalorder 1, %s15
    %p267 = scmp.lt.s32.totalorder %s15, 3
    %p268 = pnand %p266, %p267
    %p269 = pneg %p268
    // Predicated region
    $region41: #{unet_up_forward.4} parent=5 // pred_check
      _
    $region42: #{unet_up_forward.4} parent=5 // pred_check_branch
      %271 = sbr.rel (%p268) target = $region44
    $region43: #{unet_up_forward.4} parent=5 // pred_region
      %s272 = ssub.s32 %s15, 1
      %p273 = scmp.lt.s32.totalorder %s20, 1
      %s274 = scalar_select %p273, %s20, 1
      %s275 = smul.addr %s274, 10
      %s276 = smul.addr %s275, 4
      %s277 = scalar_lea.vmem %s0, %s276
      %p278 = pneg %p41
      %p279 = pneg %p38
      %p280 = pneg %p62
      %p281 = pneg %p59
      %p282 = pneg %p83
      %p283 = pneg %p80
      %p284 = pneg %p104
      %p285 = pneg %p101
      %p286 = pneg %p125
      %p287 = pneg %p122
      %p288 = pneg %p146
      %p289 = pneg %p143
      %p290 = pneg %p172
      %p291 = pneg %p169
      %p292 = scmp.lt.s32.totalorder %s20, 1
      %s293 = scalar_select %p292, %s20, 1
      %s294 = smul.addr %s293, 10
      %s295 = smul.addr %s294, 8
      %s296 = scalar_lea.vmem %s6, %s295
      %p297 = pneg %p198
      %p298 = pneg %p195
      %p299 = scmp.lt.s32.totalorder %s20, 1
      %s300 = scalar_select %p299, %s20, 1
      %s301 = scalar_lea.vmem %s7, %s300
      %p302 = pneg %p224
      %p303 = pneg %p221
      %p304 = scmp.lt.s32.totalorder %s20, 1
      %s305 = scalar_select %p304, %s20, 1
      %s306 = scalar_lea.vmem %s8, %s305
      %p307 = scmp.lt.s32.totalorder %s20, 1
      %s308 = scalar_select %p307, %s20, 1
      %s309 = smul.addr %s308, 10
      %s310 = smul.addr %s309, 4
      %s311 = scalar_lea.vmem %s0, %s310
      %p312 = scmp.lt.s32.totalorder %s20, 1
      %s313 = scalar_select %p312, %s20, 1
      %s314 = smul.addr %s313, 10
      %s315 = smul.addr %s314, 8
      %s316 = scalar_lea.vmem %s6, %s315
      %p317 = scmp.lt.s32.totalorder %s20, 1
      %s318 = scalar_select %p317, %s20, 1
      %s319 = scalar_lea.vmem %s7, %s318
      %p320 = scmp.lt.s32.totalorder %s20, 1
      %s321 = scalar_select %p320, %s20, 1
      %s322 = scalar_lea.vmem %s8, %s321
      %324 = vst [vmem:[#allocation2] sm:$0xf] 0
      %vm325 = vcmask 1041408
      %vm326 = vsmask.f32 1280
      %vm327 = vmand %vm325, %vm326
      %v328 = vld [vmem:[#allocation2 + $0x4] sm:$0x3]
      %v329 = vsel %vm327, 0, %v328
      %330 = vst [vmem:[#allocation2 + $0x4] sm:$0x3] %v329
      %vm331 = vcmask 1043457
      %vm332 = vsmask.f32 7942
      %vm333 = vmand %vm331, %vm332
      %v334 = vld [vmem:[#allocation2 + $0x2c] sm:$0xe]
      %v335 = vsel %vm333, 0, %v334
      %336 = vst [vmem:[#allocation2 + $0x2c] sm:$0xe] %v335
      %337 = vst [vmem:[#allocation2 + $0x30] sm:$0xf] 0
      %338 = vst [vmem:[#allocation2 + $0x34] sm:$0x3] 0
      %v339 = vld [vmem:[%s311] sm:$0xf]
      %v340 = vld [vmem:[%s311 + $0x4] sm:$0xf]
      %v341 = vld [vmem:[%s311 + $0x8] sm:$0xf]
      %v342 = vld [vmem:[%s311 + $0xc] sm:$0xf]
      %v343 = vld [vmem:[%s311 + $0x10] sm:$0xf]
      %v344 = vld [vmem:[%s311 + $0x14] sm:$0xf]
      %v345 = vld [vmem:[%s311 + $0x18] sm:$0xf]
      %v346 = vld [vmem:[%s311 + $0x1c] sm:$0xf]
      %v347 = vld [vmem:[%s311 + $0x20] sm:$0xf]
      %v348 = vld [vmem:[%s311 + $0x24] sm:$0xf]
      %v349 = vunpack.c.l.bf16 %v339
      %v350 = vunpack.c.l.bf16 %v340
      %v351 = vunpack.c.l.bf16 %v341
      %v352 = vunpack.c.l.bf16 %v342
      %v353 = vunpack.c.l.bf16 %v343
      %v354 = vunpack.c.l.bf16 %v344
      %v355 = vunpack.c.l.bf16 %v345
      %v356 = vunpack.c.l.bf16 %v346
      %v357 = vunpack.c.l.bf16 %v347
      %v358 = vunpack.c.l.bf16 %v348
      %v359 = vld [vmem:[%s1] sm:$0x1]
      %v361 = vlaneseq
      %v362 = vshrl.u32 %v361, 7
      %v363 = vsub.s32 0, %v362
      %v364 = vrot.slane %v359, %v363
      %v366 = vmul.f32 %v349, %v364
      %v367 = vmul.f32 %v350, %v364
      %v368 = vmul.f32 %v351, %v364
      %v369 = vmul.f32 %v352, %v364
      %v370 = vmul.f32 %v353, %v364
      %v371 = vmul.f32 %v354, %v364
      %v372 = vmul.f32 %v355, %v364
      %v373 = vmul.f32 %v356, %v364
      %v374 = vmul.f32 %v357, %v364
      %v375 = vmul.f32 %v358, %v364
      %v376 = vld [vmem:[%s2] sm:$0x1]
      %v378 = vlaneseq
      %v379 = vshrl.u32 %v378, 7
      %v380 = vsub.s32 0, %v379
      %v381 = vrot.slane %v376, %v380
      %v383 = vadd.f32 %v366, %v381
      %v384 = vadd.f32 %v367, %v381
      %v385 = vadd.f32 %v368, %v381
      %v386 = vadd.f32 %v369, %v381
      %v387 = vadd.f32 %v370, %v381
      %v388 = vadd.f32 %v371, %v381
      %v389 = vadd.f32 %v372, %v381
      %v390 = vadd.f32 %v373, %v381
      %v391 = vadd.f32 %v374, %v381
      %v392 = vadd.f32 %v375, %v381
      %v393 = vmax.f32 %v383, 0.0
      %v394 = vmax.f32 %v384, 0.0
      %v395 = vmax.f32 %v385, 0.0
      %v396 = vmax.f32 %v386, 0.0
      %v397 = vmax.f32 %v387, 0.0
      %v398 = vmax.f32 %v388, 0.0
      %v399 = vmax.f32 %v389, 0.0
      %v400 = vmax.f32 %v390, 0.0
      %v401 = vmax.f32 %v391, 0.0
      %v402 = vmax.f32 %v392, 0.0
      %v403 = vld [vmem:[%s5] sm:$0xff]
      %v404 = vld [vmem:[%s5 + $0x8] sm:$0xff]
      %v405 = vld [vmem:[%s5 + $0x10] sm:$0xff]
      %v406 = vld [vmem:[%s5 + $0x18] sm:$0xff]
      %v407 = vld [vmem:[%s5 + $0x20] sm:$0xff]
      %v408 = vld [vmem:[%s5 + $0x28] sm:$0xff]
      %v409 = vld [vmem:[%s5 + $0x30] sm:$0xff]
      %v410 = vld [vmem:[%s5 + $0x38] sm:$0xff]
      %v411 = vld [vmem:[%s5 + $0x40] sm:$0xff]
      %v412 = vld [vmem:[%s5 + $0x48] sm:$0xff]
      %414 = vset.pattern.permute.xlu0 0
      %415 = vperm.xlu0 %414, %v403
      %v416 = vpop.permute.xlu0 %415
      %419 = vset.pattern.permute.xlu0 0
      %420 = vperm.xlu0 %419, %v404
      %v421 = vpop.permute.xlu0 %420
      %424 = vset.pattern.permute.xlu0 0
      %425 = vperm.xlu0 %424, %v405
      %v426 = vpop.permute.xlu0 %425
      %429 = vset.pattern.permute.xlu0 0
      %430 = vperm.xlu0 %429, %v406
      %v431 = vpop.permute.xlu0 %430
      %434 = vset.pattern.permute.xlu0 0
      %435 = vperm.xlu0 %434, %v407
      %v436 = vpop.permute.xlu0 %435
      %439 = vset.pattern.permute.xlu0 0
      %440 = vperm.xlu0 %439, %v408
      %v441 = vpop.permute.xlu0 %440
      %444 = vset.pattern.permute.xlu0 0
      %445 = vperm.xlu0 %444, %v409
      %v446 = vpop.permute.xlu0 %445
      %449 = vset.pattern.permute.xlu0 0
      %450 = vperm.xlu0 %449, %v410
      %v451 = vpop.permute.xlu0 %450
      %454 = vset.pattern.permute.xlu0 0
      %455 = vperm.xlu0 %454, %v411
      %v456 = vpop.permute.xlu0 %455
      %459 = vset.pattern.permute.xlu0 0
      %460 = vperm.xlu0 %459, %v412
      %v461 = vpop.permute.xlu0 %460
      %v463 = vmul.f32 %v393, %v416
      %v464 = vmul.f32 %v394, %v421
      %v465 = vmul.f32 %v395, %v426
      %v466 = vmul.f32 %v396, %v431
      %v467 = vmul.f32 %v397, %v436
      %v468 = vmul.f32 %v398, %v441
      %v469 = vmul.f32 %v399, %v446
      %v470 = vmul.f32 %v400, %v451
      %v471 = vmul.f32 %v401, %v456
      %v472 = vmul.f32 %v402, %v461
      %v473 = vpack.c.bf16 %v464, %v463
      %v474 = vpack.c.bf16 %v466, %v465
      %v475 = vpack.c.bf16 %v468, %v467
      %v476 = vpack.c.bf16 %v470, %v469
      %v477 = vpack.c.bf16 %v472, %v471
      %v483 = vunpack.c.l.b16 %v473
      %v484 = vunpack.c.h.b16 %v473
      %v485 = vunpack.c.l.b16 %v474
      %v486 = vunpack.c.h.b16 %v474
      %v487 = vunpack.c.l.b16 %v475
      %v488 = vunpack.c.h.b16 %v475
      %v489 = vunpack.c.l.b16 %v476
      %v490 = vunpack.c.h.b16 %v476
      %v491 = vunpack.c.l.b16 %v477
      %v492 = vunpack.c.h.b16 %v477
      %v493 = vpack.c.b16 %v483, %v483
      %v494 = vpack.c.b16 %v484, %v484
      %v495 = vpack.c.b16 %v485, %v485
      %v496 = vpack.c.b16 %v486, %v486
      %v497 = vpack.c.b16 %v487, %v487
      %v498 = vpack.c.b16 %v488, %v488
      %v499 = vpack.c.b16 %v489, %v489
      %v500 = vpack.c.b16 %v490, %v490
      %v501 = vpack.c.b16 %v491, %v491
      %v502 = vpack.c.b16 %v492, %v492
      %vm503 = vsmask.f32 5392
      %vm504 = vmor %vm326, %vm503
      %v506 = vshrl.u32 %v493, 16
      %v508 = vrot.slane %v506, 6
      %v509 = vshll.u32 %v493, 16
      %v511 = vrot.slane %v509, 7
      %v512 = vor.u32 %v508, %v511
      %v513 = vrot.slane %v512, 4
      %v515 = vshrl.u32 %v494, 16
      %v517 = vrot.slane %v515, 6
      %v518 = vshll.u32 %v494, 16
      %v520 = vrot.slane %v518, 7
      %v521 = vor.u32 %v517, %v520
      %v522 = vsel %vm504, %v513, %v521
      %v523 = vrot.slane %v521, 4
      %v525 = vshrl.u32 %v495, 16
      %v527 = vrot.slane %v525, 6
      %v528 = vshll.u32 %v495, 16
      %v530 = vrot.slane %v528, 7
      %v531 = vor.u32 %v527, %v530
      %v532 = vsel %vm504, %v523, %v531
      %v533 = vrot.slane %v531, 4
      %v535 = vshrl.u32 %v496, 16
      %v537 = vrot.slane %v535, 6
      %v538 = vshll.u32 %v496, 16
      %v540 = vrot.slane %v538, 7
      %v541 = vor.u32 %v537, %v540
      %v542 = vsel %vm504, %v533, %v541
      %v543 = vrot.slane %v541, 4
      %v545 = vshrl.u32 %v497, 16
      %v547 = vrot.slane %v545, 6
      %v548 = vshll.u32 %v497, 16
      %v550 = vrot.slane %v548, 7
      %v551 = vor.u32 %v547, %v550
      %v552 = vsel %vm504, %v543, %v551
      %v553 = vrot.slane %v551, 4
      %v555 = vshrl.u32 %v498, 16
      %v557 = vrot.slane %v555, 6
      %v558 = vshll.u32 %v498, 16
      %v560 = vrot.slane %v558, 7
      %v561 = vor.u32 %v557, %v560
      %v562 = vsel %vm504, %v553, %v561
      %v563 = vrot.slane %v561, 4
      %v565 = vshrl.u32 %v499, 16
      %v567 = vrot.slane %v565, 6
      %v568 = vshll.u32 %v499, 16
      %v570 = vrot.slane %v568, 7
      %v571 = vor.u32 %v567, %v570
      %v572 = vsel %vm504, %v563, %v571
      %v573 = vrot.slane %v571, 4
      %v575 = vshrl.u32 %v500, 16
      %v577 = vrot.slane %v575, 6
      %v578 = vshll.u32 %v500, 16
      %v580 = vrot.slane %v578, 7
      %v581 = vor.u32 %v577, %v580
      %v582 = vsel %vm504, %v573, %v581
      %v583 = vrot.slane %v581, 4
      %v585 = vshrl.u32 %v501, 16
      %v587 = vrot.slane %v585, 6
      %v588 = vshll.u32 %v501, 16
      %v590 = vrot.slane %v588, 7
      %v591 = vor.u32 %v587, %v590
      %v592 = vsel %vm504, %v583, %v591
      %v593 = vrot.slane %v591, 4
      %v595 = vshrl.u32 %v502, 16
      %v597 = vrot.slane %v595, 6
      %v598 = vshll.u32 %v502, 16
      %v600 = vrot.slane %v598, 7
      %v601 = vor.u32 %v597, %v600
      %v602 = vsel %vm504, %v593, %v601
      %v603 = vrot.slane %v601, 4
      %v615 = vld [vmem:[#allocation2 + $0x4] sm:$0xe]
      %v616 = vsel %vm333, %v512, %v615
      %617 = vst [vmem:[#allocation2 + $0x4] sm:$0xe] %v616
      %618 = vst [vmem:[#allocation2 + $0x8] sm:$0xf] %v522
      %619 = vst [vmem:[#allocation2 + $0xc] sm:$0xf] %v532
      %620 = vst [vmem:[#allocation2 + $0x10] sm:$0xf] %v542
      %621 = vst [vmem:[#allocation2 + $0x14] sm:$0xf] %v552
      %622 = vst [vmem:[#allocation2 + $0x18] sm:$0xf] %v562
      %623 = vst [vmem:[#allocation2 + $0x1c] sm:$0xf] %v572
      %624 = vst [vmem:[#allocation2 + $0x20] sm:$0xf] %v582
      %625 = vst [vmem:[#allocation2 + $0x24] sm:$0xf] %v592
      %626 = vst [vmem:[#allocation2 + $0x28] sm:$0xf] %v602
      %v627 = vld [vmem:[#allocation2 + $0x2c] sm:$0x3]
      %v628 = vsel %vm327, %v603, %v627
      %629 = vst [vmem:[#allocation2 + $0x2c] sm:$0x3] %v628
      %v630 = vld [vmem:[#allocation2] sm:$0xf]
      %v631 = vld [vmem:[#allocation2 + $0x4] sm:$0xf]
      %v632 = vld [vmem:[#allocation2 + $0x8] sm:$0xf]
      %v633 = vld [vmem:[#allocation2 + $0xc] sm:$0xf]
      %v634 = vld [vmem:[#allocation2 + $0x10] sm:$0xf]
      %v635 = vld [vmem:[#allocation2 + $0x14] sm:$0xf]
      %v636 = vld [vmem:[#allocation2 + $0x18] sm:$0xf]
      %v637 = vld [vmem:[#allocation2 + $0x1c] sm:$0xf]
      %v638 = vld [vmem:[#allocation2 + $0x20] sm:$0xf]
      %v639 = vld [vmem:[#allocation2 + $0x24] sm:$0xf]
      %v640 = vld [vmem:[%s3] sm:$0xf]
      %v641 = vld [vmem:[%s3 + $0x4] sm:$0xf]
      %v642 = vld [vmem:[%s3 + $0x8] sm:$0xf]
      %v643 = vld [vmem:[%s3 + $0xc] sm:$0xf]
      %v644 = vld [vmem:[%s3 + $0x10] sm:$0xf]
      %v645 = vld [vmem:[%s3 + $0x14] sm:$0xf]
      %v646 = vld [vmem:[%s3 + $0x18] sm:$0xf]
      %v647 = vld [vmem:[%s3 + $0x1c] sm:$0xf]
      %v648 = vld [vmem:[%s3 + $0x20] sm:$0xf]
      %v649 = vld [vmem:[%s3 + $0x24] sm:$0xf]
      %v650 = vld [vmem:[%s3 + $0x28] sm:$0xf]
      %v651 = vld [vmem:[%s3 + $0x2c] sm:$0xf]
      %v652 = vld [vmem:[%s3 + $0x30] sm:$0xf]
      %v653 = vld [vmem:[%s3 + $0x34] sm:$0xf]
      %v654 = vld [vmem:[%s3 + $0x38] sm:$0xf]
      %v655 = vld [vmem:[%s3 + $0x3c] sm:$0xf]
      %v656 = vld [vmem:[#allocation2 + $0x28] sm:$0x1]
      %s657 = scalar_lea.vmem %s3, 64
      %v658 = vld [vmem:[%s657] sm:$0xf]
      %v659 = vld [vmem:[%s657 + $0x4] sm:$0xf]
      %v660 = vld [vmem:[%s657 + $0x8] sm:$0xf]
      %v661 = vld [vmem:[%s657 + $0xc] sm:$0xf]
      %v662 = vld [vmem:[%s657 + $0x10] sm:$0xf]
      %v663 = vld [vmem:[%s657 + $0x14] sm:$0xf]
      %v664 = vld [vmem:[%s657 + $0x18] sm:$0xf]
      %v665 = vld [vmem:[%s657 + $0x1c] sm:$0xf]
      %v666 = vld [vmem:[%s657 + $0x20] sm:$0xf]
      %v667 = vld [vmem:[%s657 + $0x24] sm:$0xf]
      %v668 = vld [vmem:[%s657 + $0x28] sm:$0xf]
      %v669 = vld [vmem:[%s657 + $0x2c] sm:$0xf]
      %v670 = vld [vmem:[%s657 + $0x30] sm:$0xf]
      %v671 = vld [vmem:[%s657 + $0x34] sm:$0xf]
      %v672 = vld [vmem:[%s657 + $0x38] sm:$0xf]
      %v673 = vld [vmem:[%s657 + $0x3c] sm:$0xf]
      %v685 = vunpack.c.l.b16 %v630
      %v686 = vunpack.c.l.b16 %v631
      %v687 = vunpack.c.l.b16 %v632
      %v688 = vunpack.c.l.b16 %v633
      %v689 = vunpack.c.l.b16 %v634
      %v690 = vunpack.c.l.b16 %v635
      %v691 = vunpack.c.l.b16 %v636
      %v692 = vunpack.c.l.b16 %v637
      %v693 = vunpack.c.l.b16 %v638
      %v694 = vunpack.c.l.b16 %v639
      %v695 = vunpack.c.l.b16 %v656
      %v696 = vpack.c.b16 %v686, %v685
      %v697 = vpack.c.b16 %v688, %v687
      %v698 = vpack.c.b16 %v690, %v689
      %v699 = vpack.c.b16 %v692, %v691
      %v700 = vpack.c.b16 %v694, %v693
      %v701 = vpack.c.b16 %v695, %v695
      %vm702 = vsmask.f32 7424
      %v704 = vshrl.u32 %v696, 16
      %v706 = vshll.u32 %v696, 16
      %v708 = vrot.slane %v706, 1
      %v709 = vor.u32 %v704, %v708
      %v711 = vshll.u32 %v697, 16
      %v713 = vrot.slane %v711, 1
      %v714 = vsel %vm702, %v709, %v713
      %v715 = vshrl.u32 %v697, 16
      %v717 = vor.u32 %v715, %v713
      %v719 = vshll.u32 %v698, 16
      %v721 = vrot.slane %v719, 1
      %v722 = vsel %vm702, %v717, %v721
      %v723 = vshrl.u32 %v698, 16
      %v725 = vor.u32 %v723, %v721
      %v727 = vshll.u32 %v699, 16
      %v729 = vrot.slane %v727, 1
      %v730 = vsel %vm702, %v725, %v729
      %v731 = vshrl.u32 %v699, 16
      %v733 = vor.u32 %v731, %v729
      %v735 = vshll.u32 %v700, 16
      %v737 = vrot.slane %v735, 1
      %v738 = vsel %vm702, %v733, %v737
      %v739 = vshrl.u32 %v700, 16
      %v741 = vor.u32 %v739, %v737
      %v743 = vshll.u32 %v701, 16
      %v745 = vrot.slane %v743, 1
      %v746 = vsel %vm702, %v741, %v745
      %v768 = vunpack.c.l.b16 %v658
      %v769 = vunpack.c.l.b16 %v659
      %v770 = vunpack.c.l.b16 %v660
      %v771 = vunpack.c.l.b16 %v661
      %v772 = vunpack.c.l.b16 %v662
      %v773 = vunpack.c.l.b16 %v663
      %v774 = vunpack.c.l.b16 %v664
      %v775 = vunpack.c.l.b16 %v665
      %v776 = vunpack.c.l.b16 %v666
      %v777 = vunpack.c.l.b16 %v667
      %v778 = vunpack.c.l.b16 %v668
      %v779 = vunpack.c.l.b16 %v669
      %v780 = vunpack.c.l.b16 %v670
      %v781 = vunpack.c.l.b16 %v671
      %v782 = vunpack.c.l.b16 %v672
      %v783 = vunpack.c.l.b16 %v673
      %v784 = vpack.c.b16 %v769, %v768
      %v785 = vpack.c.b16 %v771, %v770
      %v786 = vpack.c.b16 %v773, %v772
      %v787 = vpack.c.b16 %v775, %v774
      %v788 = vpack.c.b16 %v777, %v776
      %v789 = vpack.c.b16 %v779, %v778
      %v790 = vpack.c.b16 %v781, %v780
      %v791 = vpack.c.b16 %v783, %v782
      %800 = vmatprep.subr.bf16.mxu0 0
      %801 = vmatpush1.bf16.msra.mxu0 %v784
      %802 = vmatprep.subr.bf16.mxu0 0
      %803 = vmatpush1.bf16.msra.mxu0 %v785
      %804 = vmatprep.subr.bf16.mxu0 0
      %805 = vmatpush1.bf16.msra.mxu0 %v786
      %806 = vmatprep.subr.bf16.mxu0 0
      %807 = vmatpush1.bf16.msra.mxu0 %v787
      %808 = vmatprep.subr.bf16.mxu0 0
      %809 = vmatpush1.bf16.msra.mxu0 %v788
      %810 = vmatprep.subr.bf16.mxu0 0
      %811 = vmatpush1.bf16.msra.mxu0 %v789
      %812 = vmatprep.subr.bf16.mxu0 0
      %813 = vmatpush1.bf16.msra.mxu0 %v790
      %814 = vmatprep.subr.bf16.mxu0 0
      %815 = vmatpush1.bf16.msra.mxu0 %v791
      %816 = vmatprep.subr.bf16.mxu0 0
      %817 = vmatpush1.bf16.msra.mxu0 0
      %818 = vmatprep.subr.bf16.mxu0 0
      %819 = vmatpush1.bf16.msra.mxu0 0
      %820 = vmatprep.subr.bf16.mxu0 0
      %821 = vmatpush1.bf16.msra.mxu0 0
      %822 = vmatprep.subr.bf16.mxu0 0
      %823 = vmatpush1.bf16.msra.mxu0 0
      %824 = vmatprep.subr.bf16.mxu0 0
      %825 = vmatpush1.bf16.msra.mxu0 0
      %826 = vmatprep.subr.bf16.mxu0 0
      %827 = vmatpush1.bf16.msra.mxu0 0
      %828 = vmatprep.subr.bf16.mxu0 0
      %829 = vmatpush1.bf16.msra.mxu0 0
      %830 = vmatprep.subr.bf16.mxu0 0
      %831 = vmatpush1.bf16.msra.mxu0 0
      %832 = vmatprep.mubr.bf16.mxu0 0
      %833 = vmatmul.mubr.bf16.gmra.mrb[0].mxu0 %v714
      %v834 = vpop.f32.mrb[0].mxu0
      %v835 = vadd.f32 0.0, %v834
      %v836 = vpop.f32.mrb[0].mxu0
      %v837 = vpop.f32.mrb[0].mxu0
      %v838 = vadd.f32 0.0, %v837
      %v839 = vpop.f32.mrb[0].mxu0
      %840 = vmatprep.mubr.bf16.mxu0 0
      %841 = vmatmul.mubr.bf16.gmra.mrb[0].mxu0 %v722
      %v842 = vpop.f32.mrb[0].mxu0
      %v843 = vadd.f32 0.0, %v842
      %v844 = vpop.f32.mrb[0].mxu0
      %v845 = vpop.f32.mrb[0].mxu0
      %v846 = vadd.f32 0.0, %v845
      %v847 = vpop.f32.mrb[0].mxu0
      %848 = vmatprep.mubr.bf16.mxu0 0
      %849 = vmatmul.mubr.bf16.gmra.mrb[0].mxu0 %v730
      %v850 = vpop.f32.mrb[0].mxu0
      %v851 = vadd.f32 0.0, %v850
      %v852 = vpop.f32.mrb[0].mxu0
      %v853 = vpop.f32.mrb[0].mxu0
      %v854 = vadd.f32 0.0, %v853
      %v855 = vpop.f32.mrb[0].mxu0
      %856 = vmatprep.mubr.bf16.mxu0 0
      %857 = vmatmul.mubr.bf16.gmra.mrb[0].mxu0 %v738
      %v858 = vpop.f32.mrb[0].mxu0
      %v859 = vadd.f32 0.0, %v858
      %v860 = vpop.f32.mrb[0].mxu0
      %v861 = vpop.f32.mrb[0].mxu0
      %v862 = vadd.f32 0.0, %v861
      %v863 = vpop.f32.mrb[0].mxu0
      %864 = vmatprep.mubr.bf16.mxu0 0
      %865 = vmatmul.mubr.bf16.gmra.mrb[0].mxu0 %v746
      %v866 = vpop.f32.mrb[0].mxu0
      %v867 = vadd.f32 0.0, %v866
      %v868 = vpop.f32.mrb[0].mxu0
      %v869 = vpop.f32.mrb[0].mxu0
      %v870 = vadd.f32 0.0, %v869
      %v871 = vpop.f32.mrb[0].mxu0
      %872 = vdwg.mxu0
      %v894 = vunpack.c.l.b16 %v640
      %v895 = vunpack.c.l.b16 %v641
      %v896 = vunpack.c.l.b16 %v642
      %v897 = vunpack.c.l.b16 %v643
      %v898 = vunpack.c.l.b16 %v644
      %v899 = vunpack.c.l.b16 %v645
      %v900 = vunpack.c.l.b16 %v646
      %v901 = vunpack.c.l.b16 %v647
      %v902 = vunpack.c.l.b16 %v648
      %v903 = vunpack.c.l.b16 %v649
      %v904 = vunpack.c.l.b16 %v650
      %v905 = vunpack.c.l.b16 %v651
      %v906 = vunpack.c.l.b16 %v652
      %v907 = vunpack.c.l.b16 %v653
      %v908 = vunpack.c.l.b16 %v654
      %v909 = vunpack.c.l.b16 %v655
      %v910 = vpack.c.b16 %v895, %v894
      %v911 = vpack.c.b16 %v897, %v896
      %v912 = vpack.c.b16 %v899, %v898
      %v913 = vpack.c.b16 %v901, %v900
      %v914 = vpack.c.b16 %v903, %v902
      %v915 = vpack.c.b16 %v905, %v904
      %v916 = vpack.c.b16 %v907, %v906
      %v917 = vpack.c.b16 %v909, %v908
      %926 = vmatprep.subr.bf16.mxu0 0
      %927 = vmatpush1.bf16.msra.mxu0 %v910
      %928 = vmatprep.subr.bf16.mxu0 0
      %929 = vmatpush1.bf16.msra.mxu0 %v911
      %930 = vmatprep.subr.bf16.mxu0 0
      %931 = vmatpush1.bf16.msra.mxu0 %v912
      %932 = vmatprep.subr.bf16.mxu0 0
      %933 = vmatpush1.bf16.msra.mxu0 %v913
      %934 = vmatprep.subr.bf16.mxu0 0
      %935 = vmatpush1.bf16.msra.mxu0 %v914
      %936 = vmatprep.subr.bf16.mxu0 0
      %937 = vmatpush1.bf16.msra.mxu0 %v915
      %938 = vmatprep.subr.bf16.mxu0 0
      %939 = vmatpush1.bf16.msra.mxu0 %v916
      %940 = vmatprep.subr.bf16.mxu0 0
      %941 = vmatpush1.bf16.msra.mxu0 %v917
      %942 = vmatprep.subr.bf16.mxu0 0
      %943 = vmatpush1.bf16.msra.mxu0 0
      %944 = vmatprep.subr.bf16.mxu0 0
      %945 = vmatpush1.bf16.msra.mxu0 0
      %946 = vmatprep.subr.bf16.mxu0 0
      %947 = vmatpush1.bf16.msra.mxu0 0
      %948 = vmatprep.subr.bf16.mxu0 0
      %949 = vmatpush1.bf16.msra.mxu0 0
      %950 = vmatprep.subr.bf16.mxu0 0
      %951 = vmatpush1.bf16.msra.mxu0 0
      %952 = vmatprep.subr.bf16.mxu0 0
      %953 = vmatpush1.bf16.msra.mxu0 0
      %954 = vmatprep.subr.bf16.mxu0 0
      %955 = vmatpush1.bf16.msra.mxu0 0
      %956 = vmatprep.subr.bf16.mxu0 0
      %957 = vmatpush1.bf16.msra.mxu0 0
      %958 = vmatprep.mubr.bf16.mxu0 0
      %959 = vmatmul.mubr.bf16.gmra.mrb[0].mxu0 %v696
      %v960 = vpop.f32.mrb[0].mxu0
      %v961 = vadd.f32 %v835, %v960
      %v962 = vpop.f32.mrb[0].mxu0
      %v963 = vpop.f32.mrb[0].mxu0
      %v964 = vadd.f32 %v838, %v963
      %v965 = vpop.f32.mrb[0].mxu0
      %966 = vmatprep.mubr.bf16.mxu0 0
      %967 = vmatmul.mubr.bf16.gmra.mrb[0].mxu0 %v697
      %v968 = vpop.f32.mrb[0].mxu0
      %v969 = vadd.f32 %v843, %v968
      %v970 = vpop.f32.mrb[0].mxu0
      %v971 = vpop.f32.mrb[0].mxu0
      %v972 = vadd.f32 %v846, %v971
      %v973 = vpop.f32.mrb[0].mxu0
      %974 = vmatprep.mubr.bf16.mxu0 0
      %975 = vmatmul.mubr.bf16.gmra.mrb[0].mxu0 %v698
      %v976 = vpop.f32.mrb[0].mxu0
      %v977 = vadd.f32 %v851, %v976
      %v978 = vpop.f32.mrb[0].mxu0
      %v979 = vpop.f32.mrb[0].mxu0
      %v980 = vadd.f32 %v854, %v979
      %v981 = vpop.f32.mrb[0].mxu0
      %982 = vmatprep.mubr.bf16.mxu0 0
      %983 = vmatmul.mubr.bf16.gmra.mrb[0].mxu0 %v699
      %v984 = vpop.f32.mrb[0].mxu0
      %v985 = vadd.f32 %v859, %v984
      %v986 = vpop.f32.mrb[0].mxu0
      %v987 = vpop.f32.mrb[0].mxu0
      %v988 = vadd.f32 %v862, %v987
      %v989 = vpop.f32.mrb[0].mxu0
      %990 = vmatprep.mubr.bf16.mxu0 0
      %991 = vmatmul.mubr.bf16.gmra.mrb[0].mxu0 %v700
      %v992 = vpop.f32.mrb[0].mxu0
      %v993 = vadd.f32 %v867, %v992
      %v994 = vpop.f32.mrb[0].mxu0
      %v995 = vpop.f32.mrb[0].mxu0
      %v996 = vadd.f32 %v870, %v995
      %v997 = vpop.f32.mrb[0].mxu0
      %998 = vdwg.mxu0
      %v999 = vld [vmem:[#allocation2] sm:$0xe]
      %s1000 = scalar_lea.vmem %s3, 128
      %v1001 = vld [vmem:[%s1000] sm:$0xf]
      %v1002 = vld [vmem:[%s1000 + $0x4] sm:$0xf]
      %v1003 = vld [vmem:[%s1000 + $0x8] sm:$0xf]
      %v1004 = vld [vmem:[%s1000 + $0xc] sm:$0xf]
      %v1005 = vld [vmem:[%s1000 + $0x10] sm:$0xf]
      %v1006 = vld [vmem:[%s1000 + $0x14] sm:$0xf]
      %v1007 = vld [vmem:[%s1000 + $0x18] sm:$0xf]
      %v1008 = vld [vmem:[%s1000 + $0x1c] sm:$0xf]
      %v1009 = vld [vmem:[%s1000 + $0x20] sm:$0xf]
      %v1010 = vld [vmem:[%s1000 + $0x24] sm:$0xf]
      %v1011 = vld [vmem:[%s1000 + $0x28] sm:$0xf]
      %v1012 = vld [vmem:[%s1000 + $0x2c] sm:$0xf]
      %v1013 = vld [vmem:[%s1000 + $0x30] sm:$0xf]
      %v1014 = vld [vmem:[%s1000 + $0x34] sm:$0xf]
      %v1015 = vld [vmem:[%s1000 + $0x38] sm:$0xf]
      %v1016 = vld [vmem:[%s1000 + $0x3c] sm:$0xf]
      %v1018 = vunpack.c.l.b16 %v999
      %v1019 = vpack.c.b16 %v686, %v1018
      %vm1020 = vcmask 1046528
      %v1021 = vrot.slane %v1019, 1
      %v1022 = vrot.slane %v697, 1
      %v1023 = vsel %vm1020, %v1021, %v1022
      %v1024 = vrot.slane %v698, 1
      %v1025 = vsel %vm1020, %v1022, %v1024
      %v1026 = vrot.slane %v699, 1
      %v1027 = vsel %vm1020, %v1024, %v1026
      %v1028 = vrot.slane %v700, 1
      %v1029 = vsel %vm1020, %v1026, %v1028
      %v1030 = vrot.slane %v701, 1
      %v1031 = vsel %vm1020, %v1028, %v1030
      %v1053 = vunpack.c.l.b16 %v1001
      %v1054 = vunpack.c.l.b16 %v1002
      %v1055 = vunpack.c.l.b16 %v1003
      %v1056 = vunpack.c.l.b16 %v1004
      %v1057 = vunpack.c.l.b16 %v1005
      %v1058 = vunpack.c.l.b16 %v1006
      %v1059 = vunpack.c.l.b16 %v1007
      %v1060 = vunpack.c.l.b16 %v1008
      %v1061 = vunpack.c.l.b16 %v1009
      %v1062 = vunpack.c.l.b16 %v1010
      %v1063 = vunpack.c.l.b16 %v1011
      %v1064 = vunpack.c.l.b16 %v1012
      %v1065 = vunpack.c.l.b16 %v1013
      %v1066 = vunpack.c.l.b16 %v1014
      %v1067 = vunpack.c.l.b16 %v1015
      %v1068 = vunpack.c.l.b16 %v1016
      %v1069 = vpack.c.b16 %v1054, %v1053
      %v1070 = vpack.c.b16 %v1056, %v1055
      %v1071 = vpack.c.b16 %v1058, %v1057
      %v1072 = vpack.c.b16 %v1060, %v1059
      %v1073 = vpack.c.b16 %v1062, %v1061
      %v1074 = vpack.c.b16 %v1064, %v1063
      %v1075 = vpack.c.b16 %v1066, %v1065
      %v1076 = vpack.c.b16 %v1068, %v1067
      %1085 = vmatprep.subr.bf16.mxu0 0
      %1086 = vmatpush1.bf16.msra.mxu0 %v1069
      %1087 = vmatprep.subr.bf16.mxu0 0
      %1088 = vmatpush1.bf16.msra.mxu0 %v1070
      %1089 = vmatprep.subr.bf16.mxu0 0
      %1090 = vmatpush1.bf16.msra.mxu0 %v1071
      %1091 = vmatprep.subr.bf16.mxu0 0
      %1092 = vmatpush1.bf16.msra.mxu0 %v1072
      %1093 = vmatprep.subr.bf16.mxu0 0
      %1094 = vmatpush1.bf16.msra.mxu0 %v1073
      %1095 = vmatprep.subr.bf16.mxu0 0
      %1096 = vmatpush1.bf16.msra.mxu0 %v1074
      %1097 = vmatprep.subr.bf16.mxu0 0
      %1098 = vmatpush1.bf16.msra.mxu0 %v1075
      %1099 = vmatprep.subr.bf16.mxu0 0
      %1100 = vmatpush1.bf16.msra.mxu0 %v1076
      %1101 = vmatprep.subr.bf16.mxu0 0
      %1102 = vmatpush1.bf16.msra.mxu0 0
      %1103 = vmatprep.subr.bf16.mxu0 0
      %1104 = vmatpush1.bf16.msra.mxu0 0
      %1105 = vmatprep.subr.bf16.mxu0 0
      %1106 = vmatpush1.bf16.msra.mxu0 0
      %1107 = vmatprep.subr.bf16.mxu0 0
      %1108 = vmatpush1.bf16.msra.mxu0 0
      %1109 = vmatprep.subr.bf16.mxu0 0
      %1110 = vmatpush1.bf16.msra.mxu0 0
      %1111 = vmatprep.subr.bf16.mxu0 0
      %1112 = vmatpush1.bf16.msra.mxu0 0
      %1113 = vmatprep.subr.bf16.mxu0 0
      %1114 = vmatpush1.bf16.msra.mxu0 0
      %1115 = vmatprep.subr.bf16.mxu0 0
      %1116 = vmatpush1.bf16.msra.mxu0 0
      %1117 = vmatprep.mubr.bf16.mxu0 0
      %1118 = vmatmul.mubr.bf16.gmra.mrb[0].mxu0 %v1023
      %v1119 = vpop.f32.mrb[0].mxu0
      %v1120 = vadd.f32 0.0, %v1119
      %v1121 = vpop.f32.mrb[0].mxu0
      %v1122 = vpop.f32.mrb[0].mxu0
      %v1123 = vadd.f32 0.0, %v1122
      %v1124 = vpop.f32.mrb[0].mxu0
      %1125 = vmatprep.mubr.bf16.mxu0 0
      %1126 = vmatmul.mubr.bf16.gmra.mrb[0].mxu0 %v1025
      %v1127 = vpop.f32.mrb[0].mxu0
      %v1128 = vadd.f32 0.0, %v1127
      %v1129 = vpop.f32.mrb[0].mxu0
      %v1130 = vpop.f32.mrb[0].mxu0
      %v1131 = vadd.f32 0.0, %v1130
      %v1132 = vpop.f32.mrb[0].mxu0
      %1133 = vmatprep.mubr.bf16.mxu0 0
      %1134 = vmatmul.mubr.bf16.gmra.mrb[0].mxu0 %v1027
      %v1135 = vpop.f32.mrb[0].mxu0
      %v1136 = vadd.f32 0.0, %v1135
      %v1137 = vpop.f32.mrb[0].mxu0
      %v1138 = vpop.f32.mrb[0].mxu0
      %v1139 = vadd.f32 0.0, %v1138
      %v1140 = vpop.f32.mrb[0].mxu0
      %1141 = vmatprep.mubr.bf16.mxu0 0
      %1142 = vmatmul.mubr.bf16.gmra.mrb[0].mxu0 %v1029
      %v1143 = vpop.f32.mrb[0].mxu0
      %v1144 = vadd.f32 0.0, %v1143
      %v1145 = vpop.f32.mrb[0].mxu0
      %v1146 = vpop.f32.mrb[0].mxu0
      %v1147 = vadd.f32 0.0, %v1146
      %v1148 = vpop.f32.mrb[0].mxu0
      %1149 = vmatprep.mubr.bf16.mxu0 0
      %1150 = vmatmul.mubr.bf16.gmra.mrb[0].mxu0 %v1031
      %v1151 = vpop.f32.mrb[0].mxu0
      %v1152 = vadd.f32 0.0, %v1151
      %v1153 = vpop.f32.mrb[0].mxu0
      %v1154 = vpop.f32.mrb[0].mxu0
      %v1155 = vadd.f32 0.0, %v1154
      %v1156 = vpop.f32.mrb[0].mxu0
      %1157 = vdwg.mxu0
      %v1158 = vadd.f32 %v961, %v1120
      %v1159 = vadd.f32 %v964, %v1123
      %v1160 = vadd.f32 %v969, %v1128
      %v1161 = vadd.f32 %v972, %v1131
      %v1162 = vadd.f32 %v977, %v1136
      %v1163 = vadd.f32 %v980, %v1139
      %v1164 = vadd.f32 %v985, %v1144
      %v1165 = vadd.f32 %v988, %v1147
      %v1166 = vadd.f32 %v993, %v1152
      %v1167 = vadd.f32 %v996, %v1155
      %v1168 = vld [vmem:[#allocation2 + $0x4] sm:$0xe]
      %v1169 = vld [vmem:[#allocation2 + $0x8] sm:$0xf]
      %v1170 = vld [vmem:[#allocation2 + $0xc] sm:$0xf]
      %v1171 = vld [vmem:[#allocation2 + $0x10] sm:$0xf]
      %v1172 = vld [vmem:[#allocation2 + $0x14] sm:$0xf]
      %v1173 = vld [vmem:[#allocation2 + $0x18] sm:$0xf]
      %v1174 = vld [vmem:[#allocation2 + $0x1c] sm:$0xf]
      %v1175 = vld [vmem:[#allocation2 + $0x20] sm:$0xf]
      %v1176 = vld [vmem:[#allocation2 + $0x24] sm:$0xf]
      %v1177 = vld [vmem:[#allocation2 + $0x28] sm:$0xf]
      %v1178 = vld [vmem:[#allocation2 + $0x2c] sm:$0x1]
      %s1179 = scalar_lea.vmem %s3, 192
      %v1180 = vld [vmem:[%s1179] sm:$0xf]
      %v1181 = vld [vmem:[%s1179 + $0x4] sm:$0xf]
      %v1182 = vld [vmem:[%s1179 + $0x8] sm:$0xf]
      %v1183 = vld [vmem:[%s1179 + $0xc] sm:$0xf]
      %v1184 = vld [vmem:[%s1179 + $0x10] sm:$0xf]
      %v1185 = vld [vmem:[%s1179 + $0x14] sm:$0xf]
      %v1186 = vld [vmem:[%s1179 + $0x18] sm:$0xf]
      %v1187 = vld [vmem:[%s1179 + $0x1c] sm:$0xf]
      %v1188 = vld [vmem:[%s1179 + $0x20] sm:$0xf]
      %v1189 = vld [vmem:[%s1179 + $0x24] sm:$0xf]
      %v1190 = vld [vmem:[%s1179 + $0x28] sm:$0xf]
      %v1191 = vld [vmem:[%s1179 + $0x2c] sm:$0xf]
      %v1192 = vld [vmem:[%s1179 + $0x30] sm:$0xf]
      %v1193 = vld [vmem:[%s1179 + $0x34] sm:$0xf]
      %v1194 = vld [vmem:[%s1179 + $0x38] sm:$0xf]
      %v1195 = vld [vmem:[%s1179 + $0x3c] sm:$0xf]
      %v1207 = vunpack.c.l.b16 %v1168
      %v1208 = vunpack.c.l.b16 %v1169
      %v1209 = vunpack.c.l.b16 %v1170
      %v1210 = vunpack.c.l.b16 %v1171
      %v1211 = vunpack.c.l.b16 %v1172
      %v1212 = vunpack.c.l.b16 %v1173
      %v1213 = vunpack.c.l.b16 %v1174
      %v1214 = vunpack.c.l.b16 %v1175
      %v1215 = vunpack.c.l.b16 %v1176
      %v1216 = vunpack.c.l.b16 %v1177
      %v1217 = vunpack.c.l.b16 %v1178
      %v1218 = vpack.c.b16 %v1208, %v1207
      %v1219 = vpack.c.b16 %v1210, %v1209
      %v1220 = vpack.c.b16 %v1212, %v1211
      %v1221 = vpack.c.b16 %v1214, %v1213
      %v1222 = vpack.c.b16 %v1216, %v1215
      %v1223 = vpack.c.b16 %v1217, %v1217
      %v1224 = vrot.slane %v1218, 1
      %v1225 = vrot.slane %v1219, 1
      %v1226 = vsel %vm1020, %v1224, %v1225
      %v1227 = vrot.slane %v1220, 1
      %v1228 = vsel %vm1020, %v1225, %v1227
      %v1229 = vrot.slane %v1221, 1
      %v1230 = vsel %vm1020, %v1227, %v1229
      %v1231 = vrot.slane %v1222, 1
      %v1232 = vsel %vm1020, %v1229, %v1231
      %v1233 = vrot.slane %v1223, 1
      %v1234 = vsel %vm1020, %v1231, %v1233
      %v1256 = vunpack.c.l.b16 %v1180
      %v1257 = vunpack.c.l.b16 %v1181
      %v1258 = vunpack.c.l.b16 %v1182
      %v1259 = vunpack.c.l.b16 %v1183
      %v1260 = vunpack.c.l.b16 %v1184
      %v1261 = vunpack.c.l.b16 %v1185
      %v1262 = vunpack.c.l.b16 %v1186
      %v1263 = vunpack.c.l.b16 %v1187
      %v1264 = vunpack.c.l.b16 %v1188
      %v1265 = vunpack.c.l.b16 %v1189
      %v1266 = vunpack.c.l.b16 %v1190
      %v1267 = vunpack.c.l.b16 %v1191
      %v1268 = vunpack.c.l.b16 %v1192
      %v1269 = vunpack.c.l.b16 %v1193
      %v1270 = vunpack.c.l.b16 %v1194
      %v1271 = vunpack.c.l.b16 %v1195
      %v1272 = vpack.c.b16 %v1257, %v1256
      %v1273 = vpack.c.b16 %v1259, %v1258
      %v1274 = vpack.c.b16 %v1261, %v1260
      %v1275 = vpack.c.b16 %v1263, %v1262
      %v1276 = vpack.c.b16 %v1265, %v1264
      %v1277 = vpack.c.b16 %v1267, %v1266
      %v1278 = vpack.c.b16 %v1269, %v1268
      %v1279 = vpack.c.b16 %v1271, %v1270
      %1288 = vmatprep.subr.bf16.mxu0 0
      %1289 = vmatpush1.bf16.msra.mxu0 %v1272
      %1290 = vmatprep.subr.bf16.mxu0 0
      %1291 = vmatpush1.bf16.msra.mxu0 %v1273
      %1292 = vmatprep.subr.bf16.mxu0 0
      %1293 = vmatpush1.bf16.msra.mxu0 %v1274
      %1294 = vmatprep.subr.bf16.mxu0 0
      %1295 = vmatpush1.bf16.msra.mxu0 %v1275
      %1296 = vmatprep.subr.bf16.mxu0 0
      %1297 = vmatpush1.bf16.msra.mxu0 %v1276
      %1298 = vmatprep.subr.bf16.mxu0 0
      %1299 = vmatpush1.bf16.msra.mxu0 %v1277
      %1300 = vmatprep.subr.bf16.mxu0 0
      %1301 = vmatpush1.bf16.msra.mxu0 %v1278
      %1302 = vmatprep.subr.bf16.mxu0 0
      %1303 = vmatpush1.bf16.msra.mxu0 %v1279
      %1304 = vmatprep.subr.bf16.mxu0 0
      %1305 = vmatpush1.bf16.msra.mxu0 0
      %1306 = vmatprep.subr.bf16.mxu0 0
      %1307 = vmatpush1.bf16.msra.mxu0 0
      %1308 = vmatprep.subr.bf16.mxu0 0
      %1309 = vmatpush1.bf16.msra.mxu0 0
      %1310 = vmatprep.subr.bf16.mxu0 0
      %1311 = vmatpush1.bf16.msra.mxu0 0
      %1312 = vmatprep.subr.bf16.mxu0 0
      %1313 = vmatpush1.bf16.msra.mxu0 0
      %1314 = vmatprep.subr.bf16.mxu0 0
      %1315 = vmatpush1.bf16.msra.mxu0 0
      %1316 = vmatprep.subr.bf16.mxu0 0
      %1317 = vmatpush1.bf16.msra.mxu0 0
      %1318 = vmatprep.subr.bf16.mxu0 0
      %1319 = vmatpush1.bf16.msra.mxu0 0
      %1320 = vmatprep.mubr.bf16.mxu0 0
      %1321 = vmatmul.mubr.bf16.gmra.mrb[0].mxu0 %v1226
      %v1322 = vpop.f32.mrb[0].mxu0
      %v1323 = vadd.f32 0.0, %v1322
      %v1324 = vpop.f32.mrb[0].mxu0
      %v1325 = vpop.f32.mrb[0].mxu0
      %v1326 = vadd.f32 0.0, %v1325
      %v1327 = vpop.f32.mrb[0].mxu0
      %1328 = vmatprep.mubr.bf16.mxu0 0
      %1329 = vmatmul.mubr.bf16.gmra.mrb[0].mxu0 %v1228
      %v1330 = vpop.f32.mrb[0].mxu0
      %v1331 = vadd.f32 0.0, %v1330
      %v1332 = vpop.f32.mrb[0].mxu0
      %v1333 = vpop.f32.mrb[0].mxu0
      %v1334 = vadd.f32 0.0, %v1333
      %v1335 = vpop.f32.mrb[0].mxu0
      %1336 = vmatprep.mubr.bf16.mxu0 0
      %1337 = vmatmul.mubr.bf16.gmra.mrb[0].mxu0 %v1230
      %v1338 = vpop.f32.mrb[0].mxu0
      %v1339 = vadd.f32 0.0, %v1338
      %v1340 = vpop.f32.mrb[0].mxu0
      %v1341 = vpop.f32.mrb[0].mxu0
      %v1342 = vadd.f32 0.0, %v1341
      %v1343 = vpop.f32.mrb[0].mxu0
      %1344 = vmatprep.mubr.bf16.mxu0 0
      %1345 = vmatmul.mubr.bf16.gmra.mrb[0].mxu0 %v1232
      %v1346 = vpop.f32.mrb[0].mxu0
      %v1347 = vadd.f32 0.0, %v1346
      %v1348 = vpop.f32.mrb[0].mxu0
      %v1349 = vpop.f32.mrb[0].mxu0
      %v1350 = vadd.f32 0.0, %v1349
      %v1351 = vpop.f32.mrb[0].mxu0
      %1352 = vmatprep.mubr.bf16.mxu0 0
      %1353 = vmatmul.mubr.bf16.gmra.mrb[0].mxu0 %v1234
      %v1354 = vpop.f32.mrb[0].mxu0
      %v1355 = vadd.f32 0.0, %v1354
      %v1356 = vpop.f32.mrb[0].mxu0
      %v1357 = vpop.f32.mrb[0].mxu0
      %v1358 = vadd.f32 0.0, %v1357
      %v1359 = vpop.f32.mrb[0].mxu0
      %1360 = vdwg.mxu0
      %v1361 = vadd.f32 %v1158, %v1323
      %v1362 = vadd.f32 %v1159, %v1326
      %v1363 = vadd.f32 %v1160, %v1331
      %v1364 = vadd.f32 %v1161, %v1334
      %v1365 = vadd.f32 %v1162, %v1339
      %v1366 = vadd.f32 %v1163, %v1342
      %v1367 = vadd.f32 %v1164, %v1347
      %v1368 = vadd.f32 %v1165, %v1350
      %v1369 = vadd.f32 %v1166, %v1355
      %v1370 = vadd.f32 %v1167, %v1358
      %v1371 = vld [vmem:[#allocation2 + $0x2c] sm:$0x3]
      %s1372 = scalar_lea.vmem %s3, 256
      %v1373 = vld [vmem:[%s1372] sm:$0xf]
      %v1374 = vld [vmem:[%s1372 + $0x4] sm:$0xf]
      %v1375 = vld [vmem:[%s1372 + $0x8] sm:$0xf]
      %v1376 = vld [vmem:[%s1372 + $0xc] sm:$0xf]
      %v1377 = vld [vmem:[%s1372 + $0x10] sm:$0xf]
      %v1378 = vld [vmem:[%s1372 + $0x14] sm:$0xf]
      %v1379 = vld [vmem:[%s1372 + $0x18] sm:$0xf]
      %v1380 = vld [vmem:[%s1372 + $0x1c] sm:$0xf]
      %v1381 = vld [vmem:[%s1372 + $0x20] sm:$0xf]
      %v1382 = vld [vmem:[%s1372 + $0x24] sm:$0xf]
      %v1383 = vld [vmem:[%s1372 + $0x28] sm:$0xf]
      %v1384 = vld [vmem:[%s1372 + $0x2c] sm:$0xf]
      %v1385 = vld [vmem:[%s1372 + $0x30] sm:$0xf]
      %v1386 = vld [vmem:[%s1372 + $0x34] sm:$0xf]
      %v1387 = vld [vmem:[%s1372 + $0x38] sm:$0xf]
      %v1388 = vld [vmem:[%s1372 + $0x3c] sm:$0xf]
      %v1390 = vunpack.c.l.b16 %v1371
      %v1391 = vpack.c.b16 %v1390, %v1390
      %vm1392 = vsmask.f32 6400
      %v1394 = vshrl.u32 %v1218, 16
      %v1396 = vrot.slane %v1394, 1
      %v1397 = vshll.u32 %v1218, 16
      %v1399 = vrot.slane %v1397, 2
      %v1400 = vor.u32 %v1396, %v1399
      %v1402 = vshrl.u32 %v1219, 16
      %v1404 = vrot.slane %v1402, 1
      %v1405 = vshll.u32 %v1219, 16
      %v1407 = vrot.slane %v1405, 2
      %v1408 = vor.u32 %v1404, %v1407
      %v1409 = vsel %vm1392, %v1400, %v1408
      %v1411 = vshrl.u32 %v1220, 16
      %v1413 = vrot.slane %v1411, 1
      %v1414 = vshll.u32 %v1220, 16
      %v1416 = vrot.slane %v1414, 2
      %v1417 = vor.u32 %v1413, %v1416
      %v1418 = vsel %vm1392, %v1408, %v1417
      %v1420 = vshrl.u32 %v1221, 16
      %v1422 = vrot.slane %v1420, 1
      %v1423 = vshll.u32 %v1221, 16
      %v1425 = vrot.slane %v1423, 2
      %v1426 = vor.u32 %v1422, %v1425
      %v1427 = vsel %vm1392, %v1417, %v1426
      %v1429 = vshrl.u32 %v1222, 16
      %v1431 = vrot.slane %v1429, 1
      %v1432 = vshll.u32 %v1222, 16
      %v1434 = vrot.slane %v1432, 2
      %v1435 = vor.u32 %v1431, %v1434
      %v1436 = vsel %vm1392, %v1426, %v1435
      %v1438 = vshrl.u32 %v1391, 16
      %v1440 = vrot.slane %v1438, 1
      %v1441 = vshll.u32 %v1391, 16
      %v1443 = vrot.slane %v1441, 2
      %v1444 = vor.u32 %v1440, %v1443
      %v1445 = vsel %vm1392, %v1435, %v1444
      %v1467 = vunpack.c.l.b16 %v1373
      %v1468 = vunpack.c.l.b16 %v1374
      %v1469 = vunpack.c.l.b16 %v1375
      %v1470 = vunpack.c.l.b16 %v1376
      %v1471 = vunpack.c.l.b16 %v1377
      %v1472 = vunpack.c.l.b16 %v1378
      %v1473 = vunpack.c.l.b16 %v1379
      %v1474 = vunpack.c.l.b16 %v1380
      %v1475 = vunpack.c.l.b16 %v1381
      %v1476 = vunpack.c.l.b16 %v1382
      %v1477 = vunpack.c.l.b16 %v1383
      %v1478 = vunpack.c.l.b16 %v1384
      %v1479 = vunpack.c.l.b16 %v1385
      %v1480 = vunpack.c.l.b16 %v1386
      %v1481 = vunpack.c.l.b16 %v1387
      %v1482 = vunpack.c.l.b16 %v1388
      %v1483 = vpack.c.b16 %v1468, %v1467
      %v1484 = vpack.c.b16 %v1470, %v1469
      %v1485 = vpack.c.b16 %v1472, %v1471
      %v1486 = vpack.c.b16 %v1474, %v1473
      %v1487 = vpack.c.b16 %v1476, %v1475
      %v1488 = vpack.c.b16 %v1478, %v1477
      %v1489 = vpack.c.b16 %v1480, %v1479
      %v1490 = vpack.c.b16 %v1482, %v1481
      %1499 = vmatprep.subr.bf16.mxu0 0
      %1500 = vmatpush1.bf16.msra.mxu0 %v1483
      %1501 = vmatprep.subr.bf16.mxu0 0
      %1502 = vmatpush1.bf16.msra.mxu0 %v1484
      %1503 = vmatprep.subr.bf16.mxu0 0
      %1504 = vmatpush1.bf16.msra.mxu0 %v1485
      %1505 = vmatprep.subr.bf16.mxu0 0
      %1506 = vmatpush1.bf16.msra.mxu0 %v1486
      %1507 = vmatprep.subr.bf16.mxu0 0
      %1508 = vmatpush1.bf16.msra.mxu0 %v1487
      %1509 = vmatprep.subr.bf16.mxu0 0
      %1510 = vmatpush1.bf16.msra.mxu0 %v1488
      %1511 = vmatprep.subr.bf16.mxu0 0
      %1512 = vmatpush1.bf16.msra.mxu0 %v1489
      %1513 = vmatprep.subr.bf16.mxu0 0
      %1514 = vmatpush1.bf16.msra.mxu0 %v1490
      %1515 = vmatprep.subr.bf16.mxu0 0
      %1516 = vmatpush1.bf16.msra.mxu0 0
      %1517 = vmatprep.subr.bf16.mxu0 0
      %1518 = vmatpush1.bf16.msra.mxu0 0
      %1519 = vmatprep.subr.bf16.mxu0 0
      %1520 = vmatpush1.bf16.msra.mxu0 0
      %1521 = vmatprep.subr.bf16.mxu0 0
      %1522 = vmatpush1.bf16.msra.mxu0 0
      %1523 = vmatprep.subr.bf16.mxu0 0
      %1524 = vmatpush1.bf16.msra.mxu0 0
      %1525 = vmatprep.subr.bf16.mxu0 0
      %1526 = vmatpush1.bf16.msra.mxu0 0
      %1527 = vmatprep.subr.bf16.mxu0 0
      %1528 = vmatpush1.bf16.msra.mxu0 0
      %1529 = vmatprep.subr.bf16.mxu0 0
      %1530 = vmatpush1.bf16.msra.mxu0 0
      %1531 = vmatprep.mubr.bf16.mxu0 0
      %1532 = vmatmul.mubr.bf16.gmra.mrb[0].mxu0 %v1409
      %v1533 = vpop.f32.mrb[0].mxu0
      %v1534 = vadd.f32 0.0, %v1533
      %v1535 = vpop.f32.mrb[0].mxu0
      %v1536 = vpop.f32.mrb[0].mxu0
      %v1537 = vadd.f32 0.0, %v1536
      %v1538 = vpop.f32.mrb[0].mxu0
      %1539 = vmatprep.mubr.bf16.mxu0 0
      %1540 = vmatmul.mubr.bf16.gmra.mrb[0].mxu0 %v1418
      %v1541 = vpop.f32.mrb[0].mxu0
      %v1542 = vadd.f32 0.0, %v1541
      %v1543 = vpop.f32.mrb[0].mxu0
      %v1544 = vpop.f32.mrb[0].mxu0
      %v1545 = vadd.f32 0.0, %v1544
      %v1546 = vpop.f32.mrb[0].mxu0
      %1547 = vmatprep.mubr.bf16.mxu0 0
      %1548 = vmatmul.mubr.bf16.gmra.mrb[0].mxu0 %v1427
      %v1549 = vpop.f32.mrb[0].mxu0
      %v1550 = vadd.f32 0.0, %v1549
      %v1551 = vpop.f32.mrb[0].mxu0
      %v1552 = vpop.f32.mrb[0].mxu0
      %v1553 = vadd.f32 0.0, %v1552
      %v1554 = vpop.f32.mrb[0].mxu0
      %1555 = vmatprep.mubr.bf16.mxu0 0
      %1556 = vmatmul.mubr.bf16.gmra.mrb[0].mxu0 %v1436
      %v1557 = vpop.f32.mrb[0].mxu0
      %v1558 = vadd.f32 0.0, %v1557
      %v1559 = vpop.f32.mrb[0].mxu0
      %v1560 = vpop.f32.mrb[0].mxu0
      %v1561 = vadd.f32 0.0, %v1560
      %v1562 = vpop.f32.mrb[0].mxu0
      %1563 = vmatprep.mubr.bf16.mxu0 0
      %1564 = vmatmul.mubr.bf16.gmra.mrb[0].mxu0 %v1445
      %v1565 = vpop.f32.mrb[0].mxu0
      %v1566 = vadd.f32 0.0, %v1565
      %v1567 = vpop.f32.mrb[0].mxu0
      %v1568 = vpop.f32.mrb[0].mxu0
      %v1569 = vadd.f32 0.0, %v1568
      %v1570 = vpop.f32.mrb[0].mxu0
      %1571 = vdwg.mxu0
      %v1572 = vadd.f32 %v1361, %v1534
      %v1573 = vadd.f32 %v1362, %v1537
      %v1574 = vadd.f32 %v1363, %v1542
      %v1575 = vadd.f32 %v1364, %v1545
      %v1576 = vadd.f32 %v1365, %v1550
      %v1577 = vadd.f32 %v1366, %v1553
      %v1578 = vadd.f32 %v1367, %v1558
      %v1579 = vadd.f32 %v1368, %v1561
      %v1580 = vadd.f32 %v1369, %v1566
      %v1581 = vadd.f32 %v1370, %v1569
      %v1582 = vld [vmem:[#allocation2 + $0x4] sm:$0xc]
      %s1583 = scalar_lea.vmem %s3, 320
      %v1584 = vld [vmem:[%s1583] sm:$0xf]
      %v1585 = vld [vmem:[%s1583 + $0x4] sm:$0xf]
      %v1586 = vld [vmem:[%s1583 + $0x8] sm:$0xf]
      %v1587 = vld [vmem:[%s1583 + $0xc] sm:$0xf]
      %v1588 = vld [vmem:[%s1583 + $0x10] sm:$0xf]
      %v1589 = vld [vmem:[%s1583 + $0x14] sm:$0xf]
      %v1590 = vld [vmem:[%s1583 + $0x18] sm:$0xf]
      %v1591 = vld [vmem:[%s1583 + $0x1c] sm:$0xf]
      %v1592 = vld [vmem:[%s1583 + $0x20] sm:$0xf]
      %v1593 = vld [vmem:[%s1583 + $0x24] sm:$0xf]
      %v1594 = vld [vmem:[%s1583 + $0x28] sm:$0xf]
      %v1595 = vld [vmem:[%s1583 + $0x2c] sm:$0xf]
      %v1596 = vld [vmem:[%s1583 + $0x30] sm:$0xf]
      %v1597 = vld [vmem:[%s1583 + $0x34] sm:$0xf]
      %v1598 = vld [vmem:[%s1583 + $0x38] sm:$0xf]
      %v1599 = vld [vmem:[%s1583 + $0x3c] sm:$0xf]
      %v1601 = vunpack.c.l.b16 %v1582
      %v1602 = vpack.c.b16 %v1208, %v1601
      %vm1603 = vcmask 1045504
      %v1604 = vrot.slane %v1602, 2
      %v1605 = vrot.slane %v1219, 2
      %v1606 = vsel %vm1603, %v1604, %v1605
      %v1607 = vrot.slane %v1220, 2
      %v1608 = vsel %vm1603, %v1605, %v1607
      %v1609 = vrot.slane %v1221, 2
      %v1610 = vsel %vm1603, %v1607, %v1609
      %v1611 = vrot.slane %v1222, 2
      %v1612 = vsel %vm1603, %v1609, %v1611
      %v1613 = vrot.slane %v1391, 2
      %v1614 = vsel %vm1603, %v1611, %v1613
      %v1636 = vunpack.c.l.b16 %v1584
      %v1637 = vunpack.c.l.b16 %v1585
      %v1638 = vunpack.c.l.b16 %v1586
      %v1639 = vunpack.c.l.b16 %v1587
      %v1640 = vunpack.c.l.b16 %v1588
      %v1641 = vunpack.c.l.b16 %v1589
      %v1642 = vunpack.c.l.b16 %v1590
      %v1643 = vunpack.c.l.b16 %v1591
      %v1644 = vunpack.c.l.b16 %v1592
      %v1645 = vunpack.c.l.b16 %v1593
      %v1646 = vunpack.c.l.b16 %v1594
      %v1647 = vunpack.c.l.b16 %v1595
      %v1648 = vunpack.c.l.b16 %v1596
      %v1649 = vunpack.c.l.b16 %v1597
      %v1650 = vunpack.c.l.b16 %v1598
      %v1651 = vunpack.c.l.b16 %v1599
      %v1652 = vpack.c.b16 %v1637, %v1636
      %v1653 = vpack.c.b16 %v1639, %v1638
      %v1654 = vpack.c.b16 %v1641, %v1640
      %v1655 = vpack.c.b16 %v1643, %v1642
      %v1656 = vpack.c.b16 %v1645, %v1644
      %v1657 = vpack.c.b16 %v1647, %v1646
      %v1658 = vpack.c.b16 %v1649, %v1648
      %v1659 = vpack.c.b16 %v1651, %v1650
      %1668 = vmatprep.subr.bf16.mxu0 0
      %1669 = vmatpush1.bf16.msra.mxu0 %v1652
      %1670 = vmatprep.subr.bf16.mxu0 0
      %1671 = vmatpush1.bf16.msra.mxu0 %v1653
      %1672 = vmatprep.subr.bf16.mxu0 0
      %1673 = vmatpush1.bf16.msra.mxu0 %v1654
      %1674 = vmatprep.subr.bf16.mxu0 0
      %1675 = vmatpush1.bf16.msra.mxu0 %v1655
      %1676 = vmatprep.subr.bf16.mxu0 0
      %1677 = vmatpush1.bf16.msra.mxu0 %v1656
      %1678 = vmatprep.subr.bf16.mxu0 0
      %1679 = vmatpush1.bf16.msra.mxu0 %v1657
      %1680 = vmatprep.subr.bf16.mxu0 0
      %1681 = vmatpush1.bf16.msra.mxu0 %v1658
      %1682 = vmatprep.subr.bf16.mxu0 0
      %1683 = vmatpush1.bf16.msra.mxu0 %v1659
      %1684 = vmatprep.subr.bf16.mxu0 0
      %1685 = vmatpush1.bf16.msra.mxu0 0
      %1686 = vmatprep.subr.bf16.mxu0 0
      %1687 = vmatpush1.bf16.msra.mxu0 0
      %1688 = vmatprep.subr.bf16.mxu0 0
      %1689 = vmatpush1.bf16.msra.mxu0 0
      %1690 = vmatprep.subr.bf16.mxu0 0
      %1691 = vmatpush1.bf16.msra.mxu0 0
      %1692 = vmatprep.subr.bf16.mxu0 0
      %1693 = vmatpush1.bf16.msra.mxu0 0
      %1694 = vmatprep.subr.bf16.mxu0 0
      %1695 = vmatpush1.bf16.msra.mxu0 0
      %1696 = vmatprep.subr.bf16.mxu0 0
      %1697 = vmatpush1.bf16.msra.mxu0 0
      %1698 = vmatprep.subr.bf16.mxu0 0
      %1699 = vmatpush1.bf16.msra.mxu0 0
      %1700 = vmatprep.mubr.bf16.mxu0 0
      %1701 = vmatmul.mubr.bf16.gmra.mrb[0].mxu0 %v1606
      %v1702 = vpop.f32.mrb[0].mxu0
      %v1703 = vadd.f32 0.0, %v1702
      %v1704 = vpop.f32.mrb[0].mxu0
      %v1705 = vpop.f32.mrb[0].mxu0
      %v1706 = vadd.f32 0.0, %v1705
      %v1707 = vpop.f32.mrb[0].mxu0
      %1708 = vmatprep.mubr.bf16.mxu0 0
      %1709 = vmatmul.mubr.bf16.gmra.mrb[0].mxu0 %v1608
      %v1710 = vpop.f32.mrb[0].mxu0
      %v1711 = vadd.f32 0.0, %v1710
      %v1712 = vpop.f32.mrb[0].mxu0
      %v1713 = vpop.f32.mrb[0].mxu0
      %v1714 = vadd.f32 0.0, %v1713
      %v1715 = vpop.f32.mrb[0].mxu0
      %1716 = vmatprep.mubr.bf16.mxu0 0
      %1717 = vmatmul.mubr.bf16.gmra.mrb[0].mxu0 %v1610
      %v1718 = vpop.f32.mrb[0].mxu0
      %v1719 = vadd.f32 0.0, %v1718
      %v1720 = vpop.f32.mrb[0].mxu0
      %v1721 = vpop.f32.mrb[0].mxu0
      %v1722 = vadd.f32 0.0, %v1721
      %v1723 = vpop.f32.mrb[0].mxu0
      %1724 = vmatprep.mubr.bf16.mxu0 0
      %1725 = vmatmul.mubr.bf16.gmra.mrb[0].mxu0 %v1612
      %v1726 = vpop.f32.mrb[0].mxu0
      %v1727 = vadd.f32 0.0, %v1726
      %v1728 = vpop.f32.mrb[0].mxu0
      %v1729 = vpop.f32.mrb[0].mxu0
      %v1730 = vadd.f32 0.0, %v1729
      %v1731 = vpop.f32.mrb[0].mxu0
      %1732 = vmatprep.mubr.bf16.mxu0 0
      %1733 = vmatmul.mubr.bf16.gmra.mrb[0].mxu0 %v1614
      %v1734 = vpop.f32.mrb[0].mxu0
      %v1735 = vadd.f32 0.0, %v1734
      %v1736 = vpop.f32.mrb[0].mxu0
      %v1737 = vpop.f32.mrb[0].mxu0
      %v1738 = vadd.f32 0.0, %v1737
      %v1739 = vpop.f32.mrb[0].mxu0
      %1740 = vdwg.mxu0
      %v1741 = vadd.f32 %v1572, %v1703
      %v1742 = vadd.f32 %v1573, %v1706
      %v1743 = vadd.f32 %v1574, %v1711
      %v1744 = vadd.f32 %v1575, %v1714
      %v1745 = vadd.f32 %v1576, %v1719
      %v1746 = vadd.f32 %v1577, %v1722
      %v1747 = vadd.f32 %v1578, %v1727
      %v1748 = vadd.f32 %v1579, %v1730
      %v1749 = vadd.f32 %v1580, %v1735
      %v1750 = vadd.f32 %v1581, %v1738
      %v1751 = vld [vmem:[#allocation2 + $0x8] sm:$0xc]
      %v1752 = vld [vmem:[#allocation2 + $0xc] sm:$0xf]
      %v1753 = vld [vmem:[#allocation2 + $0x10] sm:$0xf]
      %v1754 = vld [vmem:[#allocation2 + $0x14] sm:$0xf]
      %v1755 = vld [vmem:[#allocation2 + $0x18] sm:$0xf]
      %v1756 = vld [vmem:[#allocation2 + $0x1c] sm:$0xf]
      %v1757 = vld [vmem:[#allocation2 + $0x20] sm:$0xf]
      %v1758 = vld [vmem:[#allocation2 + $0x24] sm:$0xf]
      %v1759 = vld [vmem:[#allocation2 + $0x28] sm:$0xf]
      %v1760 = vld [vmem:[#allocation2 + $0x2c] sm:$0xf]
      %v1761 = vld [vmem:[#allocation2 + $0x30] sm:$0x3]
      %s1762 = scalar_lea.vmem %s3, 384
      %v1763 = vld [vmem:[%s1762] sm:$0xf]
      %v1764 = vld [vmem:[%s1762 + $0x4] sm:$0xf]
      %v1765 = vld [vmem:[%s1762 + $0x8] sm:$0xf]
      %v1766 = vld [vmem:[%s1762 + $0xc] sm:$0xf]
      %v1767 = vld [vmem:[%s1762 + $0x10] sm:$0xf]
      %v1768 = vld [vmem:[%s1762 + $0x14] sm:$0xf]
      %v1769 = vld [vmem:[%s1762 + $0x18] sm:$0xf]
      %v1770 = vld [vmem:[%s1762 + $0x1c] sm:$0xf]
      %v1771 = vld [vmem:[%s1762 + $0x20] sm:$0xf]
      %v1772 = vld [vmem:[%s1762 + $0x24] sm:$0xf]
      %v1773 = vld [vmem:[%s1762 + $0x28] sm:$0xf]
      %v1774 = vld [vmem:[%s1762 + $0x2c] sm:$0xf]
      %v1775 = vld [vmem:[%s1762 + $0x30] sm:$0xf]
      %v1776 = vld [vmem:[%s1762 + $0x34] sm:$0xf]
      %v1777 = vld [vmem:[%s1762 + $0x38] sm:$0xf]
      %v1778 = vld [vmem:[%s1762 + $0x3c] sm:$0xf]
      %v1790 = vunpack.c.l.b16 %v1751
      %v1791 = vunpack.c.l.b16 %v1752
      %v1792 = vunpack.c.l.b16 %v1753
      %v1793 = vunpack.c.l.b16 %v1754
      %v1794 = vunpack.c.l.b16 %v1755
      %v1795 = vunpack.c.l.b16 %v1756
      %v1796 = vunpack.c.l.b16 %v1757
      %v1797 = vunpack.c.l.b16 %v1758
      %v1798 = vunpack.c.l.b16 %v1759
      %v1799 = vunpack.c.l.b16 %v1760
      %v1800 = vunpack.c.l.b16 %v1761
      %v1801 = vpack.c.b16 %v1791, %v1790
      %v1802 = vpack.c.b16 %v1793, %v1792
      %v1803 = vpack.c.b16 %v1795, %v1794
      %v1804 = vpack.c.b16 %v1797, %v1796
      %v1805 = vpack.c.b16 %v1799, %v1798
      %v1806 = vpack.c.b16 %v1800, %v1800
      %v1807 = vrot.slane %v1801, 2
      %v1808 = vrot.slane %v1802, 2
      %v1809 = vsel %vm1603, %v1807, %v1808
      %v1810 = vrot.slane %v1803, 2
      %v1811 = vsel %vm1603, %v1808, %v1810
      %v1812 = vrot.slane %v1804, 2
      %v1813 = vsel %vm1603, %v1810, %v1812
      %v1814 = vrot.slane %v1805, 2
      %v1815 = vsel %vm1603, %v1812, %v1814
      %v1816 = vrot.slane %v1806, 2
      %v1817 = vsel %vm1603, %v1814, %v1816
      %v1839 = vunpack.c.l.b16 %v1763
      %v1840 = vunpack.c.l.b16 %v1764
      %v1841 = vunpack.c.l.b16 %v1765
      %v1842 = vunpack.c.l.b16 %v1766
      %v1843 = vunpack.c.l.b16 %v1767
      %v1844 = vunpack.c.l.b16 %v1768
      %v1845 = vunpack.c.l.b16 %v1769
      %v1846 = vunpack.c.l.b16 %v1770
      %v1847 = vunpack.c.l.b16 %v1771
      %v1848 = vunpack.c.l.b16 %v1772
      %v1849 = vunpack.c.l.b16 %v1773
      %v1850 = vunpack.c.l.b16 %v1774
      %v1851 = vunpack.c.l.b16 %v1775
      %v1852 = vunpack.c.l.b16 %v1776
      %v1853 = vunpack.c.l.b16 %v1777
      %v1854 = vunpack.c.l.b16 %v1778
      %v1855 = vpack.c.b16 %v1840, %v1839
      %v1856 = vpack.c.b16 %v1842, %v1841
      %v1857 = vpack.c.b16 %v1844, %v1843
      %v1858 = vpack.c.b16 %v1846, %v1845
      %v1859 = vpack.c.b16 %v1848, %v1847
      %v1860 = vpack.c.b16 %v1850, %v1849
      %v1861 = vpack.c.b16 %v1852, %v1851
      %v1862 = vpack.c.b16 %v1854, %v1853
      %1871 = vmatprep.subr.bf16.mxu0 0
      %1872 = vmatpush1.bf16.msra.mxu0 %v1855
      %1873 = vmatprep.subr.bf16.mxu0 0
      %1874 = vmatpush1.bf16.msra.mxu0 %v1856
      %1875 = vmatprep.subr.bf16.mxu0 0
      %1876 = vmatpush1.bf16.msra.mxu0 %v1857
      %1877 = vmatprep.subr.bf16.mxu0 0
      %1878 = vmatpush1.bf16.msra.mxu0 %v1858
      %1879 = vmatprep.subr.bf16.mxu0 0
      %1880 = vmatpush1.bf16.msra.mxu0 %v1859
      %1881 = vmatprep.subr.bf16.mxu0 0
      %1882 = vmatpush1.bf16.msra.mxu0 %v1860
      %1883 = vmatprep.subr.bf16.mxu0 0
      %1884 = vmatpush1.bf16.msra.mxu0 %v1861
      %1885 = vmatprep.subr.bf16.mxu0 0
      %1886 = vmatpush1.bf16.msra.mxu0 %v1862
      %1887 = vmatprep.subr.bf16.mxu0 0
      %1888 = vmatpush1.bf16.msra.mxu0 0
      %1889 = vmatprep.subr.bf16.mxu0 0
      %1890 = vmatpush1.bf16.msra.mxu0 0
      %1891 = vmatprep.subr.bf16.mxu0 0
      %1892 = vmatpush1.bf16.msra.mxu0 0
      %1893 = vmatprep.subr.bf16.mxu0 0
      %1894 = vmatpush1.bf16.msra.mxu0 0
      %1895 = vmatprep.subr.bf16.mxu0 0
      %1896 = vmatpush1.bf16.msra.mxu0 0
      %1897 = vmatprep.subr.bf16.mxu0 0
      %1898 = vmatpush1.bf16.msra.mxu0 0
      %1899 = vmatprep.subr.bf16.mxu0 0
      %1900 = vmatpush1.bf16.msra.mxu0 0
      %1901 = vmatprep.subr.bf16.mxu0 0
      %1902 = vmatpush1.bf16.msra.mxu0 0
      %1903 = vmatprep.mubr.bf16.mxu0 0
      %1904 = vmatmul.mubr.bf16.gmra.mrb[0].mxu0 %v1809
      %v1905 = vpop.f32.mrb[0].mxu0
      %v1906 = vadd.f32 0.0, %v1905
      %v1907 = vpop.f32.mrb[0].mxu0
      %v1908 = vpop.f32.mrb[0].mxu0
      %v1909 = vadd.f32 0.0, %v1908
      %v1910 = vpop.f32.mrb[0].mxu0
      %1911 = vmatprep.mubr.bf16.mxu0 0
      %1912 = vmatmul.mubr.bf16.gmra.mrb[0].mxu0 %v1811
      %v1913 = vpop.f32.mrb[0].mxu0
      %v1914 = vadd.f32 0.0, %v1913
      %v1915 = vpop.f32.mrb[0].mxu0
      %v1916 = vpop.f32.mrb[0].mxu0
      %v1917 = vadd.f32 0.0, %v1916
      %v1918 = vpop.f32.mrb[0].mxu0
      %1919 = vmatprep.mubr.bf16.mxu0 0
      %1920 = vmatmul.mubr.bf16.gmra.mrb[0].mxu0 %v1813
      %v1921 = vpop.f32.mrb[0].mxu0
      %v1922 = vadd.f32 0.0, %v1921
      %v1923 = vpop.f32.mrb[0].mxu0
      %v1924 = vpop.f32.mrb[0].mxu0
      %v1925 = vadd.f32 0.0, %v1924
      %v1926 = vpop.f32.mrb[0].mxu0
      %1927 = vmatprep.mubr.bf16.mxu0 0
      %1928 = vmatmul.mubr.bf16.gmra.mrb[0].mxu0 %v1815
      %v1929 = vpop.f32.mrb[0].mxu0
      %v1930 = vadd.f32 0.0, %v1929
      %v1931 = vpop.f32.mrb[0].mxu0
      %v1932 = vpop.f32.mrb[0].mxu0
      %v1933 = vadd.f32 0.0, %v1932
      %v1934 = vpop.f32.mrb[0].mxu0
      %1935 = vmatprep.mubr.bf16.mxu0 0
      %1936 = vmatmul.mubr.bf16.gmra.mrb[0].mxu0 %v1817
      %v1937 = vpop.f32.mrb[0].mxu0
      %v1938 = vadd.f32 0.0, %v1937
      %v1939 = vpop.f32.mrb[0].mxu0
      %v1940 = vpop.f32.mrb[0].mxu0
      %v1941 = vadd.f32 0.0, %v1940
      %v1942 = vpop.f32.mrb[0].mxu0
      %1943 = vdwg.mxu0
      %v1944 = vadd.f32 %v1741, %v1906
      %v1945 = vadd.f32 %v1742, %v1909
      %v1946 = vadd.f32 %v1743, %v1914
      %v1947 = vadd.f32 %v1744, %v1917
      %v1948 = vadd.f32 %v1745, %v1922
      %v1949 = vadd.f32 %v1746, %v1925
      %v1950 = vadd.f32 %v1747, %v1930
      %v1951 = vadd.f32 %v1748, %v1933
      %v1952 = vadd.f32 %v1749, %v1938
      %v1953 = vadd.f32 %v1750, %v1941
      %v1954 = vld [vmem:[#allocation2 + $0x30] sm:$0x7]
      %s1955 = scalar_lea.vmem %s3, 448
      %v1956 = vld [vmem:[%s1955] sm:$0xf]
      %v1957 = vld [vmem:[%s1955 + $0x4] sm:$0xf]
      %v1958 = vld [vmem:[%s1955 + $0x8] sm:$0xf]
      %v1959 = vld [vmem:[%s1955 + $0xc] sm:$0xf]
      %v1960 = vld [vmem:[%s1955 + $0x10] sm:$0xf]
      %v1961 = vld [vmem:[%s1955 + $0x14] sm:$0xf]
      %v1962 = vld [vmem:[%s1955 + $0x18] sm:$0xf]
      %v1963 = vld [vmem:[%s1955 + $0x1c] sm:$0xf]
      %v1964 = vld [vmem:[%s1955 + $0x20] sm:$0xf]
      %v1965 = vld [vmem:[%s1955 + $0x24] sm:$0xf]
      %v1966 = vld [vmem:[%s1955 + $0x28] sm:$0xf]
      %v1967 = vld [vmem:[%s1955 + $0x2c] sm:$0xf]
      %v1968 = vld [vmem:[%s1955 + $0x30] sm:$0xf]
      %v1969 = vld [vmem:[%s1955 + $0x34] sm:$0xf]
      %v1970 = vld [vmem:[%s1955 + $0x38] sm:$0xf]
      %v1971 = vld [vmem:[%s1955 + $0x3c] sm:$0xf]
      %v1973 = vunpack.c.l.b16 %v1954
      %v1974 = vpack.c.b16 %v1973, %v1973
      %vm1975 = vsmask.f32 5376
      %v1977 = vshrl.u32 %v1801, 16
      %v1979 = vrot.slane %v1977, 2
      %v1980 = vshll.u32 %v1801, 16
      %v1982 = vrot.slane %v1980, 3
      %v1983 = vor.u32 %v1979, %v1982
      %v1985 = vshrl.u32 %v1802, 16
      %v1987 = vrot.slane %v1985, 2
      %v1988 = vshll.u32 %v1802, 16
      %v1990 = vrot.slane %v1988, 3
      %v1991 = vor.u32 %v1987, %v1990
      %v1992 = vsel %vm1975, %v1983, %v1991
      %v1994 = vshrl.u32 %v1803, 16
      %v1996 = vrot.slane %v1994, 2
      %v1997 = vshll.u32 %v1803, 16
      %v1999 = vrot.slane %v1997, 3
      %v2000 = vor.u32 %v1996, %v1999
      %v2001 = vsel %vm1975, %v1991, %v2000
      %v2003 = vshrl.u32 %v1804, 16
      %v2005 = vrot.slane %v2003, 2
      %v2006 = vshll.u32 %v1804, 16
      %v2008 = vrot.slane %v2006, 3
      %v2009 = vor.u32 %v2005, %v2008
      %v2010 = vsel %vm1975, %v2000, %v2009
      %v2012 = vshrl.u32 %v1805, 16
      %v2014 = vrot.slane %v2012, 2
      %v2015 = vshll.u32 %v1805, 16
      %v2017 = vrot.slane %v2015, 3
      %v2018 = vor.u32 %v2014, %v2017
      %v2019 = vsel %vm1975, %v2009, %v2018
      %v2021 = vshrl.u32 %v1974, 16
      %v2023 = vrot.slane %v2021, 2
      %v2024 = vshll.u32 %v1974, 16
      %v2026 = vrot.slane %v2024, 3
      %v2027 = vor.u32 %v2023, %v2026
      %v2028 = vsel %vm1975, %v2018, %v2027
      %v2050 = vunpack.c.l.b16 %v1956
      %v2051 = vunpack.c.l.b16 %v1957
      %v2052 = vunpack.c.l.b16 %v1958
      %v2053 = vunpack.c.l.b16 %v1959
      %v2054 = vunpack.c.l.b16 %v1960
      %v2055 = vunpack.c.l.b16 %v1961
      %v2056 = vunpack.c.l.b16 %v1962
      %v2057 = vunpack.c.l.b16 %v1963
      %v2058 = vunpack.c.l.b16 %v1964
      %v2059 = vunpack.c.l.b16 %v1965
      %v2060 = vunpack.c.l.b16 %v1966
      %v2061 = vunpack.c.l.b16 %v1967
      %v2062 = vunpack.c.l.b16 %v1968
      %v2063 = vunpack.c.l.b16 %v1969
      %v2064 = vunpack.c.l.b16 %v1970
      %v2065 = vunpack.c.l.b16 %v1971
      %v2066 = vpack.c.b16 %v2051, %v2050
      %v2067 = vpack.c.b16 %v2053, %v2052
      %v2068 = vpack.c.b16 %v2055, %v2054
      %v2069 = vpack.c.b16 %v2057, %v2056
      %v2070 = vpack.c.b16 %v2059, %v2058
      %v2071 = vpack.c.b16 %v2061, %v2060
      %v2072 = vpack.c.b16 %v2063, %v2062
      %v2073 = vpack.c.b16 %v2065, %v2064
      %2082 = vmatprep.subr.bf16.mxu0 0
      %2083 = vmatpush1.bf16.msra.mxu0 %v2066
      %2084 = vmatprep.subr.bf16.mxu0 0
      %2085 = vmatpush1.bf16.msra.mxu0 %v2067
      %2086 = vmatprep.subr.bf16.mxu0 0
      %2087 = vmatpush1.bf16.msra.mxu0 %v2068
      %2088 = vmatprep.subr.bf16.mxu0 0
      %2089 = vmatpush1.bf16.msra.mxu0 %v2069
      %2090 = vmatprep.subr.bf16.mxu0 0
      %2091 = vmatpush1.bf16.msra.mxu0 %v2070
      %2092 = vmatprep.subr.bf16.mxu0 0
      %2093 = vmatpush1.bf16.msra.mxu0 %v2071
      %2094 = vmatprep.subr.bf16.mxu0 0
      %2095 = vmatpush1.bf16.msra.mxu0 %v2072
      %2096 = vmatprep.subr.bf16.mxu0 0
      %2097 = vmatpush1.bf16.msra.mxu0 %v2073
      %2098 = vmatprep.subr.bf16.mxu0 0
      %2099 = vmatpush1.bf16.msra.mxu0 0
      %2100 = vmatprep.subr.bf16.mxu0 0
      %2101 = vmatpush1.bf16.msra.mxu0 0
      %2102 = vmatprep.subr.bf16.mxu0 0
      %2103 = vmatpush1.bf16.msra.mxu0 0
      %2104 = vmatprep.subr.bf16.mxu0 0
      %2105 = vmatpush1.bf16.msra.mxu0 0
      %2106 = vmatprep.subr.bf16.mxu0 0
      %2107 = vmatpush1.bf16.msra.mxu0 0
      %2108 = vmatprep.subr.bf16.mxu0 0
      %2109 = vmatpush1.bf16.msra.mxu0 0
      %2110 = vmatprep.subr.bf16.mxu0 0
      %2111 = vmatpush1.bf16.msra.mxu0 0
      %2112 = vmatprep.subr.bf16.mxu0 0
      %2113 = vmatpush1.bf16.msra.mxu0 0
      %2114 = vmatprep.mubr.bf16.mxu0 0
      %2115 = vmatmul.mubr.bf16.gmra.mrb[0].mxu0 %v1992
      %v2116 = vpop.f32.mrb[0].mxu0
      %v2117 = vadd.f32 0.0, %v2116
      %v2118 = vpop.f32.mrb[0].mxu0
      %v2119 = vpop.f32.mrb[0].mxu0
      %v2120 = vadd.f32 0.0, %v2119
      %v2121 = vpop.f32.mrb[0].mxu0
      %2122 = vmatprep.mubr.bf16.mxu0 0
      %2123 = vmatmul.mubr.bf16.gmra.mrb[0].mxu0 %v2001
      %v2124 = vpop.f32.mrb[0].mxu0
      %v2125 = vadd.f32 0.0, %v2124
      %v2126 = vpop.f32.mrb[0].mxu0
      %v2127 = vpop.f32.mrb[0].mxu0
      %v2128 = vadd.f32 0.0, %v2127
      %v2129 = vpop.f32.mrb[0].mxu0
      %2130 = vmatprep.mubr.bf16.mxu0 0
      %2131 = vmatmul.mubr.bf16.gmra.mrb[0].mxu0 %v2010
      %v2132 = vpop.f32.mrb[0].mxu0
      %v2133 = vadd.f32 0.0, %v2132
      %v2134 = vpop.f32.mrb[0].mxu0
      %v2135 = vpop.f32.mrb[0].mxu0
      %v2136 = vadd.f32 0.0, %v2135
      %v2137 = vpop.f32.mrb[0].mxu0
      %2138 = vmatprep.mubr.bf16.mxu0 0
      %2139 = vmatmul.mubr.bf16.gmra.mrb[0].mxu0 %v2019
      %v2140 = vpop.f32.mrb[0].mxu0
      %v2141 = vadd.f32 0.0, %v2140
      %v2142 = vpop.f32.mrb[0].mxu0
      %v2143 = vpop.f32.mrb[0].mxu0
      %v2144 = vadd.f32 0.0, %v2143
      %v2145 = vpop.f32.mrb[0].mxu0
      %2146 = vmatprep.mubr.bf16.mxu0 0
      %2147 = vmatmul.mubr.bf16.gmra.mrb[0].mxu0 %v2028
      %v2148 = vpop.f32.mrb[0].mxu0
      %v2149 = vadd.f32 0.0, %v2148
      %v2150 = vpop.f32.mrb[0].mxu0
      %v2151 = vpop.f32.mrb[0].mxu0
      %v2152 = vadd.f32 0.0, %v2151
      %v2153 = vpop.f32.mrb[0].mxu0
      %2154 = vdwg.mxu0
      %v2155 = vadd.f32 %v1944, %v2117
      %v2156 = vadd.f32 %v1945, %v2120
      %v2157 = vadd.f32 %v1946, %v2125
      %v2158 = vadd.f32 %v1947, %v2128
      %v2159 = vadd.f32 %v1948, %v2133
      %v2160 = vadd.f32 %v1949, %v2136
      %v2161 = vadd.f32 %v1950, %v2141
      %v2162 = vadd.f32 %v1951, %v2144
      %v2163 = vadd.f32 %v1952, %v2149
      %v2164 = vadd.f32 %v1953, %v2152
      %v2165 = vld [vmem:[#allocation2 + $0x8] sm:$0x8]
      %s2166 = scalar_lea.vmem %s3, 512
      %v2167 = vld [vmem:[%s2166] sm:$0xf]
      %v2168 = vld [vmem:[%s2166 + $0x4] sm:$0xf]
      %v2169 = vld [vmem:[%s2166 + $0x8] sm:$0xf]
      %v2170 = vld [vmem:[%s2166 + $0xc] sm:$0xf]
      %v2171 = vld [vmem:[%s2166 + $0x10] sm:$0xf]
      %v2172 = vld [vmem:[%s2166 + $0x14] sm:$0xf]
      %v2173 = vld [vmem:[%s2166 + $0x18] sm:$0xf]
      %v2174 = vld [vmem:[%s2166 + $0x1c] sm:$0xf]
      %v2175 = vld [vmem:[%s2166 + $0x20] sm:$0xf]
      %v2176 = vld [vmem:[%s2166 + $0x24] sm:$0xf]
      %v2177 = vld [vmem:[%s2166 + $0x28] sm:$0xf]
      %v2178 = vld [vmem:[%s2166 + $0x2c] sm:$0xf]
      %v2179 = vld [vmem:[%s2166 + $0x30] sm:$0xf]
      %v2180 = vld [vmem:[%s2166 + $0x34] sm:$0xf]
      %v2181 = vld [vmem:[%s2166 + $0x38] sm:$0xf]
      %v2182 = vld [vmem:[%s2166 + $0x3c] sm:$0xf]
      %v2184 = vunpack.c.l.b16 %v2165
      %v2185 = vpack.c.b16 %v1791, %v2184
      %vm2186 = vcmask 1044480
      %v2187 = vrot.slane %v2185, 3
      %v2188 = vrot.slane %v1802, 3
      %v2189 = vsel %vm2186, %v2187, %v2188
      %v2190 = vrot.slane %v1803, 3
      %v2191 = vsel %vm2186, %v2188, %v2190
      %v2192 = vrot.slane %v1804, 3
      %v2193 = vsel %vm2186, %v2190, %v2192
      %v2194 = vrot.slane %v1805, 3
      %v2195 = vsel %vm2186, %v2192, %v2194
      %v2196 = vrot.slane %v1974, 3
      %v2197 = vsel %vm2186, %v2194, %v2196
      %v2219 = vunpack.c.l.b16 %v2167
      %v2220 = vunpack.c.l.b16 %v2168
      %v2221 = vunpack.c.l.b16 %v2169
      %v2222 = vunpack.c.l.b16 %v2170
      %v2223 = vunpack.c.l.b16 %v2171
      %v2224 = vunpack.c.l.b16 %v2172
      %v2225 = vunpack.c.l.b16 %v2173
      %v2226 = vunpack.c.l.b16 %v2174
      %v2227 = vunpack.c.l.b16 %v2175
      %v2228 = vunpack.c.l.b16 %v2176
      %v2229 = vunpack.c.l.b16 %v2177
      %v2230 = vunpack.c.l.b16 %v2178
      %v2231 = vunpack.c.l.b16 %v2179
      %v2232 = vunpack.c.l.b16 %v2180
      %v2233 = vunpack.c.l.b16 %v2181
      %v2234 = vunpack.c.l.b16 %v2182
      %v2235 = vpack.c.b16 %v2220, %v2219
      %v2236 = vpack.c.b16 %v2222, %v2221
      %v2237 = vpack.c.b16 %v2224, %v2223
      %v2238 = vpack.c.b16 %v2226, %v2225
      %v2239 = vpack.c.b16 %v2228, %v2227
      %v2240 = vpack.c.b16 %v2230, %v2229
      %v2241 = vpack.c.b16 %v2232, %v2231
      %v2242 = vpack.c.b16 %v2234, %v2233
      %2251 = vmatprep.subr.bf16.mxu0 0
      %2252 = vmatpush1.bf16.msra.mxu0 %v2235
      %2253 = vmatprep.subr.bf16.mxu0 0
      %2254 = vmatpush1.bf16.msra.mxu0 %v2236
      %2255 = vmatprep.subr.bf16.mxu0 0
      %2256 = vmatpush1.bf16.msra.mxu0 %v2237
      %2257 = vmatprep.subr.bf16.mxu0 0
      %2258 = vmatpush1.bf16.msra.mxu0 %v2238
      %2259 = vmatprep.subr.bf16.mxu0 0
      %2260 = vmatpush1.bf16.msra.mxu0 %v2239
      %2261 = vmatprep.subr.bf16.mxu0 0
      %2262 = vmatpush1.bf16.msra.mxu0 %v2240
      %2263 = vmatprep.subr.bf16.mxu0 0
      %2264 = vmatpush1.bf16.msra.mxu0 %v2241
      %2265 = vmatprep.subr.bf16.mxu0 0
      %2266 = vmatpush1.bf16.msra.mxu0 %v2242
      %2267 = vmatprep.subr.bf16.mxu0 0
      %2268 = vmatpush1.bf16.msra.mxu0 0
      %2269 = vmatprep.subr.bf16.mxu0 0
      %2270 = vmatpush1.bf16.msra.mxu0 0
      %2271 = vmatprep.subr.bf16.mxu0 0
      %2272 = vmatpush1.bf16.msra.mxu0 0
      %2273 = vmatprep.subr.bf16.mxu0 0
      %2274 = vmatpush1.bf16.msra.mxu0 0
      %2275 = vmatprep.subr.bf16.mxu0 0
      %2276 = vmatpush1.bf16.msra.mxu0 0
      %2277 = vmatprep.subr.bf16.mxu0 0
      %2278 = vmatpush1.bf16.msra.mxu0 0
      %2279 = vmatprep.subr.bf16.mxu0 0
      %2280 = vmatpush1.bf16.msra.mxu0 0
      %2281 = vmatprep.subr.bf16.mxu0 0
      %2282 = vmatpush1.bf16.msra.mxu0 0
      %2283 = vmatprep.mubr.bf16.mxu0 0
      %2284 = vmatmul.mubr.bf16.gmra.mrb[0].mxu0 %v2189
      %v2285 = vpop.f32.mrb[0].mxu0
      %v2286 = vadd.f32 0.0, %v2285
      %v2287 = vpop.f32.mrb[0].mxu0
      %v2288 = vpop.f32.mrb[0].mxu0
      %v2289 = vadd.f32 0.0, %v2288
      %v2290 = vpop.f32.mrb[0].mxu0
      %2291 = vmatprep.mubr.bf16.mxu0 0
      %2292 = vmatmul.mubr.bf16.gmra.mrb[0].mxu0 %v2191
      %v2293 = vpop.f32.mrb[0].mxu0
      %v2294 = vadd.f32 0.0, %v2293
      %v2295 = vpop.f32.mrb[0].mxu0
      %v2296 = vpop.f32.mrb[0].mxu0
      %v2297 = vadd.f32 0.0, %v2296
      %v2298 = vpop.f32.mrb[0].mxu0
      %2299 = vmatprep.mubr.bf16.mxu0 0
      %2300 = vmatmul.mubr.bf16.gmra.mrb[0].mxu0 %v2193
      %v2301 = vpop.f32.mrb[0].mxu0
      %v2302 = vadd.f32 0.0, %v2301
      %v2303 = vpop.f32.mrb[0].mxu0
      %v2304 = vpop.f32.mrb[0].mxu0
      %v2305 = vadd.f32 0.0, %v2304
      %v2306 = vpop.f32.mrb[0].mxu0
      %2307 = vmatprep.mubr.bf16.mxu0 0
      %2308 = vmatmul.mubr.bf16.gmra.mrb[0].mxu0 %v2195
      %v2309 = vpop.f32.mrb[0].mxu0
      %v2310 = vadd.f32 0.0, %v2309
      %v2311 = vpop.f32.mrb[0].mxu0
      %v2312 = vpop.f32.mrb[0].mxu0
      %v2313 = vadd.f32 0.0, %v2312
      %v2314 = vpop.f32.mrb[0].mxu0
      %2315 = vmatprep.mubr.bf16.mxu0 0
      %2316 = vmatmul.mubr.bf16.gmra.mrb[0].mxu0 %v2197
      %v2317 = vpop.f32.mrb[0].mxu0
      %v2318 = vadd.f32 0.0, %v2317
      %v2319 = vpop.f32.mrb[0].mxu0
      %v2320 = vpop.f32.mrb[0].mxu0
      %v2321 = vadd.f32 0.0, %v2320
      %v2322 = vpop.f32.mrb[0].mxu0
      %2323 = vdwg.mxu0
      %v2324 = vadd.f32 %v2155, %v2286
      %v2325 = vadd.f32 %v2156, %v2289
      %v2326 = vadd.f32 %v2157, %v2294
      %v2327 = vadd.f32 %v2158, %v2297
      %v2328 = vadd.f32 %v2159, %v2302
      %v2329 = vadd.f32 %v2160, %v2305
      %v2330 = vadd.f32 %v2161, %v2310
      %v2331 = vadd.f32 %v2162, %v2313
      %v2332 = vadd.f32 %v2163, %v2318
      %v2333 = vadd.f32 %v2164, %v2321
      %v2334 = vld [vmem:[%s4] sm:$0x1]
      %v2336 = vlaneseq
      %v2337 = vshrl.u32 %v2336, 7
      %v2338 = vsub.s32 0, %v2337
      %v2339 = vrot.slane %v2334, %v2338
      %v2341 = vadd.f32 %v2324, %v2339
      %v2342 = vadd.f32 %v2325, %v2339
      %v2343 = vadd.f32 %v2326, %v2339
      %v2344 = vadd.f32 %v2327, %v2339
      %v2345 = vadd.f32 %v2328, %v2339
      %v2346 = vadd.f32 %v2329, %v2339
      %v2347 = vadd.f32 %v2330, %v2339
      %v2348 = vadd.f32 %v2331, %v2339
      %v2349 = vadd.f32 %v2332, %v2339
      %v2350 = vadd.f32 %v2333, %v2339
      %2351 = vst [vmem:[%s316] sm:$0xff] %v2341
      %2352 = vst [vmem:[%s316 + $0x8] sm:$0xff] %v2342
      %2353 = vst [vmem:[%s316 + $0x10] sm:$0xff] %v2343
      %2354 = vst [vmem:[%s316 + $0x18] sm:$0xff] %v2344
      %2355 = vst [vmem:[%s316 + $0x20] sm:$0xff] %v2345
      %2356 = vst [vmem:[%s316 + $0x28] sm:$0xff] %v2346
      %2357 = vst [vmem:[%s316 + $0x30] sm:$0xff] %v2347
      %2358 = vst [vmem:[%s316 + $0x38] sm:$0xff] %v2348
      %2359 = vst [vmem:[%s316 + $0x40] sm:$0xff] %v2349
      %2360 = vst [vmem:[%s316 + $0x48] sm:$0xff] %v2350
      %v2361 = vld [vmem:[%s5] sm:$0xff]
      %v2362 = vld [vmem:[%s5 + $0x8] sm:$0xff]
      %v2363 = vld [vmem:[%s5 + $0x10] sm:$0xff]
      %v2364 = vld [vmem:[%s5 + $0x18] sm:$0xff]
      %v2365 = vld [vmem:[%s5 + $0x20] sm:$0xff]
      %v2366 = vld [vmem:[%s5 + $0x28] sm:$0xff]
      %v2367 = vld [vmem:[%s5 + $0x30] sm:$0xff]
      %v2368 = vld [vmem:[%s5 + $0x38] sm:$0xff]
      %v2369 = vld [vmem:[%s5 + $0x40] sm:$0xff]
      %v2370 = vld [vmem:[%s5 + $0x48] sm:$0xff]
      %2372 = vset.pattern.permute.xlu0 0
      %2373 = vperm.xlu0 %2372, %v2361
      %v2374 = vpop.permute.xlu0 %2373
      %2377 = vset.pattern.permute.xlu0 0
      %2378 = vperm.xlu0 %2377, %v2362
      %v2379 = vpop.permute.xlu0 %2378
      %2382 = vset.pattern.permute.xlu0 0
      %2383 = vperm.xlu0 %2382, %v2363
      %v2384 = vpop.permute.xlu0 %2383
      %2387 = vset.pattern.permute.xlu0 0
      %2388 = vperm.xlu0 %2387, %v2364
      %v2389 = vpop.permute.xlu0 %2388
      %2392 = vset.pattern.permute.xlu0 0
      %2393 = vperm.xlu0 %2392, %v2365
      %v2394 = vpop.permute.xlu0 %2393
      %2397 = vset.pattern.permute.xlu0 0
      %2398 = vperm.xlu0 %2397, %v2366
      %v2399 = vpop.permute.xlu0 %2398
      %2402 = vset.pattern.permute.xlu0 0
      %2403 = vperm.xlu0 %2402, %v2367
      %v2404 = vpop.permute.xlu0 %2403
      %2407 = vset.pattern.permute.xlu0 0
      %2408 = vperm.xlu0 %2407, %v2368
      %v2409 = vpop.permute.xlu0 %2408
      %2412 = vset.pattern.permute.xlu0 0
      %2413 = vperm.xlu0 %2412, %v2369
      %v2414 = vpop.permute.xlu0 %2413
      %2417 = vset.pattern.permute.xlu0 0
      %2418 = vperm.xlu0 %2417, %v2370
      %v2419 = vpop.permute.xlu0 %2418
      %v2421 = vmul.f32 %v2341, %v2374
      %v2422 = vmul.f32 %v2342, %v2379
      %v2423 = vmul.f32 %v2343, %v2384
      %v2424 = vmul.f32 %v2344, %v2389
      %v2425 = vmul.f32 %v2345, %v2394
      %v2426 = vmul.f32 %v2346, %v2399
      %v2427 = vmul.f32 %v2347, %v2404
      %v2428 = vmul.f32 %v2348, %v2409
      %v2429 = vmul.f32 %v2349, %v2414
      %v2430 = vmul.f32 %v2350, %v2419
      %v2431 = vadd.f32 %v2421, %v2422
      %v2432 = vadd.f32 %v2431, %v2423
      %v2433 = vadd.f32 %v2432, %v2424
      %v2434 = vadd.f32 %v2433, %v2425
      %v2435 = vadd.f32 %v2434, %v2426
      %v2436 = vadd.f32 %v2435, %v2427
      %v2437 = vadd.f32 %v2436, %v2428
      %v2438 = vadd.f32 %v2437, %v2429
      %v2439 = vadd.f32 %v2438, %v2430
      %v2440 = vrot.slane %v2439, 4
      %v2441 = vadd.f32 %v2439, %v2440
      %v2442 = vrot.slane %v2441, 2
      %v2443 = vadd.f32 %v2441, %v2442
      %v2444 = vrot.slane %v2443, 1
      %v2445 = vadd.f32 %v2443, %v2444
      %2446 = vst [vmem:[%s319] sm:$0x1] %v2445
      %v2447 = vmul.f32 %v2421, %v2341
      %v2448 = vmul.f32 %v2422, %v2342
      %v2449 = vmul.f32 %v2423, %v2343
      %v2450 = vmul.f32 %v2424, %v2344
      %v2451 = vmul.f32 %v2425, %v2345
      %v2452 = vmul.f32 %v2426, %v2346
      %v2453 = vmul.f32 %v2427, %v2347
      %v2454 = vmul.f32 %v2428, %v2348
      %v2455 = vmul.f32 %v2429, %v2349
      %v2456 = vmul.f32 %v2430, %v2350
      %v2457 = vadd.f32 %v2447, %v2448
      %v2458 = vadd.f32 %v2457, %v2449
      %v2459 = vadd.f32 %v2458, %v2450
      %v2460 = vadd.f32 %v2459, %v2451
      %v2461 = vadd.f32 %v2460, %v2452
      %v2462 = vadd.f32 %v2461, %v2453
      %v2463 = vadd.f32 %v2462, %v2454
      %v2464 = vadd.f32 %v2463, %v2455
      %v2465 = vadd.f32 %v2464, %v2456
      %v2466 = vrot.slane %v2465, 4
      %v2467 = vadd.f32 %v2465, %v2466
      %v2468 = vrot.slane %v2467, 2
      %v2469 = vadd.f32 %v2467, %v2468
      %v2470 = vrot.slane %v2469, 1
      %v2471 = vadd.f32 %v2469, %v2470
      %2472 = vst [vmem:[%s322] sm:$0x1] %v2471
      %p2473 = scmp.lt.s32.totalorder %s20, 1
      %s2474 = scalar_select %p2473, %s20, 1
      %s2475 = smul.addr %s2474, 10
      %s2476 = smul.addr %s2475, 8
      %s2477 = scalar_lea.vmem %s6, %s2476
      %p2478 = scmp.lt.s32.totalorder %s20, 1
      %s2479 = scalar_select %p2478, %s20, 1
      %s2480 = scalar_lea.vmem %s7, %s2479
      %p2481 = scmp.lt.s32.totalorder %s20, 1
      %s2482 = scalar_select %p2481, %s20, 1
      %s2483 = scalar_lea.vmem %s8, %s2482
      // Predicated region
      $region45: #{unet_up_forward.4} parent=43 // pred_check
        %p2484 = pneg %p169
      $region46: #{unet_up_forward.4} parent=43 // pred_check_branch
        %2486 = sbr.rel (%p2484) target = $region48
      $region47: #{unet_up_forward.4} parent=43 // pred_region
        _
      $region48: #{unet_up_forward.4} parent=43 // pred_fallthru
        _
      // Predicated region
      $region49: #{unet_up_forward.4} parent=43 // pred_check
        %p2487 = pneg %p195
      $region50: #{unet_up_forward.4} parent=43 // pred_check_branch
        %2489 = sbr.rel (%p2487) target = $region52
      $region51: #{unet_up_forward.4} parent=43 // pred_region
        _
      $region52: #{unet_up_forward.4} parent=43 // pred_fallthru
        _
      // Predicated region
      $region53: #{unet_up_forward.4} parent=43 // pred_check
        %p2490 = pneg %p221
      $region54: #{unet_up_forward.4} parent=43 // pred_check_branch
        %2492 = sbr.rel (%p2490) target = $region56
      $region55: #{unet_up_forward.4} parent=43 // pred_region
        _
      $region56: #{unet_up_forward.4} parent=43 // pred_fallthru
        _
    $region44: #{unet_up_forward.4} parent=5 // pred_fallthru
      _
    %p2493 = scmp.le.s32.totalorder 2, %s15
    // Predicated region
    $region57: #{unet_up_forward.4} parent=5 // pred_check
      %p2494 = pneg %p2493
    $region58: #{unet_up_forward.4} parent=5 // pred_check_branch
      %2496 = sbr.rel (%p2494) target = $region60
    $region59: #{unet_up_forward.4} parent=5 // pred_region
      %s2497 = ssub.s32 %s15, 2
      // Predicated region
      $region61: #{unet_up_forward.4} parent=59 // pred_check
        %p2498 = pneg %p175
      $region62: #{unet_up_forward.4} parent=59 // pred_check_branch
        %2500 = sbr.rel (%p2498) target = $region64
      $region63: #{unet_up_forward.4} parent=59 // pred_region
        %p2501 = scmp.lt.s32.totalorder %s21, 1
        %s2502 = scalar_select %p2501, %s21, 1
        %s2503 = smul.addr %s2502, 10
        %s2504 = smul.addr %s2503, 8
        %s2505 = scalar_lea.vmem %s6, %s2504
      $region64: #{unet_up_forward.4} parent=59 // pred_fallthru
        _
      // Predicated region
      $region65: #{unet_up_forward.4} parent=59 // pred_check
        %p2506 = pneg %p201
      $region66: #{unet_up_forward.4} parent=59 // pred_check_branch
        %2508 = sbr.rel (%p2506) target = $region68
      $region67: #{unet_up_forward.4} parent=59 // pred_region
        %p2509 = scmp.lt.s32.totalorder %s21, 1
        %s2510 = scalar_select %p2509, %s21, 1
        %s2511 = scalar_lea.vmem %s7, %s2510
      $region68: #{unet_up_forward.4} parent=59 // pred_fallthru
        _
      // Predicated region
      $region69: #{unet_up_forward.4} parent=59 // pred_check
        %p2512 = pneg %p227
      $region70: #{unet_up_forward.4} parent=59 // pred_check_branch
        %2514 = sbr.rel (%p2512) target = $region72
      $region71: #{unet_up_forward.4} parent=59 // pred_region
        %p2515 = scmp.lt.s32.totalorder %s21, 1
        %s2516 = scalar_select %p2515, %s21, 1
        %s2517 = scalar_lea.vmem %s8, %s2516
      $region72: #{unet_up_forward.4} parent=59 // pred_fallthru
        _
    $region60: #{unet_up_forward.4} parent=5 // pred_fallthru
      _
  $region6: #{unet_up_forward.4} parent=0 // loop_footer
    %s19 = sadd.s32 1, %s15
  $region7: #{unet_up_forward.4} parent=0 // loop_footer_branch
    %14 = sbr.rel target = $region3
  $region8: #{unet_up_forward.4} parent=0 // loop_exit
    _

</llo_original>
